<compile_context>
chip_gen: v5e
topology: v5e:2x2
jax: 0.10.0
libtpu: 0.0.40
codegen_flags: <defaults>
</compile_context>

<pallas_src>
import jax
import jax.numpy as jnp
from jax.experimental import pallas as pl
from jax.experimental.pallas import tpu as pltpu

LANES = 128        # TPU lane width; channel / contraction dims padded to this.
TR_TARGET = 512    # target rows (N*H*W pixels) per grid tile.

_CPARAMS = pltpu.CompilerParams(
    dimension_semantics=("parallel",),
    vmem_limit_bytes=32 * 1024 * 1024,
)


def _round_up(x, m):
    return (x + m - 1) // m * m


def _pick_tile(R):
    """Row-tile size: target 512 rows, but keep >= 2 tiles so the 'parallel'
    grid axis can be split across both v7x TensorCores; 8-row aligned."""
    tr = TR_TARGET
    while tr > 8 and -(-R // tr) < 2:
        tr //= 2
    return max(_round_up(min(tr, _round_up(R, 8)), 8), 8)


# ----------------------------------------------------------------------------
# Pallas kernels
# ----------------------------------------------------------------------------

def gemm_stats_kernel(p_ref, w_ref, o_ref, st_ref):
    """One row-tile of the conv GEMM + per-tile BN partial statistics.

    p_ref : (TR, Kp) bf16  im2col patches (lane-dense K)
    w_ref : (Kp, Cp) bf16  folded conv weights
    o_ref : (TR, Cp) bf16  conv output tile
    st_ref: (1, 2, Cp) f32 per-tile [sum; sum of squares] over rows
    """
    y = jnp.dot(p_ref[...], w_ref[...], preferred_element_type=jnp.float32)
    o_ref[...] = y.astype(o_ref.dtype)
    s = jnp.sum(y, axis=0, keepdims=True)        # (1, Cp)
    q = jnp.sum(y * y, axis=0, keepdims=True)    # (1, Cp)
    st_ref[...] = jnp.concatenate([s, q], axis=0)[None, :, :]


def gemm_bias_kernel(p_ref, w_ref, b_ref, o_ref):
    """One row-tile of the final conv GEMM with fused bias (no norm)."""
    o_ref[...] = (
        jnp.dot(p_ref[...], w_ref[...], preferred_element_type=jnp.float32)
        + b_ref[...]
    )


def bn_relu_kernel(y_ref, sc_ref, sh_ref, o_ref):
    """Fused BN apply (pre-folded scale/shift) + ReLU.  f32 math, bf16 store."""
    y = y_ref[...].astype(jnp.float32)
    o_ref[...] = jnp.maximum(y * sc_ref[...] + sh_ref[...], 0.0).astype(o_ref.dtype)


def bn_res_relu_kernel(y_ref, sc_ref, sh_ref, r_ref, o_ref):
    """Fused BN apply + residual add + ReLU (ResnetBlock epilogue)."""
    y = y_ref[...].astype(jnp.float32)
    r = r_ref[...].astype(jnp.float32)
    o_ref[...] = jnp.maximum(
        y * sc_ref[...] + sh_ref[...] + r, 0.0).astype(o_ref.dtype)


# ----------------------------------------------------------------------------
# pallas_call wrappers (tiled over rows of the flattened N*H*W pixel axis)
# ----------------------------------------------------------------------------

def conv_gemm_stats_call(patches_p, w_p, *, tr):
    Rp, Kp = patches_p.shape
    _, Cp = w_p.shape
    n_tiles = Rp // tr
    return pl.pallas_call(
        gemm_stats_kernel,
        grid=(n_tiles,),
        in_specs=[
            # NOTE: if profiling shows exposed DMA on the streaming patches
            # input, add pipeline_mode=pl.Buffered(3) here.
            pl.BlockSpec((tr, Kp), lambda i: (i, 0)),
            pl.BlockSpec((Kp, Cp), lambda i: (0, 0)),
        ],
        out_specs=(
            pl.BlockSpec((tr, Cp), lambda i: (i, 0)),
            pl.BlockSpec((1, 2, Cp), lambda i: (i, 0, 0)),
        ),
        out_shape=(
            jax.ShapeDtypeStruct((Rp, Cp), jnp.bfloat16),
            jax.ShapeDtypeStruct((n_tiles, 2, Cp), jnp.float32),
        ),
        compiler_params=_CPARAMS,
    )(patches_p, w_p)


def conv_gemm_bias_call(patches_p, w_p, bias_p, *, tr):
    Rp, Kp = patches_p.shape
    _, Cp = w_p.shape
    n_tiles = Rp // tr
    return pl.pallas_call(
        gemm_bias_kernel,
        grid=(n_tiles,),
        in_specs=[
            pl.BlockSpec((tr, Kp), lambda i: (i, 0)),
            pl.BlockSpec((Kp, Cp), lambda i: (0, 0)),
            pl.BlockSpec((1, Cp), lambda i: (0, 0)),
        ],
        out_specs=pl.BlockSpec((tr, Cp), lambda i: (i, 0)),
        out_shape=jax.ShapeDtypeStruct((Rp, Cp), jnp.float32),
        compiler_params=_CPARAMS,
    )(patches_p, w_p, bias_p)


def bn_apply_call(y_p, scale, shift, *, residual_p=None, tr):
    Rp, Cp = y_p.shape
    n_tiles = Rp // tr
    tile_spec = pl.BlockSpec((tr, Cp), lambda i: (i, 0))
    vec_spec = pl.BlockSpec((1, Cp), lambda i: (0, 0))
    out_shape = jax.ShapeDtypeStruct((Rp, Cp), jnp.bfloat16)
    if residual_p is None:
        return pl.pallas_call(
            bn_relu_kernel,
            grid=(n_tiles,),
            in_specs=[tile_spec, vec_spec, vec_spec],
            out_specs=tile_spec,
            out_shape=out_shape,
            compiler_params=_CPARAMS,
        )(y_p, scale, shift)
    return pl.pallas_call(
        bn_res_relu_kernel,
        grid=(n_tiles,),
        in_specs=[tile_spec, vec_spec, vec_spec, tile_spec],
        out_specs=tile_spec,
        out_shape=out_shape,
        compiler_params=_CPARAMS,
    )(y_p, scale, shift, residual_p)


# ----------------------------------------------------------------------------
# Plain-JAX glue: reflection pad, im2col patch extraction, weight re-layout
# ----------------------------------------------------------------------------

def reflect_pad_and_patches(x_nhwc, k):
    """ReflectionPad2d((k-1)//2) + im2col -> (N*H*W, k*k*C), K-order (kh,kw,c)."""
    N, H, W, C = x_nhwc.shape
    p = (k - 1) // 2
    xp = jnp.pad(x_nhwc, ((0, 0), (p, p), (p, p), (0, 0)), mode="reflect")
    cols = []
    for kh in range(k):
        for kw in range(k):
            cols.append(xp[:, kh:kh + H, kw:kw + W, :])
    patches = jnp.concatenate(cols, axis=-1)          # (N, H, W, k*k*C)
    return patches.reshape(N * H * W, k * k * C)


def prep_weight(w_oihw, kp, cp):
    """(Cout, Cin, KH, KW) -> zero-padded bf16 (Kp, Cp), K-order (kh, kw, cin)."""
    Cout, Cin, KH, KW = w_oihw.shape
    w = jnp.transpose(w_oihw, (2, 3, 1, 0)).reshape(KH * KW * Cin, Cout)
    return jnp.pad(w.astype(jnp.bfloat16),
                   ((0, kp - KH * KW * Cin), (0, cp - Cout)))


def pad_vec(v, cp):
    """(C,) -> (1, Cp) zero-padded f32 row."""
    v = v.reshape(1, -1).astype(jnp.float32)
    return jnp.pad(v, ((0, 0), (0, cp - v.shape[1])))


def _prep_patches(x_img, w_oihw):
    """Build bf16 lane-dense im2col patches + folded bf16 weights."""
    # TODO(synk): replace this HBM-materialized im2col with in-kernel halo DMA.
    N, H, W, Cin = x_img.shape
    Cout, _, KH, KW = w_oihw.shape
    R = N * H * W
    K = KH * KW * Cin
    Kp = _round_up(K, LANES)
    Cp = _round_up(Cout, LANES)
    tr = _pick_tile(R)
    Rp = _round_up(R, tr)
    patches = reflect_pad_and_patches(x_img.astype(jnp.bfloat16), KH)   # (R, K)
    patches = jnp.pad(patches, ((0, Rp - R), (0, Kp - K)))               # zero pad
    w_p = prep_weight(w_oihw, Kp, Cp)
    return patches, w_p, tr, Cp


def conv_bn_relu_stage(x_img, w_oihw, gamma, beta, *,
                       residual_flat=None, eps=1e-5):
    """ReflectionPad -> Conv (no bias) -> BatchNorm (train stats) [-> +res] -> ReLU.

    Returns the activation in flat lane-dense bf16 form (Rp, Cp=128)."""
    N, H, W, _ = x_img.shape
    R = N * H * W
    patches, w_p, tr, Cp = _prep_patches(x_img, w_oihw)

    # Pass 1: tiled conv GEMM (bf16 MXU, f32 acc) + merged per-tile stats.
    y_flat, stats = conv_gemm_stats_call(patches, w_p, tr=tr)

    # Tiny stats reduction (padded rows are zero patches -> contribute 0;
    # divide by the true pixel count). Biased variance, like torch BN training.
    s = jnp.sum(stats[:, 0, :], axis=0, keepdims=True)    # (1, Cp)
    sq = jnp.sum(stats[:, 1, :], axis=0, keepdims=True)   # (1, Cp)
    mean = s / R
    # TODO(synk): Welford/Chan merge of mean-shifted per-tile sums for very
    # large N*H*W; single-pass E[x^2]-E[x]^2 in f32 is fine at these sizes.
    var = jnp.maximum(sq / R - mean * mean, 0.0)
    rstd = jax.lax.rsqrt(var + eps)
    g = pad_vec(gamma, Cp)
    b = pad_vec(beta, Cp)
    scale = g * rstd
    shift = b - mean * scale

    # Pass 2: tiled normalize + affine (+ residual) + ReLU, bf16 store.
    return bn_apply_call(y_flat, scale, shift,
                         residual_p=residual_flat, tr=tr)


def conv_bias_stage(x_img, w_oihw, bias):
    """ReflectionPad -> Conv (with bias), no norm / activation. f32 output."""
    patches, w_p, tr, Cp = _prep_patches(x_img, w_oihw)
    bias_p = pad_vec(bias, Cp)
    return conv_gemm_bias_call(patches, w_p, bias_p, tr=tr)


# ----------------------------------------------------------------------------
# Model
# ----------------------------------------------------------------------------

def init_params(key, input_nc, output_nc, ngf):
    k1, k2, k3, k4 = jax.random.split(key, 4)
    return {
        # Conv weights in PyTorch OIHW layout, deterministic synthetic init.
        "w1": jax.random.normal(k1, (ngf, input_nc, 7, 7), jnp.float32) * 0.1,
        "w2": jax.random.normal(k2, (ngf, ngf, 3, 3), jnp.float32) * 0.1,
        "w3": jax.random.normal(k3, (ngf, ngf, 3, 3), jnp.float32) * 0.1,
        "w4": jax.random.normal(k4, (output_nc, ngf, 7, 7), jnp.float32) * 0.1,
        "bias4": jnp.arange(output_nc, dtype=jnp.float32) * 0.01,
        # BatchNorm2d affine params at PyTorch defaults (gamma=1, beta=0).
        "g1": jnp.ones((ngf,), jnp.float32), "b1": jnp.zeros((ngf,), jnp.float32),
        "g2": jnp.ones((ngf,), jnp.float32), "b2": jnp.zeros((ngf,), jnp.float32),
        "g3": jnp.ones((ngf,), jnp.float32), "b3": jnp.zeros((ngf,), jnp.float32),
    }


@jax.jit
def resnet_generator_forward(x_nchw, params):
    # External layout NCHW (PyTorch); internal compute NHWC flattened to
    # (pixels, channels) so channels sit on the TPU lane axis (padded to 128).
    x = jnp.transpose(x_nchw, (0, 2, 3, 1)).astype(jnp.float32)
    N, H, W, _ = x.shape
    R = N * H * W
    ngf = params["w1"].shape[0]
    out_nc = params["w4"].shape[0]

    # Stem: ReflectionPad(3) -> Conv7x7 (no bias) -> BN -> ReLU
    h_flat = conv_bn_relu_stage(x, params["w1"], params["g1"], params["b1"])
    h_img = h_flat[:R, :ngf].reshape(N, H, W, ngf)

    # ResnetBlock (dim == dim2, padding_type='reflect', no dropout)
    r_flat = conv_bn_relu_stage(h_img, params["w2"], params["g2"], params["b2"])
    r_img = r_flat[:R, :ngf].reshape(N, H, W, ngf)

    # second conv of the block: BN -> (+ x) -> ReLU (block ReLUs the sum)
    r2_flat = conv_bn_relu_stage(r_img, params["w3"], params["g3"], params["b3"],
                                 residual_flat=h_flat)
    r2_img = r2_flat[:R, :ngf].reshape(N, H, W, ngf)

    # Head: ReflectionPad(3) -> Conv7x7 (with bias), no Tanh in this spec.
    y_flat = conv_bias_stage(r2_img, params["w4"], params["bias4"])
    y = y_flat[:R, :out_nc].reshape(N, H, W, out_nc)
    return jnp.transpose(y, (0, 3, 1, 2))


if __name__ == "__main__":
    # Small shapes consistent with the module: N=2, input_nc=4, output_nc=3,
    # H=W=16, ngf=8.
    N, input_nc, output_nc, H, W, ngf = 2, 4, 3, 16, 16, 8

    key = jax.random.PRNGKey(0)
    kx, kp = jax.random.split(key)
    x = jax.random.normal(kx, (N, input_nc, H, W), jnp.float32)
    params = init_params(kp, input_nc, output_nc, ngf)

    y = resnet_generator_forward(x, params)
    y = jax.block_until_ready(y)
    assert y.shape == (N, output_nc, H, W), y.shape
    assert y.dtype == jnp.float32
    assert bool(jnp.all(jnp.isfinite(y)))

    # TODO(synk): z_encoder (z_dim>0), CategoricalConditionalBatchNorm label
    # path, and dropout are inactive under the default constructor args and
    # are therefore not exercised here.
    print("KERNEL_OK")
</pallas_src>

<mosaic_0001>
module attributes {stable_mosaic.version = 11 : i64} {
  func.func @gemm_stats_kernel(%arg0: i32, %arg1: memref<256x256xbf16, #tpu.memory_space<vmem>>, %arg2: memref<256x128xbf16, #tpu.memory_space<vmem>>, %arg3: memref<256x128xbf16, #tpu.memory_space<vmem>>, %arg4: memref<1x2x128xf32, #tpu.memory_space<vmem>>) attributes {dimension_semantics = [#tpu.dimension_semantics<parallel>], iteration_bounds = array<i64: 2>, scalar_prefetch = 0 : i64, scratch_operands = 0 : i64, tpu.core_type = #tpu.core_type<tc>, window_params = [{transform_indices = @transform_0, window_bounds = array<i64: 256, 256>}, {pipeline_mode = #tpu.pipeline_mode<synchronous>, transform_indices = @transform_1, window_bounds = array<i64: 256, 128>}, {transform_indices = @transform_2, window_bounds = array<i64: 256, 128>}, {transform_indices = @transform_3, window_bounds = array<i64: 1, 2, 128>}]} {
    %c0 = arith.constant 0 : index
    %c0_0 = arith.constant 0 : index
    %0 = vector.load %arg1[%c0, %c0_0] : memref<256x256xbf16, #tpu.memory_space<vmem>>, vector<256x256xbf16>
    %c0_1 = arith.constant 0 : index
    %c0_2 = arith.constant 0 : index
    %1 = vector.load %arg2[%c0_1, %c0_2] : memref<256x128xbf16, #tpu.memory_space<vmem>>, vector<256x128xbf16>
    %cst = arith.constant dense<0.000000e+00> : vector<256x128xf32>
    %2 = tpu.matmul %0, %1, %cst {dimension_numbers = #tpu.dot_dimension_numbers<[1], [0], [0], [1], [0, 0, 1, 1], [], []>} : vector<256x256xbf16>, vector<256x128xbf16>, vector<256x128xf32> -> vector<256x128xf32>
    %3 = arith.truncf %2 : vector<256x128xf32> to vector<256x128xbf16>
    %c0_3 = arith.constant 0 : index
    %c0_4 = arith.constant 0 : index
    %4 = vector.load %arg3[%c0_3, %c0_4] : memref<256x128xbf16, #tpu.memory_space<vmem>>, vector<256x128xbf16>
    tpu.vector_store %arg3[%c0_3, %c0_4], %3 {strides = array<i32>} : memref<256x128xbf16, #tpu.memory_space<vmem>>, vector<256x128xbf16>,
    %cst_5 = arith.constant dense<0.000000e+00> : vector<128xf32>
    %5 = vector.multi_reduction <add>, %2, %cst_5 [0] : vector<256x128xf32> to vector<128xf32>
    %6 = vector.shape_cast %5 : vector<128xf32> to vector<1x128xf32>
    %7 = arith.mulf %2, %2 : vector<256x128xf32>
    %cst_6 = arith.constant dense<0.000000e+00> : vector<128xf32>
    %8 = vector.multi_reduction <add>, %7, %cst_6 [0] : vector<256x128xf32> to vector<128xf32>
    %9 = vector.shape_cast %8 : vector<128xf32> to vector<1x128xf32>
    %10 = tpu.concatenate %6, %9 in 0 : vector<1x128xf32>, vector<1x128xf32> -> vector<2x128xf32>
    %11 = vector.shape_cast %10 : vector<2x128xf32> to vector<1x2x128xf32>
    %c0_7 = arith.constant 0 : index
    %c0_8 = arith.constant 0 : index
    %c0_9 = arith.constant 0 : index
    %12 = vector.load %arg4[%c0_7, %c0_8, %c0_9] : memref<1x2x128xf32, #tpu.memory_space<vmem>>, vector<1x2x128xf32>
    tpu.vector_store %arg4[%c0_7, %c0_8, %c0_9], %11 {strides = array<i32>} : memref<1x2x128xf32, #tpu.memory_space<vmem>>, vector<1x2x128xf32>,
    return
  }
  func.func @transform_0(%arg0: i32) -> (i32, i32) {
    %c0_i32 = arith.constant 0 : i32
    %c0_i32_0 = arith.constant 0 : i32
    return %arg0, %c0_i32 : i32, i32
  }
  func.func @transform_1(%arg0: i32) -> (i32, i32) {
    %c0_i32 = arith.constant 0 : i32
    %c0_i32_0 = arith.constant 0 : i32
    %c0_i32_1 = arith.constant 0 : i32
    return %c0_i32, %c0_i32_0 : i32, i32
  }
  func.func @transform_2(%arg0: i32) -> (i32, i32) {
    %c0_i32 = arith.constant 0 : i32
    %c0_i32_0 = arith.constant 0 : i32
    return %arg0, %c0_i32 : i32, i32
  }
  func.func @transform_3(%arg0: i32) -> (i32, i32, i32) {
    %c0_i32 = arith.constant 0 : i32
    %c0_i32_0 = arith.constant 0 : i32
    %c0_i32_1 = arith.constant 0 : i32
    return %arg0, %c0_i32, %c0_i32_0 : i32, i32, i32
  }
}

module attributes {stable_mosaic.version = 11 : i64} {
  func.func @bn_relu_kernel(%arg0: i32, %arg1: memref<256x128xbf16, #tpu.memory_space<vmem>>, %arg2: memref<1x128xf32, #tpu.memory_space<vmem>>, %arg3: memref<1x128xf32, #tpu.memory_space<vmem>>, %arg4: memref<256x128xbf16, #tpu.memory_space<vmem>>) attributes {dimension_semantics = [#tpu.dimension_semantics<parallel>], iteration_bounds = array<i64: 2>, scalar_prefetch = 0 : i64, scratch_operands = 0 : i64, tpu.core_type = #tpu.core_type<tc>, window_params = [{transform_indices = @transform_0, window_bounds = array<i64: 256, 128>}, {pipeline_mode = #tpu.pipeline_mode<synchronous>, transform_indices = @transform_1, window_bounds = array<i64: 1, 128>}, {pipeline_mode = #tpu.pipeline_mode<synchronous>, transform_indices = @transform_2, window_bounds = array<i64: 1, 128>}, {transform_indices = @transform_3, window_bounds = array<i64: 256, 128>}]} {
    %c0 = arith.constant 0 : index
    %c0_0 = arith.constant 0 : index
    %0 = vector.load %arg1[%c0, %c0_0] : memref<256x128xbf16, #tpu.memory_space<vmem>>, vector<256x128xbf16>
    %1 = arith.extf %0 : vector<256x128xbf16> to vector<256x128xf32>
    %c0_1 = arith.constant 0 : index
    %c0_2 = arith.constant 0 : index
    %2 = vector.load %arg2[%c0_1, %c0_2] : memref<1x128xf32, #tpu.memory_space<vmem>>, vector<1x128xf32>
    %3 = vector.broadcast %2 : vector<1x128xf32> to vector<256x128xf32>
    %4 = arith.mulf %1, %3 : vector<256x128xf32>
    %c0_3 = arith.constant 0 : index
    %c0_4 = arith.constant 0 : index
    %5 = vector.load %arg3[%c0_3, %c0_4] : memref<1x128xf32, #tpu.memory_space<vmem>>, vector<1x128xf32>
    %6 = vector.broadcast %5 : vector<1x128xf32> to vector<256x128xf32>
    %7 = arith.addf %4, %6 : vector<256x128xf32>
    %cst = arith.constant 0.000000e+00 : f32
    %8 = vector.broadcast %cst : f32 to vector<256x128xf32>
    %9 = arith.maximumf %7, %8 : vector<256x128xf32>
    %10 = arith.truncf %9 : vector<256x128xf32> to vector<256x128xbf16>
    %c0_5 = arith.constant 0 : index
    %c0_6 = arith.constant 0 : index
    %11 = vector.load %arg4[%c0_5, %c0_6] : memref<256x128xbf16, #tpu.memory_space<vmem>>, vector<256x128xbf16>
    tpu.vector_store %arg4[%c0_5, %c0_6], %10 {strides = array<i32>} : memref<256x128xbf16, #tpu.memory_space<vmem>>, vector<256x128xbf16>,
    return
  }
  func.func @transform_0(%arg0: i32) -> (i32, i32) {
    %c0_i32 = arith.constant 0 : i32
    %c0_i32_0 = arith.constant 0 : i32
    return %arg0, %c0_i32 : i32, i32
  }
  func.func @transform_1(%arg0: i32) -> (i32, i32) {
    %c0_i32 = arith.constant 0 : i32
    %c0_i32_0 = arith.constant 0 : i32
    %c0_i32_1 = arith.constant 0 : i32
    return %c0_i32, %c0_i32_0 : i32, i32
  }
  func.func @transform_2(%arg0: i32) -> (i32, i32) {
    %c0_i32 = arith.constant 0 : i32
    %c0_i32_0 = arith.constant 0 : i32
    %c0_i32_1 = arith.constant 0 : i32
    return %c0_i32, %c0_i32_0 : i32, i32
  }
  func.func @transform_3(%arg0: i32) -> (i32, i32) {
    %c0_i32 = arith.constant 0 : i32
    %c0_i32_0 = arith.constant 0 : i32
    return %arg0, %c0_i32 : i32, i32
  }
}

module attributes {stable_mosaic.version = 11 : i64} {
  func.func @gemm_stats_kernel(%arg0: i32, %arg1: memref<256x128xbf16, #tpu.memory_space<vmem>>, %arg2: memref<128x128xbf16, #tpu.memory_space<vmem>>, %arg3: memref<256x128xbf16, #tpu.memory_space<vmem>>, %arg4: memref<1x2x128xf32, #tpu.memory_space<vmem>>) attributes {dimension_semantics = [#tpu.dimension_semantics<parallel>], iteration_bounds = array<i64: 2>, scalar_prefetch = 0 : i64, scratch_operands = 0 : i64, tpu.core_type = #tpu.core_type<tc>, window_params = [{transform_indices = @transform_0, window_bounds = array<i64: 256, 128>}, {pipeline_mode = #tpu.pipeline_mode<synchronous>, transform_indices = @transform_1, window_bounds = array<i64: 128, 128>}, {transform_indices = @transform_2, window_bounds = array<i64: 256, 128>}, {transform_indices = @transform_3, window_bounds = array<i64: 1, 2, 128>}]} {
    %c0 = arith.constant 0 : index
    %c0_0 = arith.constant 0 : index
    %0 = vector.load %arg1[%c0, %c0_0] : memref<256x128xbf16, #tpu.memory_space<vmem>>, vector<256x128xbf16>
    %c0_1 = arith.constant 0 : index
    %c0_2 = arith.constant 0 : index
    %1 = vector.load %arg2[%c0_1, %c0_2] : memref<128x128xbf16, #tpu.memory_space<vmem>>, vector<128x128xbf16>
    %cst = arith.constant dense<0.000000e+00> : vector<256x128xf32>
    %2 = tpu.matmul %0, %1, %cst {dimension_numbers = #tpu.dot_dimension_numbers<[1], [0], [0], [1], [0, 0, 1, 1], [], []>} : vector<256x128xbf16>, vector<128x128xbf16>, vector<256x128xf32> -> vector<256x128xf32>
    %3 = arith.truncf %2 : vector<256x128xf32> to vector<256x128xbf16>
    %c0_3 = arith.constant 0 : index
    %c0_4 = arith.constant 0 : index
    %4 = vector.load %arg3[%c0_3, %c0_4] : memref<256x128xbf16, #tpu.memory_space<vmem>>, vector<256x128xbf16>
    tpu.vector_store %arg3[%c0_3, %c0_4], %3 {strides = array<i32>} : memref<256x128xbf16, #tpu.memory_space<vmem>>, vector<256x128xbf16>,
    %cst_5 = arith.constant dense<0.000000e+00> : vector<128xf32>
    %5 = vector.multi_reduction <add>, %2, %cst_5 [0] : vector<256x128xf32> to vector<128xf32>
    %6 = vector.shape_cast %5 : vector<128xf32> to vector<1x128xf32>
    %7 = arith.mulf %2, %2 : vector<256x128xf32>
    %cst_6 = arith.constant dense<0.000000e+00> : vector<128xf32>
    %8 = vector.multi_reduction <add>, %7, %cst_6 [0] : vector<256x128xf32> to vector<128xf32>
    %9 = vector.shape_cast %8 : vector<128xf32> to vector<1x128xf32>
    %10 = tpu.concatenate %6, %9 in 0 : vector<1x128xf32>, vector<1x128xf32> -> vector<2x128xf32>
    %11 = vector.shape_cast %10 : vector<2x128xf32> to vector<1x2x128xf32>
    %c0_7 = arith.constant 0 : index
    %c0_8 = arith.constant 0 : index
    %c0_9 = arith.constant 0 : index
    %12 = vector.load %arg4[%c0_7, %c0_8, %c0_9] : memref<1x2x128xf32, #tpu.memory_space<vmem>>, vector<1x2x128xf32>
    tpu.vector_store %arg4[%c0_7, %c0_8, %c0_9], %11 {strides = array<i32>} : memref<1x2x128xf32, #tpu.memory_space<vmem>>, vector<1x2x128xf32>,
    return
  }
  func.func @transform_0(%arg0: i32) -> (i32, i32) {
    %c0_i32 = arith.constant 0 : i32
    %c0_i32_0 = arith.constant 0 : i32
    return %arg0, %c0_i32 : i32, i32
  }
  func.func @transform_1(%arg0: i32) -> (i32, i32) {
    %c0_i32 = arith.constant 0 : i32
    %c0_i32_0 = arith.constant 0 : i32
    %c0_i32_1 = arith.constant 0 : i32
    return %c0_i32, %c0_i32_0 : i32, i32
  }
  func.func @transform_2(%arg0: i32) -> (i32, i32) {
    %c0_i32 = arith.constant 0 : i32
    %c0_i32_0 = arith.constant 0 : i32
    return %arg0, %c0_i32 : i32, i32
  }
  func.func @transform_3(%arg0: i32) -> (i32, i32, i32) {
    %c0_i32 = arith.constant 0 : i32
    %c0_i32_0 = arith.constant 0 : i32
    %c0_i32_1 = arith.constant 0 : i32
    return %arg0, %c0_i32, %c0_i32_0 : i32, i32, i32
  }
}

module attributes {stable_mosaic.version = 11 : i64} {
  func.func @bn_res_relu_kernel(%arg0: i32, %arg1: memref<256x128xbf16, #tpu.memory_space<vmem>>, %arg2: memref<1x128xf32, #tpu.memory_space<vmem>>, %arg3: memref<1x128xf32, #tpu.memory_space<vmem>>, %arg4: memref<256x128xbf16, #tpu.memory_space<vmem>>, %arg5: memref<256x128xbf16, #tpu.memory_space<vmem>>) attributes {dimension_semantics = [#tpu.dimension_semantics<parallel>], iteration_bounds = array<i64: 2>, scalar_prefetch = 0 : i64, scratch_operands = 0 : i64, tpu.core_type = #tpu.core_type<tc>, window_params = [{transform_indices = @transform_0, window_bounds = array<i64: 256, 128>}, {pipeline_mode = #tpu.pipeline_mode<synchronous>, transform_indices = @transform_1, window_bounds = array<i64: 1, 128>}, {pipeline_mode = #tpu.pipeline_mode<synchronous>, transform_indices = @transform_2, window_bounds = array<i64: 1, 128>}, {transform_indices = @transform_3, window_bounds = array<i64: 256, 128>}, {transform_indices = @transform_4, window_bounds = array<i64: 256, 128>}]} {
    %c0 = arith.constant 0 : index
    %c0_0 = arith.constant 0 : index
    %0 = vector.load %arg1[%c0, %c0_0] : memref<256x128xbf16, #tpu.memory_space<vmem>>, vector<256x128xbf16>
    %1 = arith.extf %0 : vector<256x128xbf16> to vector<256x128xf32>
    %c0_1 = arith.constant 0 : index
    %c0_2 = arith.constant 0 : index
    %2 = vector.load %arg4[%c0_1, %c0_2] : memref<256x128xbf16, #tpu.memory_space<vmem>>, vector<256x128xbf16>
    %3 = arith.extf %2 : vector<256x128xbf16> to vector<256x128xf32>
    %c0_3 = arith.constant 0 : index
    %c0_4 = arith.constant 0 : index
    %4 = vector.load %arg2[%c0_3, %c0_4] : memref<1x128xf32, #tpu.memory_space<vmem>>, vector<1x128xf32>
    %5 = vector.broadcast %4 : vector<1x128xf32> to vector<256x128xf32>
    %6 = arith.mulf %1, %5 : vector<256x128xf32>
    %c0_5 = arith.constant 0 : index
    %c0_6 = arith.constant 0 : index
    %7 = vector.load %arg3[%c0_5, %c0_6] : memref<1x128xf32, #tpu.memory_space<vmem>>, vector<1x128xf32>
    %8 = vector.broadcast %7 : vector<1x128xf32> to vector<256x128xf32>
    %9 = arith.addf %6, %8 : vector<256x128xf32>
    %10 = arith.addf %9, %3 : vector<256x128xf32>
    %cst = arith.constant 0.000000e+00 : f32
    %11 = vector.broadcast %cst : f32 to vector<256x128xf32>
    %12 = arith.maximumf %10, %11 : vector<256x128xf32>
    %13 = arith.truncf %12 : vector<256x128xf32> to vector<256x128xbf16>
    %c0_7 = arith.constant 0 : index
    %c0_8 = arith.constant 0 : index
    %14 = vector.load %arg5[%c0_7, %c0_8] : memref<256x128xbf16, #tpu.memory_space<vmem>>, vector<256x128xbf16>
    tpu.vector_store %arg5[%c0_7, %c0_8], %13 {strides = array<i32>} : memref<256x128xbf16, #tpu.memory_space<vmem>>, vector<256x128xbf16>,
    return
  }
  func.func @transform_0(%arg0: i32) -> (i32, i32) {
    %c0_i32 = arith.constant 0 : i32
    %c0_i32_0 = arith.constant 0 : i32
    return %arg0, %c0_i32 : i32, i32
  }
  func.func @transform_1(%arg0: i32) -> (i32, i32) {
    %c0_i32 = arith.constant 0 : i32
    %c0_i32_0 = arith.constant 0 : i32
    %c0_i32_1 = arith.constant 0 : i32
    return %c0_i32, %c0_i32_0 : i32, i32
  }
  func.func @transform_2(%arg0: i32) -> (i32, i32) {
    %c0_i32 = arith.constant 0 : i32
    %c0_i32_0 = arith.constant 0 : i32
    %c0_i32_1 = arith.constant 0 : i32
    return %c0_i32, %c0_i32_0 : i32, i32
  }
  func.func @transform_3(%arg0: i32) -> (i32, i32) {
    %c0_i32 = arith.constant 0 : i32
    %c0_i32_0 = arith.constant 0 : i32
    return %arg0, %c0_i32 : i32, i32
  }
  func.func @transform_4(%arg0: i32) -> (i32, i32) {
    %c0_i32 = arith.constant 0 : i32
    %c0_i32_0 = arith.constant 0 : i32
    return %arg0, %c0_i32 : i32, i32
  }
}

module attributes {stable_mosaic.version = 11 : i64} {
  func.func @gemm_bias_kernel(%arg0: i32, %arg1: memref<256x512xbf16, #tpu.memory_space<vmem>>, %arg2: memref<512x128xbf16, #tpu.memory_space<vmem>>, %arg3: memref<1x128xf32, #tpu.memory_space<vmem>>, %arg4: memref<256x128xf32, #tpu.memory_space<vmem>>) attributes {dimension_semantics = [#tpu.dimension_semantics<parallel>], iteration_bounds = array<i64: 2>, scalar_prefetch = 0 : i64, scratch_operands = 0 : i64, tpu.core_type = #tpu.core_type<tc>, window_params = [{transform_indices = @transform_0, window_bounds = array<i64: 256, 512>}, {pipeline_mode = #tpu.pipeline_mode<synchronous>, transform_indices = @transform_1, window_bounds = array<i64: 512, 128>}, {pipeline_mode = #tpu.pipeline_mode<synchronous>, transform_indices = @transform_2, window_bounds = array<i64: 1, 128>}, {transform_indices = @transform_3, window_bounds = array<i64: 256, 128>}]} {
    %c0 = arith.constant 0 : index
    %c0_0 = arith.constant 0 : index
    %0 = vector.load %arg1[%c0, %c0_0] : memref<256x512xbf16, #tpu.memory_space<vmem>>, vector<256x512xbf16>
    %c0_1 = arith.constant 0 : index
    %c0_2 = arith.constant 0 : index
    %1 = vector.load %arg2[%c0_1, %c0_2] : memref<512x128xbf16, #tpu.memory_space<vmem>>, vector<512x128xbf16>
    %cst = arith.constant dense<0.000000e+00> : vector<256x128xf32>
    %2 = tpu.matmul %0, %1, %cst {dimension_numbers = #tpu.dot_dimension_numbers<[1], [0], [0], [1], [0, 0, 1, 1], [], []>} : vector<256x512xbf16>, vector<512x128xbf16>, vector<256x128xf32> -> vector<256x128xf32>
    %c0_3 = arith.constant 0 : index
    %c0_4 = arith.constant 0 : index
    %3 = vector.load %arg3[%c0_3, %c0_4] : memref<1x128xf32, #tpu.memory_space<vmem>>, vector<1x128xf32>
    %4 = vector.broadcast %3 : vector<1x128xf32> to vector<256x128xf32>
    %5 = arith.addf %2, %4 : vector<256x128xf32>
    %c0_5 = arith.constant 0 : index
    %c0_6 = arith.constant 0 : index
    %6 = vector.load %arg4[%c0_5, %c0_6] : memref<256x128xf32, #tpu.memory_space<vmem>>, vector<256x128xf32>
    tpu.vector_store %arg4[%c0_5, %c0_6], %5 {strides = array<i32>} : memref<256x128xf32, #tpu.memory_space<vmem>>, vector<256x128xf32>,
    return
  }
  func.func @transform_0(%arg0: i32) -> (i32, i32) {
    %c0_i32 = arith.constant 0 : i32
    %c0_i32_0 = arith.constant 0 : i32
    return %arg0, %c0_i32 : i32, i32
  }
  func.func @transform_1(%arg0: i32) -> (i32, i32) {
    %c0_i32 = arith.constant 0 : i32
    %c0_i32_0 = arith.constant 0 : i32
    %c0_i32_1 = arith.constant 0 : i32
    return %c0_i32, %c0_i32_0 : i32, i32
  }
  func.func @transform_2(%arg0: i32) -> (i32, i32) {
    %c0_i32 = arith.constant 0 : i32
    %c0_i32_0 = arith.constant 0 : i32
    %c0_i32_1 = arith.constant 0 : i32
    return %c0_i32, %c0_i32_0 : i32, i32
  }
  func.func @transform_3(%arg0: i32) -> (i32, i32) {
    %c0_i32 = arith.constant 0 : i32
    %c0_i32_0 = arith.constant 0 : i32
    return %arg0, %c0_i32 : i32, i32
  }
}

</mosaic_0001>

<llo_original>
// kernel: resnet_generator_forward.8
$region0: #{resnet_generator_forward.8}
  #allocation0 [shape = 'u32[]', space=smem, size = 0x4, offset = 0x4, fixed_abs, tag = 'smem constant byte address 0x4 - core index']
  #allocation1 [shape = 'u32[72,128]{1,0:T(1,128)}', space=vmem, size = 0x9000, scoped, tag = 'internal scratch']
  %s0 = inlined_call_operand.vmem [shape: bf16[512,128], index: 0, kind: input, shape index: {}]
  %s1 = inlined_call_operand.vmem [shape: f32[1,128], index: 1, kind: input, shape index: {}]
  %s2 = inlined_call_operand.vmem [shape: f32[1,128], index: 2, kind: input, shape index: {}]
  %s3 = inlined_call_operand.vmem [shape: bf16[512,128], index: 3, kind: output, shape index: {}]
  %s4 = sld [smem:[#allocation0]]
  $region45: #{resnet_generator_forward.8} parent=0
    _
  %s6 = ssub.s32 1, %s4
  %s7 = scalar_select 0, %s6, %s4
  loop: start=0, step=1, limit=4
  $region2: #{resnet_generator_forward.8} parent=0 // loop_pre_header
    _
  $region3: #{resnet_generator_forward.8} parent=0 // loop_header
    %s9 = sphi 0, %s13
    %p10 = scmp.ge.s32.totalorder %s9, 4
    %s19 = sphi 0, %s21
    %s22 = sphi 0, %s19
    %s23 = sphi 0, %s22
    %s39 = sphi 0, %s23
    %s43 = sphi 0, %s43
    %s45 = sphi 0, %s43
    %s46 = sphi 0, %s45
    %s60 = sphi 0, %s46
    %s64 = sphi 0, %s64
    %s66 = sphi 0, %s64
    %s67 = sphi 0, %s66
    %s81 = sphi 0, %s67
    %s87 = sphi 0, %s89
    %s90 = sphi 0, %s87
    %s91 = sphi 0, %s90
    %s107 = sphi 0, %s91
  $region4: #{resnet_generator_forward.8} parent=0 // loop_header_branch
    %12 = sbr.rel (%p10) target = $region8
  $region5: #{resnet_generator_forward.8} parent=0 // loop_body
    %s14 = ssub.s32 %s9, 1
    %s15 = ssub.s32 %s9, 2
    %s16 = sadd.s32 %s9, 1
    %s17 = ssub.s32 %s9, %s16
    %p18 = scmp.eq.s32.totalorder %s17, 0
    %s20 = sadd.s32 %s19, 1
    %s21 = scalar_select %p18, %s19, %s20
    %p24 = pneg %p18
    %p25 = scmp.eq.s32.totalorder %s9, 1
    %p26 = por %p24, %p25
    %p27 = scmp.ne.s32.totalorder %s19, %s22
    %p28 = scmp.eq.s32.totalorder %s9, 0
    %p29 = por %p27, %p28
    %p30 = scmp.ne.s32.totalorder %s19, %s22
    %p31 = scmp.eq.s32.totalorder %s14, 1
    %p32 = por %p30, %p31
    %p33 = scmp.ne.s32.totalorder %s22, %s23
    %p34 = scmp.eq.s32.totalorder %s14, 0
    %p35 = por %p33, %p34
    %p36 = scmp.ne.s32.totalorder %s22, %s23
    %p37 = scmp.eq.s32.totalorder %s15, 1
    %p38 = por %p36, %p37
    %p40 = scmp.ne.s32.totalorder %s23, %s39
    %p41 = scmp.eq.s32.totalorder %s15, 0
    %p42 = por %p40, %p41
    %s44 = sadd.s32 %s43, 1
    %p47 = scmp.eq.s32.totalorder %s9, 1
    %p48 = scmp.ne.s32.totalorder %s43, %s45
    %p49 = scmp.eq.s32.totalorder %s9, 0
    %p50 = por %p48, %p49
    %p51 = scmp.ne.s32.totalorder %s43, %s45
    %p52 = scmp.eq.s32.totalorder %s14, 1
    %p53 = por %p51, %p52
    %p54 = scmp.ne.s32.totalorder %s45, %s46
    %p55 = scmp.eq.s32.totalorder %s14, 0
    %p56 = por %p54, %p55
    %p57 = scmp.ne.s32.totalorder %s45, %s46
    %p58 = scmp.eq.s32.totalorder %s15, 1
    %p59 = por %p57, %p58
    %p61 = scmp.ne.s32.totalorder %s46, %s60
    %p62 = scmp.eq.s32.totalorder %s15, 0
    %p63 = por %p61, %p62
    %s65 = sadd.s32 %s64, 1
    %p68 = scmp.eq.s32.totalorder %s9, 1
    %p69 = scmp.ne.s32.totalorder %s64, %s66
    %p70 = scmp.eq.s32.totalorder %s9, 0
    %p71 = por %p69, %p70
    %p72 = scmp.ne.s32.totalorder %s64, %s66
    %p73 = scmp.eq.s32.totalorder %s14, 1
    %p74 = por %p72, %p73
    %p75 = scmp.ne.s32.totalorder %s66, %s67
    %p76 = scmp.eq.s32.totalorder %s14, 0
    %p77 = por %p75, %p76
    %p78 = scmp.ne.s32.totalorder %s66, %s67
    %p79 = scmp.eq.s32.totalorder %s15, 1
    %p80 = por %p78, %p79
    %p82 = scmp.ne.s32.totalorder %s67, %s81
    %p83 = scmp.eq.s32.totalorder %s15, 0
    %p84 = por %p82, %p83
    %s85 = ssub.s32 %s9, %s16
    %p86 = scmp.eq.s32.totalorder %s85, 0
    %s88 = sadd.s32 %s87, 1
    %s89 = scalar_select %p86, %s87, %s88
    %p92 = pneg %p86
    %p93 = scmp.eq.s32.totalorder %s9, 1
    %p94 = por %p92, %p93
    %p95 = scmp.ne.s32.totalorder %s87, %s90
    %p96 = scmp.eq.s32.totalorder %s9, 0
    %p97 = por %p95, %p96
    %p98 = scmp.ne.s32.totalorder %s87, %s90
    %p99 = scmp.eq.s32.totalorder %s14, 1
    %p100 = por %p98, %p99
    %p101 = scmp.ne.s32.totalorder %s90, %s91
    %p102 = scmp.eq.s32.totalorder %s14, 0
    %p103 = por %p101, %p102
    %p104 = scmp.ne.s32.totalorder %s90, %s91
    %p105 = scmp.eq.s32.totalorder %s15, 1
    %p106 = por %p104, %p105
    %p108 = scmp.ne.s32.totalorder %s91, %s107
    %p109 = scmp.eq.s32.totalorder %s15, 0
    %p110 = por %p108, %p109
    %p111 = scmp.le.s32.totalorder 1, %s9
    %p112 = scmp.lt.s32.totalorder %s9, 3
    %p113 = pnand %p111, %p112
    %p114 = pneg %p113
    // Predicated region
    $region9: #{resnet_generator_forward.8} parent=5 // pred_check
      _
    $region10: #{resnet_generator_forward.8} parent=5 // pred_check_branch
      %116 = sbr.rel (%p113) target = $region12
    $region11: #{resnet_generator_forward.8} parent=5 // pred_region
      %s117 = ssub.s32 %s9, 1
      // Predicated region
      $region13: #{resnet_generator_forward.8} parent=11 // pred_check
        %p118 = pneg %p56
      $region14: #{resnet_generator_forward.8} parent=11 // pred_check_branch
        %120 = sbr.rel (%p118) target = $region16
      $region15: #{resnet_generator_forward.8} parent=11 // pred_region
        _
      $region16: #{resnet_generator_forward.8} parent=11 // pred_fallthru
        _
      // Predicated region
      $region17: #{resnet_generator_forward.8} parent=11 // pred_check
        %p121 = pneg %p77
      $region18: #{resnet_generator_forward.8} parent=11 // pred_check_branch
        %123 = sbr.rel (%p121) target = $region20
      $region19: #{resnet_generator_forward.8} parent=11 // pred_region
        _
      $region20: #{resnet_generator_forward.8} parent=11 // pred_fallthru
        _
    $region12: #{resnet_generator_forward.8} parent=5 // pred_fallthru
      _
    %p124 = scmp.lt.s32.totalorder %s9, 2
    // Predicated region
    $region21: #{resnet_generator_forward.8} parent=5 // pred_check
      %p125 = pneg %p124
    $region22: #{resnet_generator_forward.8} parent=5 // pred_check_branch
      %127 = sbr.rel (%p125) target = $region24
    $region23: #{resnet_generator_forward.8} parent=5 // pred_region
      // Predicated region
      $region25: #{resnet_generator_forward.8} parent=23 // pred_check
        %p128 = pneg %p29
      $region26: #{resnet_generator_forward.8} parent=23 // pred_check_branch
        %130 = sbr.rel (%p128) target = $region28
      $region27: #{resnet_generator_forward.8} parent=23 // pred_region
        %s131 = smul.u32 32, %s9
        %p132 = scmp.lt.s32.totalorder %s131, 63
        %s133 = scalar_select %p132, %s131, 63
        %s134 = smul.addr %s133, 4
        %s135 = scalar_lea.vmem %s0, %s134
        %s136 = smul.u32 32, %s9
      $region28: #{resnet_generator_forward.8} parent=23 // pred_fallthru
        _
    $region24: #{resnet_generator_forward.8} parent=5 // pred_fallthru
      _
    %p137 = scmp.le.s32.totalorder 1, %s9
    %p138 = scmp.lt.s32.totalorder %s9, 3
    %p139 = pnand %p137, %p138
    %p140 = pneg %p139
    // Predicated region
    $region29: #{resnet_generator_forward.8} parent=5 // pred_check
      _
    $region30: #{resnet_generator_forward.8} parent=5 // pred_check_branch
      %142 = sbr.rel (%p139) target = $region32
    $region31: #{resnet_generator_forward.8} parent=5 // pred_region
      %s143 = ssub.s32 %s9, 1
      %s144 = smul.u32 32, %s14
      %p145 = scmp.lt.s32.totalorder %s144, 63
      %s146 = scalar_select %p145, %s144, 63
      %s147 = smul.addr %s146, 4
      %s148 = scalar_lea.vmem %s0, %s147
      %p149 = pneg %p35
      %p150 = pneg %p32
      %p151 = pneg %p56
      %p152 = pneg %p53
      %p153 = pneg %p77
      %p154 = pneg %p74
      %p155 = pneg %p103
      %p156 = pneg %p100
      %s157 = smul.u32 32, %s14
      %p158 = scmp.lt.s32.totalorder %s157, 63
      %s159 = scalar_select %p158, %s157, 63
      %s160 = smul.addr %s159, 4
      %s161 = scalar_lea.vmem %s3, %s160
      %s162 = smul.u32 32, %s14
      %p163 = scmp.lt.s32.totalorder %s162, 63
      %s164 = scalar_select %p163, %s162, 63
      %s165 = smul.addr %s164, 4
      %s166 = scalar_lea.vmem %s0, %s165
      %s167 = smul.u32 32, %s14
      %s168 = smul.u32 32, %s14
      %p169 = scmp.lt.s32.totalorder %s168, 63
      %s170 = scalar_select %p169, %s168, 63
      %s171 = smul.addr %s170, 4
      %s172 = scalar_lea.vmem %s3, %s171
      %s173 = smul.u32 32, %s14
      %v174 = vld [vmem:[%s166] sm:$0xf]
      %v175 = vld [vmem:[%s166 + $0x4] sm:$0xf]
      %v176 = vld [vmem:[%s166 + $0x8] sm:$0xf]
      %v177 = vld [vmem:[%s166 + $0xc] sm:$0xf]
      %v178 = vld [vmem:[%s166 + $0x10] sm:$0xf]
      %v179 = vld [vmem:[%s166 + $0x14] sm:$0xf]
      %v180 = vld [vmem:[%s166 + $0x18] sm:$0xf]
      %v181 = vld [vmem:[%s166 + $0x1c] sm:$0xf]
      %v182 = vld [vmem:[%s166 + $0x20] sm:$0xf]
      %v183 = vld [vmem:[%s166 + $0x24] sm:$0xf]
      %v184 = vld [vmem:[%s166 + $0x28] sm:$0xf]
      %v185 = vld [vmem:[%s166 + $0x2c] sm:$0xf]
      %v186 = vld [vmem:[%s166 + $0x30] sm:$0xf]
      %v187 = vld [vmem:[%s166 + $0x34] sm:$0xf]
      %v188 = vld [vmem:[%s166 + $0x38] sm:$0xf]
      %v189 = vld [vmem:[%s166 + $0x3c] sm:$0xf]
      %v190 = vld [vmem:[%s166 + $0x40] sm:$0xf]
      %v191 = vld [vmem:[%s166 + $0x44] sm:$0xf]
      %v192 = vld [vmem:[%s166 + $0x48] sm:$0xf]
      %v193 = vld [vmem:[%s166 + $0x4c] sm:$0xf]
      %v194 = vld [vmem:[%s166 + $0x50] sm:$0xf]
      %v195 = vld [vmem:[%s166 + $0x54] sm:$0xf]
      %v196 = vld [vmem:[%s166 + $0x58] sm:$0xf]
      %v197 = vld [vmem:[%s166 + $0x5c] sm:$0xf]
      %v198 = vld [vmem:[%s166 + $0x60] sm:$0xf]
      %v199 = vld [vmem:[%s166 + $0x64] sm:$0xf]
      %v200 = vld [vmem:[%s166 + $0x68] sm:$0xf]
      %v201 = vld [vmem:[%s166 + $0x6c] sm:$0xf]
      %v202 = vld [vmem:[%s166 + $0x70] sm:$0xf]
      %v203 = vld [vmem:[%s166 + $0x74] sm:$0xf]
      %v204 = vld [vmem:[%s166 + $0x78] sm:$0xf]
      %v205 = vld [vmem:[%s166 + $0x7c] sm:$0xf]
      %v206 = vunpack.c.l.bf16 %v174
      %v207 = vunpack.c.l.bf16 %v175
      %v208 = vunpack.c.l.bf16 %v176
      %v209 = vunpack.c.l.bf16 %v177
      %v210 = vunpack.c.l.bf16 %v178
      %v211 = vunpack.c.l.bf16 %v179
      %v212 = vunpack.c.l.bf16 %v180
      %v213 = vunpack.c.l.bf16 %v181
      %v214 = vunpack.c.l.bf16 %v182
      %v215 = vunpack.c.l.bf16 %v183
      %v216 = vunpack.c.l.bf16 %v184
      %v217 = vunpack.c.l.bf16 %v185
      %v218 = vunpack.c.l.bf16 %v186
      %v219 = vunpack.c.l.bf16 %v187
      %v220 = vunpack.c.l.bf16 %v188
      %v221 = vunpack.c.l.bf16 %v189
      %v222 = vunpack.c.l.bf16 %v190
      %v223 = vunpack.c.l.bf16 %v191
      %v224 = vunpack.c.l.bf16 %v192
      %v225 = vunpack.c.l.bf16 %v193
      %v226 = vunpack.c.l.bf16 %v194
      %v227 = vunpack.c.l.bf16 %v195
      %v228 = vunpack.c.l.bf16 %v196
      %v229 = vunpack.c.l.bf16 %v197
      %v230 = vunpack.c.l.bf16 %v198
      %v231 = vunpack.c.l.bf16 %v199
      %v232 = vunpack.c.l.bf16 %v200
      %v233 = vunpack.c.l.bf16 %v201
      %v234 = vunpack.c.l.bf16 %v202
      %v235 = vunpack.c.l.bf16 %v203
      %v236 = vunpack.c.l.bf16 %v204
      %v237 = vunpack.c.l.bf16 %v205
      %v238 = vld [vmem:[%s1] sm:$0x1]
      %v240 = vperm.slane %v238, 0
      %v242 = vmul.f32 %v206, %v240
      %v243 = vmul.f32 %v207, %v240
      %v244 = vmul.f32 %v208, %v240
      %v245 = vmul.f32 %v209, %v240
      %v246 = vmul.f32 %v210, %v240
      %v247 = vmul.f32 %v211, %v240
      %v248 = vmul.f32 %v212, %v240
      %v249 = vmul.f32 %v213, %v240
      %v250 = vmul.f32 %v214, %v240
      %v251 = vmul.f32 %v215, %v240
      %v252 = vmul.f32 %v216, %v240
      %v253 = vmul.f32 %v217, %v240
      %v254 = vmul.f32 %v218, %v240
      %v255 = vmul.f32 %v219, %v240
      %v256 = vmul.f32 %v220, %v240
      %v257 = vmul.f32 %v221, %v240
      %v258 = vmul.f32 %v222, %v240
      %v259 = vmul.f32 %v223, %v240
      %v260 = vmul.f32 %v224, %v240
      %v261 = vmul.f32 %v225, %v240
      %v262 = vmul.f32 %v226, %v240
      %v263 = vmul.f32 %v227, %v240
      %v264 = vmul.f32 %v228, %v240
      %v265 = vmul.f32 %v229, %v240
      %v266 = vmul.f32 %v230, %v240
      %v267 = vmul.f32 %v231, %v240
      %v268 = vmul.f32 %v232, %v240
      %v269 = vmul.f32 %v233, %v240
      %v270 = vmul.f32 %v234, %v240
      %v271 = vmul.f32 %v235, %v240
      %v272 = vmul.f32 %v236, %v240
      %v273 = vmul.f32 %v237, %v240
      %v274 = vld [vmem:[%s2] sm:$0x1]
      %v276 = vperm.slane %v274, 0
      %v278 = vadd.f32 %v242, %v276
      %v279 = vadd.f32 %v243, %v276
      %v280 = vadd.f32 %v244, %v276
      %v281 = vadd.f32 %v245, %v276
      %v282 = vadd.f32 %v246, %v276
      %v283 = vadd.f32 %v247, %v276
      %v284 = vadd.f32 %v248, %v276
      %v285 = vadd.f32 %v249, %v276
      %v286 = vadd.f32 %v250, %v276
      %v287 = vadd.f32 %v251, %v276
      %v288 = vadd.f32 %v252, %v276
      %v289 = vadd.f32 %v253, %v276
      %v290 = vadd.f32 %v254, %v276
      %v291 = vadd.f32 %v255, %v276
      %v292 = vadd.f32 %v256, %v276
      %v293 = vadd.f32 %v257, %v276
      %v294 = vadd.f32 %v258, %v276
      %v295 = vadd.f32 %v259, %v276
      %v296 = vadd.f32 %v260, %v276
      %v297 = vadd.f32 %v261, %v276
      %v298 = vadd.f32 %v262, %v276
      %v299 = vadd.f32 %v263, %v276
      %v300 = vadd.f32 %v264, %v276
      %v301 = vadd.f32 %v265, %v276
      %v302 = vadd.f32 %v266, %v276
      %v303 = vadd.f32 %v267, %v276
      %v304 = vadd.f32 %v268, %v276
      %v305 = vadd.f32 %v269, %v276
      %v306 = vadd.f32 %v270, %v276
      %v307 = vadd.f32 %v271, %v276
      %v308 = vadd.f32 %v272, %v276
      %v309 = vadd.f32 %v273, %v276
      %v310 = vmax.f32 %v278, 0.0
      %v311 = vmax.f32 %v279, 0.0
      %v312 = vmax.f32 %v280, 0.0
      %v313 = vmax.f32 %v281, 0.0
      %v314 = vmax.f32 %v282, 0.0
      %v315 = vmax.f32 %v283, 0.0
      %v316 = vmax.f32 %v284, 0.0
      %v317 = vmax.f32 %v285, 0.0
      %v318 = vmax.f32 %v286, 0.0
      %v319 = vmax.f32 %v287, 0.0
      %v320 = vmax.f32 %v288, 0.0
      %v321 = vmax.f32 %v289, 0.0
      %v322 = vmax.f32 %v290, 0.0
      %v323 = vmax.f32 %v291, 0.0
      %v324 = vmax.f32 %v292, 0.0
      %v325 = vmax.f32 %v293, 0.0
      %v326 = vmax.f32 %v294, 0.0
      %v327 = vmax.f32 %v295, 0.0
      %v328 = vmax.f32 %v296, 0.0
      %v329 = vmax.f32 %v297, 0.0
      %v330 = vmax.f32 %v298, 0.0
      %v331 = vmax.f32 %v299, 0.0
      %v332 = vmax.f32 %v300, 0.0
      %v333 = vmax.f32 %v301, 0.0
      %v334 = vmax.f32 %v302, 0.0
      %v335 = vmax.f32 %v303, 0.0
      %v336 = vmax.f32 %v304, 0.0
      %v337 = vmax.f32 %v305, 0.0
      %v338 = vmax.f32 %v306, 0.0
      %v339 = vmax.f32 %v307, 0.0
      %v340 = vmax.f32 %v308, 0.0
      %v341 = vmax.f32 %v309, 0.0
      %v342 = vpack.c.bf16 %v310, %v310
      %v343 = vpack.c.bf16 %v311, %v311
      %v344 = vpack.c.bf16 %v312, %v312
      %v345 = vpack.c.bf16 %v313, %v313
      %v346 = vpack.c.bf16 %v314, %v314
      %v347 = vpack.c.bf16 %v315, %v315
      %v348 = vpack.c.bf16 %v316, %v316
      %v349 = vpack.c.bf16 %v317, %v317
      %v350 = vpack.c.bf16 %v318, %v318
      %v351 = vpack.c.bf16 %v319, %v319
      %v352 = vpack.c.bf16 %v320, %v320
      %v353 = vpack.c.bf16 %v321, %v321
      %v354 = vpack.c.bf16 %v322, %v322
      %v355 = vpack.c.bf16 %v323, %v323
      %v356 = vpack.c.bf16 %v324, %v324
      %v357 = vpack.c.bf16 %v325, %v325
      %v358 = vpack.c.bf16 %v326, %v326
      %v359 = vpack.c.bf16 %v327, %v327
      %v360 = vpack.c.bf16 %v328, %v328
      %v361 = vpack.c.bf16 %v329, %v329
      %v362 = vpack.c.bf16 %v330, %v330
      %v363 = vpack.c.bf16 %v331, %v331
      %v364 = vpack.c.bf16 %v332, %v332
      %v365 = vpack.c.bf16 %v333, %v333
      %v366 = vpack.c.bf16 %v334, %v334
      %v367 = vpack.c.bf16 %v335, %v335
      %v368 = vpack.c.bf16 %v336, %v336
      %v369 = vpack.c.bf16 %v337, %v337
      %v370 = vpack.c.bf16 %v338, %v338
      %v371 = vpack.c.bf16 %v339, %v339
      %v372 = vpack.c.bf16 %v340, %v340
      %v373 = vpack.c.bf16 %v341, %v341
      %374 = vst [vmem:[%s172] sm:$0xf] %v342
      %375 = vst [vmem:[%s172 + $0x4] sm:$0xf] %v343
      %376 = vst [vmem:[%s172 + $0x8] sm:$0xf] %v344
      %377 = vst [vmem:[%s172 + $0xc] sm:$0xf] %v345
      %378 = vst [vmem:[%s172 + $0x10] sm:$0xf] %v346
      %379 = vst [vmem:[%s172 + $0x14] sm:$0xf] %v347
      %380 = vst [vmem:[%s172 + $0x18] sm:$0xf] %v348
      %381 = vst [vmem:[%s172 + $0x1c] sm:$0xf] %v349
      %382 = vst [vmem:[%s172 + $0x20] sm:$0xf] %v350
      %383 = vst [vmem:[%s172 + $0x24] sm:$0xf] %v351
      %384 = vst [vmem:[%s172 + $0x28] sm:$0xf] %v352
      %385 = vst [vmem:[%s172 + $0x2c] sm:$0xf] %v353
      %386 = vst [vmem:[%s172 + $0x30] sm:$0xf] %v354
      %387 = vst [vmem:[%s172 + $0x34] sm:$0xf] %v355
      %388 = vst [vmem:[%s172 + $0x38] sm:$0xf] %v356
      %389 = vst [vmem:[%s172 + $0x3c] sm:$0xf] %v357
      %390 = vst [vmem:[%s172 + $0x40] sm:$0xf] %v358
      %391 = vst [vmem:[%s172 + $0x44] sm:$0xf] %v359
      %392 = vst [vmem:[%s172 + $0x48] sm:$0xf] %v360
      %393 = vst [vmem:[%s172 + $0x4c] sm:$0xf] %v361
      %394 = vst [vmem:[%s172 + $0x50] sm:$0xf] %v362
      %395 = vst [vmem:[%s172 + $0x54] sm:$0xf] %v363
      %396 = vst [vmem:[%s172 + $0x58] sm:$0xf] %v364
      %397 = vst [vmem:[%s172 + $0x5c] sm:$0xf] %v365
      %398 = vst [vmem:[%s172 + $0x60] sm:$0xf] %v366
      %399 = vst [vmem:[%s172 + $0x64] sm:$0xf] %v367
      %400 = vst [vmem:[%s172 + $0x68] sm:$0xf] %v368
      %401 = vst [vmem:[%s172 + $0x6c] sm:$0xf] %v369
      %402 = vst [vmem:[%s172 + $0x70] sm:$0xf] %v370
      %403 = vst [vmem:[%s172 + $0x74] sm:$0xf] %v371
      %404 = vst [vmem:[%s172 + $0x78] sm:$0xf] %v372
      %405 = vst [vmem:[%s172 + $0x7c] sm:$0xf] %v373
      %s406 = smul.u32 32, %s14
      %p407 = scmp.lt.s32.totalorder %s406, 63
      %s408 = scalar_select %p407, %s406, 63
      %s409 = smul.addr %s408, 4
      %s410 = scalar_lea.vmem %s3, %s409
      // Predicated region
      $region33: #{resnet_generator_forward.8} parent=31 // pred_check
        %p411 = pneg %p100
      $region34: #{resnet_generator_forward.8} parent=31 // pred_check_branch
        %413 = sbr.rel (%p411) target = $region36
      $region35: #{resnet_generator_forward.8} parent=31 // pred_region
        %s414 = smul.u32 32, %s14
      $region36: #{resnet_generator_forward.8} parent=31 // pred_fallthru
        _
    $region32: #{resnet_generator_forward.8} parent=5 // pred_fallthru
      _
    %p415 = scmp.le.s32.totalorder 2, %s9
    // Predicated region
    $region37: #{resnet_generator_forward.8} parent=5 // pred_check
      %p416 = pneg %p415
    $region38: #{resnet_generator_forward.8} parent=5 // pred_check_branch
      %418 = sbr.rel (%p416) target = $region40
    $region39: #{resnet_generator_forward.8} parent=5 // pred_region
      %s419 = ssub.s32 %s9, 2
      // Predicated region
      $region41: #{resnet_generator_forward.8} parent=39 // pred_check
        %p420 = pneg %p106
      $region42: #{resnet_generator_forward.8} parent=39 // pred_check_branch
        %422 = sbr.rel (%p420) target = $region44
      $region43: #{resnet_generator_forward.8} parent=39 // pred_region
        %s423 = smul.u32 32, %s15
        %p424 = scmp.lt.s32.totalorder %s423, 63
        %s425 = scalar_select %p424, %s423, 63
        %s426 = smul.addr %s425, 4
        %s427 = scalar_lea.vmem %s3, %s426
      $region44: #{resnet_generator_forward.8} parent=39 // pred_fallthru
        _
    $region40: #{resnet_generator_forward.8} parent=5 // pred_fallthru
      _
  $region6: #{resnet_generator_forward.8} parent=0 // loop_footer
    %s13 = sadd.s32 1, %s9
  $region7: #{resnet_generator_forward.8} parent=0 // loop_footer_branch
    %8 = sbr.rel target = $region3
  $region8: #{resnet_generator_forward.8} parent=0 // loop_exit
    _

// kernel: resnet_generator_forward.7
$region0: #{resnet_generator_forward.7}
  #allocation0 [shape = 'u32[]', space=smem, size = 0x4, offset = 0x4, fixed_abs, tag = 'smem constant byte address 0x4 - core index']
  #allocation1 [shape = 'u32[72,128]{1,0:T(1,128)}', space=vmem, size = 0x9000, scoped, tag = 'internal scratch']
  %s0 = inlined_call_operand.vmem [shape: bf16[512,256], index: 0, kind: input, shape index: {}]
  %s1 = inlined_call_operand.vmem [shape: bf16[256,128], index: 1, kind: input, shape index: {}]
  %s2 = inlined_call_operand.vmem [shape: bf16[512,128], index: 2, kind: output, shape index: {0}]
  %s3 = inlined_call_operand.vmem [shape: f32[2,2,128], index: 3, kind: output, shape index: {1}]
  %4 = xla_tuple %s2, %s3
  %s5 = sld [smem:[#allocation0]]
  $region49: #{resnet_generator_forward.7} parent=0
    _
  %s7 = ssub.s32 1, %s5
  %s8 = scalar_select 0, %s7, %s5
  loop: start=0, step=1, limit=4
  $region2: #{resnet_generator_forward.7} parent=0 // loop_pre_header
    _
  $region3: #{resnet_generator_forward.7} parent=0 // loop_header
    %s10 = sphi 0, %s14
    %p11 = scmp.ge.s32.totalorder %s10, 4
    %s20 = sphi 0, %s22
    %s23 = sphi 0, %s20
    %s24 = sphi 0, %s23
    %s40 = sphi 0, %s24
    %s44 = sphi 0, %s44
    %s46 = sphi 0, %s44
    %s47 = sphi 0, %s46
    %s61 = sphi 0, %s47
    %s67 = sphi 0, %s69
    %s70 = sphi 0, %s67
    %s71 = sphi 0, %s70
    %s87 = sphi 0, %s71
    %s93 = sphi 0, %s95
    %s96 = sphi 0, %s93
    %s97 = sphi 0, %s96
    %s113 = sphi 0, %s97
  $region4: #{resnet_generator_forward.7} parent=0 // loop_header_branch
    %13 = sbr.rel (%p11) target = $region8
  $region5: #{resnet_generator_forward.7} parent=0 // loop_body
    %s15 = ssub.s32 %s10, 1
    %s16 = ssub.s32 %s10, 2
    %s17 = sadd.s32 %s10, 1
    %s18 = ssub.s32 %s10, %s17
    %p19 = scmp.eq.s32.totalorder %s18, 0
    %s21 = sadd.s32 %s20, 1
    %s22 = scalar_select %p19, %s20, %s21
    %p25 = pneg %p19
    %p26 = scmp.eq.s32.totalorder %s10, 1
    %p27 = por %p25, %p26
    %p28 = scmp.ne.s32.totalorder %s20, %s23
    %p29 = scmp.eq.s32.totalorder %s10, 0
    %p30 = por %p28, %p29
    %p31 = scmp.ne.s32.totalorder %s20, %s23
    %p32 = scmp.eq.s32.totalorder %s15, 1
    %p33 = por %p31, %p32
    %p34 = scmp.ne.s32.totalorder %s23, %s24
    %p35 = scmp.eq.s32.totalorder %s15, 0
    %p36 = por %p34, %p35
    %p37 = scmp.ne.s32.totalorder %s23, %s24
    %p38 = scmp.eq.s32.totalorder %s16, 1
    %p39 = por %p37, %p38
    %p41 = scmp.ne.s32.totalorder %s24, %s40
    %p42 = scmp.eq.s32.totalorder %s16, 0
    %p43 = por %p41, %p42
    %s45 = sadd.s32 %s44, 1
    %p48 = scmp.eq.s32.totalorder %s10, 1
    %p49 = scmp.ne.s32.totalorder %s44, %s46
    %p50 = scmp.eq.s32.totalorder %s10, 0
    %p51 = por %p49, %p50
    %p52 = scmp.ne.s32.totalorder %s44, %s46
    %p53 = scmp.eq.s32.totalorder %s15, 1
    %p54 = por %p52, %p53
    %p55 = scmp.ne.s32.totalorder %s46, %s47
    %p56 = scmp.eq.s32.totalorder %s15, 0
    %p57 = por %p55, %p56
    %p58 = scmp.ne.s32.totalorder %s46, %s47
    %p59 = scmp.eq.s32.totalorder %s16, 1
    %p60 = por %p58, %p59
    %p62 = scmp.ne.s32.totalorder %s47, %s61
    %p63 = scmp.eq.s32.totalorder %s16, 0
    %p64 = por %p62, %p63
    %s65 = ssub.s32 %s10, %s17
    %p66 = scmp.eq.s32.totalorder %s65, 0
    %s68 = sadd.s32 %s67, 1
    %s69 = scalar_select %p66, %s67, %s68
    %p72 = pneg %p66
    %p73 = scmp.eq.s32.totalorder %s10, 1
    %p74 = por %p72, %p73
    %p75 = scmp.ne.s32.totalorder %s67, %s70
    %p76 = scmp.eq.s32.totalorder %s10, 0
    %p77 = por %p75, %p76
    %p78 = scmp.ne.s32.totalorder %s67, %s70
    %p79 = scmp.eq.s32.totalorder %s15, 1
    %p80 = por %p78, %p79
    %p81 = scmp.ne.s32.totalorder %s70, %s71
    %p82 = scmp.eq.s32.totalorder %s15, 0
    %p83 = por %p81, %p82
    %p84 = scmp.ne.s32.totalorder %s70, %s71
    %p85 = scmp.eq.s32.totalorder %s16, 1
    %p86 = por %p84, %p85
    %p88 = scmp.ne.s32.totalorder %s71, %s87
    %p89 = scmp.eq.s32.totalorder %s16, 0
    %p90 = por %p88, %p89
    %s91 = ssub.s32 %s10, %s17
    %p92 = scmp.eq.s32.totalorder %s91, 0
    %s94 = sadd.s32 %s93, 1
    %s95 = scalar_select %p92, %s93, %s94
    %p98 = pneg %p92
    %p99 = scmp.eq.s32.totalorder %s10, 1
    %p100 = por %p98, %p99
    %p101 = scmp.ne.s32.totalorder %s93, %s96
    %p102 = scmp.eq.s32.totalorder %s10, 0
    %p103 = por %p101, %p102
    %p104 = scmp.ne.s32.totalorder %s93, %s96
    %p105 = scmp.eq.s32.totalorder %s15, 1
    %p106 = por %p104, %p105
    %p107 = scmp.ne.s32.totalorder %s96, %s97
    %p108 = scmp.eq.s32.totalorder %s15, 0
    %p109 = por %p107, %p108
    %p110 = scmp.ne.s32.totalorder %s96, %s97
    %p111 = scmp.eq.s32.totalorder %s16, 1
    %p112 = por %p110, %p111
    %p114 = scmp.ne.s32.totalorder %s97, %s113
    %p115 = scmp.eq.s32.totalorder %s16, 0
    %p116 = por %p114, %p115
    %p117 = scmp.le.s32.totalorder 1, %s10
    %p118 = scmp.lt.s32.totalorder %s10, 3
    %p119 = pnand %p117, %p118
    %p120 = pneg %p119
    // Predicated region
    $region9: #{resnet_generator_forward.7} parent=5 // pred_check
      _
    $region10: #{resnet_generator_forward.7} parent=5 // pred_check_branch
      %122 = sbr.rel (%p119) target = $region12
    $region11: #{resnet_generator_forward.7} parent=5 // pred_region
      %s123 = ssub.s32 %s10, 1
      // Predicated region
      $region13: #{resnet_generator_forward.7} parent=11 // pred_check
        %p124 = pneg %p57
      $region14: #{resnet_generator_forward.7} parent=11 // pred_check_branch
        %126 = sbr.rel (%p124) target = $region16
      $region15: #{resnet_generator_forward.7} parent=11 // pred_region
        _
      $region16: #{resnet_generator_forward.7} parent=11 // pred_fallthru
        _
    $region12: #{resnet_generator_forward.7} parent=5 // pred_fallthru
      _
    %p127 = scmp.lt.s32.totalorder %s10, 2
    // Predicated region
    $region17: #{resnet_generator_forward.7} parent=5 // pred_check
      %p128 = pneg %p127
    $region18: #{resnet_generator_forward.7} parent=5 // pred_check_branch
      %130 = sbr.rel (%p128) target = $region20
    $region19: #{resnet_generator_forward.7} parent=5 // pred_region
      // Predicated region
      $region21: #{resnet_generator_forward.7} parent=19 // pred_check
        %p131 = pneg %p30
      $region22: #{resnet_generator_forward.7} parent=19 // pred_check_branch
        %133 = sbr.rel (%p131) target = $region24
      $region23: #{resnet_generator_forward.7} parent=19 // pred_region
        %s134 = smul.u32 32, %s10
        %p135 = scmp.lt.s32.totalorder %s134, 63
        %s136 = scalar_select %p135, %s134, 63
        %s137 = smul.addr %s136, 2
        %s138 = smul.addr %s137, 4
        %s139 = scalar_lea.vmem %s0, %s138
        %s140 = smul.u32 32, %s10
      $region24: #{resnet_generator_forward.7} parent=19 // pred_fallthru
        _
    $region20: #{resnet_generator_forward.7} parent=5 // pred_fallthru
      _
    %p141 = scmp.le.s32.totalorder 1, %s10
    %p142 = scmp.lt.s32.totalorder %s10, 3
    %p143 = pnand %p141, %p142
    %p144 = pneg %p143
    // Predicated region
    $region25: #{resnet_generator_forward.7} parent=5 // pred_check
      _
    $region26: #{resnet_generator_forward.7} parent=5 // pred_check_branch
      %146 = sbr.rel (%p143) target = $region28
    $region27: #{resnet_generator_forward.7} parent=5 // pred_region
      %s147 = ssub.s32 %s10, 1
      %s148 = smul.u32 32, %s15
      %p149 = scmp.lt.s32.totalorder %s148, 63
      %s150 = scalar_select %p149, %s148, 63
      %s151 = smul.addr %s150, 2
      %s152 = smul.addr %s151, 4
      %s153 = scalar_lea.vmem %s0, %s152
      %p154 = pneg %p36
      %p155 = pneg %p33
      %p156 = pneg %p57
      %p157 = pneg %p54
      %p158 = pneg %p83
      %p159 = pneg %p80
      %s160 = smul.u32 32, %s15
      %p161 = scmp.lt.s32.totalorder %s160, 63
      %s162 = scalar_select %p161, %s160, 63
      %s163 = smul.addr %s162, 4
      %s164 = scalar_lea.vmem %s2, %s163
      %p165 = pneg %p109
      %p166 = pneg %p106
      %p167 = scmp.lt.s32.totalorder %s15, 1
      %s168 = scalar_select %p167, %s15, 1
      %s169 = smul.addr %s168, 2
      %s170 = scalar_lea.vmem %s3, %s169
      %s171 = smul.u32 32, %s15
      %p172 = scmp.lt.s32.totalorder %s171, 63
      %s173 = scalar_select %p172, %s171, 63
      %s174 = smul.addr %s173, 2
      %s175 = smul.addr %s174, 4
      %s176 = scalar_lea.vmem %s0, %s175
      %s177 = smul.u32 32, %s15
      %s178 = smul.u32 32, %s15
      %p179 = scmp.lt.s32.totalorder %s178, 63
      %s180 = scalar_select %p179, %s178, 63
      %s181 = smul.addr %s180, 4
      %s182 = scalar_lea.vmem %s2, %s181
      %s183 = smul.u32 32, %s15
      %p184 = scmp.lt.s32.totalorder %s15, 1
      %s185 = scalar_select %p184, %s15, 1
      %s186 = smul.addr %s185, 2
      %s187 = scalar_lea.vmem %s3, %s186
      %v188 = vld [vmem:[%s176] sm:$0xff]
      %v189 = vld [vmem:[%s176 + $0x8] sm:$0xff]
      %v190 = vld [vmem:[%s176 + $0x10] sm:$0xff]
      %v191 = vld [vmem:[%s176 + $0x18] sm:$0xff]
      %v192 = vld [vmem:[%s176 + $0x20] sm:$0xff]
      %v193 = vld [vmem:[%s176 + $0x28] sm:$0xff]
      %v194 = vld [vmem:[%s176 + $0x30] sm:$0xff]
      %v195 = vld [vmem:[%s176 + $0x38] sm:$0xff]
      %v196 = vld [vmem:[%s176 + $0x40] sm:$0xff]
      %v197 = vld [vmem:[%s176 + $0x48] sm:$0xff]
      %v198 = vld [vmem:[%s176 + $0x50] sm:$0xff]
      %v199 = vld [vmem:[%s176 + $0x58] sm:$0xff]
      %v200 = vld [vmem:[%s176 + $0x60] sm:$0xff]
      %v201 = vld [vmem:[%s176 + $0x68] sm:$0xff]
      %v202 = vld [vmem:[%s176 + $0x70] sm:$0xff]
      %v203 = vld [vmem:[%s176 + $0x78] sm:$0xff]
      %v204 = vld [vmem:[%s176 + $0x80] sm:$0xff]
      %v205 = vld [vmem:[%s176 + $0x88] sm:$0xff]
      %v206 = vld [vmem:[%s176 + $0x90] sm:$0xff]
      %v207 = vld [vmem:[%s176 + $0x98] sm:$0xff]
      %v208 = vld [vmem:[%s176 + $0xa0] sm:$0xff]
      %v209 = vld [vmem:[%s176 + $0xa8] sm:$0xff]
      %v210 = vld [vmem:[%s176 + $0xb0] sm:$0xff]
      %v211 = vld [vmem:[%s176 + $0xb8] sm:$0xff]
      %v212 = vld [vmem:[%s176 + $0xc0] sm:$0xff]
      %v213 = vld [vmem:[%s176 + $0xc8] sm:$0xff]
      %v214 = vld [vmem:[%s176 + $0xd0] sm:$0xff]
      %v215 = vld [vmem:[%s176 + $0xd8] sm:$0xff]
      %v216 = vld [vmem:[%s176 + $0xe0] sm:$0xff]
      %v217 = vld [vmem:[%s176 + $0xe8] sm:$0xff]
      %v218 = vld [vmem:[%s176 + $0xf0] sm:$0xff]
      %v219 = vld [vmem:[%s176 + $0xf8] sm:$0xff]
      %v220 = vld [vmem:[%s1] sm:$0xf]
      %v221 = vld [vmem:[%s1 + $0x4] sm:$0xf]
      %v222 = vld [vmem:[%s1 + $0x8] sm:$0xf]
      %v223 = vld [vmem:[%s1 + $0xc] sm:$0xf]
      %v224 = vld [vmem:[%s1 + $0x10] sm:$0xf]
      %v225 = vld [vmem:[%s1 + $0x14] sm:$0xf]
      %v226 = vld [vmem:[%s1 + $0x18] sm:$0xf]
      %v227 = vld [vmem:[%s1 + $0x1c] sm:$0xf]
      %v228 = vld [vmem:[%s1 + $0x20] sm:$0xf]
      %v229 = vld [vmem:[%s1 + $0x24] sm:$0xf]
      %v230 = vld [vmem:[%s1 + $0x28] sm:$0xf]
      %v231 = vld [vmem:[%s1 + $0x2c] sm:$0xf]
      %v232 = vld [vmem:[%s1 + $0x30] sm:$0xf]
      %v233 = vld [vmem:[%s1 + $0x34] sm:$0xf]
      %v234 = vld [vmem:[%s1 + $0x38] sm:$0xf]
      %v235 = vld [vmem:[%s1 + $0x3c] sm:$0xf]
      %v236 = vld [vmem:[%s1 + $0x40] sm:$0xf]
      %v237 = vld [vmem:[%s1 + $0x44] sm:$0xf]
      %v238 = vld [vmem:[%s1 + $0x48] sm:$0xf]
      %v239 = vld [vmem:[%s1 + $0x4c] sm:$0xf]
      %v240 = vld [vmem:[%s1 + $0x50] sm:$0xf]
      %v241 = vld [vmem:[%s1 + $0x54] sm:$0xf]
      %v242 = vld [vmem:[%s1 + $0x58] sm:$0xf]
      %v243 = vld [vmem:[%s1 + $0x5c] sm:$0xf]
      %v244 = vld [vmem:[%s1 + $0x60] sm:$0xf]
      %v245 = vld [vmem:[%s1 + $0x64] sm:$0xf]
      %v246 = vld [vmem:[%s1 + $0x68] sm:$0xf]
      %v247 = vld [vmem:[%s1 + $0x6c] sm:$0xf]
      %v248 = vld [vmem:[%s1 + $0x70] sm:$0xf]
      %v249 = vld [vmem:[%s1 + $0x74] sm:$0xf]
      %v250 = vld [vmem:[%s1 + $0x78] sm:$0xf]
      %v251 = vld [vmem:[%s1 + $0x7c] sm:$0xf]
      %v284 = vunpack.c.l.b16 %v188
      %v285 = vunpack.c.h.b16 %v188
      %v286 = vunpack.c.l.b16 %v189
      %v287 = vunpack.c.h.b16 %v189
      %v288 = vunpack.c.l.b16 %v190
      %v289 = vunpack.c.h.b16 %v190
      %v290 = vunpack.c.l.b16 %v191
      %v291 = vunpack.c.h.b16 %v191
      %v292 = vunpack.c.l.b16 %v192
      %v293 = vunpack.c.h.b16 %v192
      %v294 = vunpack.c.l.b16 %v193
      %v295 = vunpack.c.h.b16 %v193
      %v296 = vunpack.c.l.b16 %v194
      %v297 = vunpack.c.h.b16 %v194
      %v298 = vunpack.c.l.b16 %v195
      %v299 = vunpack.c.h.b16 %v195
      %v300 = vunpack.c.l.b16 %v196
      %v301 = vunpack.c.h.b16 %v196
      %v302 = vunpack.c.l.b16 %v197
      %v303 = vunpack.c.h.b16 %v197
      %v304 = vunpack.c.l.b16 %v198
      %v305 = vunpack.c.h.b16 %v198
      %v306 = vunpack.c.l.b16 %v199
      %v307 = vunpack.c.h.b16 %v199
      %v308 = vunpack.c.l.b16 %v200
      %v309 = vunpack.c.h.b16 %v200
      %v310 = vunpack.c.l.b16 %v201
      %v311 = vunpack.c.h.b16 %v201
      %v312 = vunpack.c.l.b16 %v202
      %v313 = vunpack.c.h.b16 %v202
      %v314 = vunpack.c.l.b16 %v203
      %v315 = vunpack.c.h.b16 %v203
      %v316 = vunpack.c.l.b16 %v204
      %v317 = vunpack.c.h.b16 %v204
      %v318 = vunpack.c.l.b16 %v205
      %v319 = vunpack.c.h.b16 %v205
      %v320 = vunpack.c.l.b16 %v206
      %v321 = vunpack.c.h.b16 %v206
      %v322 = vunpack.c.l.b16 %v207
      %v323 = vunpack.c.h.b16 %v207
      %v324 = vunpack.c.l.b16 %v208
      %v325 = vunpack.c.h.b16 %v208
      %v326 = vunpack.c.l.b16 %v209
      %v327 = vunpack.c.h.b16 %v209
      %v328 = vunpack.c.l.b16 %v210
      %v329 = vunpack.c.h.b16 %v210
      %v330 = vunpack.c.l.b16 %v211
      %v331 = vunpack.c.h.b16 %v211
      %v332 = vunpack.c.l.b16 %v212
      %v333 = vunpack.c.h.b16 %v212
      %v334 = vunpack.c.l.b16 %v213
      %v335 = vunpack.c.h.b16 %v213
      %v336 = vunpack.c.l.b16 %v214
      %v337 = vunpack.c.h.b16 %v214
      %v338 = vunpack.c.l.b16 %v215
      %v339 = vunpack.c.h.b16 %v215
      %v340 = vunpack.c.l.b16 %v216
      %v341 = vunpack.c.h.b16 %v216
      %v342 = vunpack.c.l.b16 %v217
      %v343 = vunpack.c.h.b16 %v217
      %v344 = vunpack.c.l.b16 %v218
      %v345 = vunpack.c.h.b16 %v218
      %v346 = vunpack.c.l.b16 %v219
      %v347 = vunpack.c.h.b16 %v219
      %v348 = vpack.c.b16 %v286, %v284
      %v349 = vpack.c.b16 %v287, %v285
      %v350 = vpack.c.b16 %v290, %v288
      %v351 = vpack.c.b16 %v291, %v289
      %v352 = vpack.c.b16 %v294, %v292
      %v353 = vpack.c.b16 %v295, %v293
      %v354 = vpack.c.b16 %v298, %v296
      %v355 = vpack.c.b16 %v299, %v297
      %v356 = vpack.c.b16 %v302, %v300
      %v357 = vpack.c.b16 %v303, %v301
      %v358 = vpack.c.b16 %v306, %v304
      %v359 = vpack.c.b16 %v307, %v305
      %v360 = vpack.c.b16 %v310, %v308
      %v361 = vpack.c.b16 %v311, %v309
      %v362 = vpack.c.b16 %v314, %v312
      %v363 = vpack.c.b16 %v315, %v313
      %v364 = vpack.c.b16 %v318, %v316
      %v365 = vpack.c.b16 %v319, %v317
      %v366 = vpack.c.b16 %v322, %v320
      %v367 = vpack.c.b16 %v323, %v321
      %v368 = vpack.c.b16 %v326, %v324
      %v369 = vpack.c.b16 %v327, %v325
      %v370 = vpack.c.b16 %v330, %v328
      %v371 = vpack.c.b16 %v331, %v329
      %v372 = vpack.c.b16 %v334, %v332
      %v373 = vpack.c.b16 %v335, %v333
      %v374 = vpack.c.b16 %v338, %v336
      %v375 = vpack.c.b16 %v339, %v337
      %v376 = vpack.c.b16 %v342, %v340
      %v377 = vpack.c.b16 %v343, %v341
      %v378 = vpack.c.b16 %v346, %v344
      %v379 = vpack.c.b16 %v347, %v345
      %v444 = vunpack.c.l.b16 %v220
      %v445 = vunpack.c.l.b16 %v221
      %v446 = vunpack.c.l.b16 %v222
      %v447 = vunpack.c.l.b16 %v223
      %v448 = vunpack.c.l.b16 %v224
      %v449 = vunpack.c.l.b16 %v225
      %v450 = vunpack.c.l.b16 %v226
      %v451 = vunpack.c.l.b16 %v227
      %v452 = vunpack.c.l.b16 %v228
      %v453 = vunpack.c.l.b16 %v229
      %v454 = vunpack.c.l.b16 %v230
      %v455 = vunpack.c.l.b16 %v231
      %v456 = vunpack.c.l.b16 %v232
      %v457 = vunpack.c.l.b16 %v233
      %v458 = vunpack.c.l.b16 %v234
      %v459 = vunpack.c.l.b16 %v235
      %v460 = vunpack.c.l.b16 %v236
      %v461 = vunpack.c.l.b16 %v237
      %v462 = vunpack.c.l.b16 %v238
      %v463 = vunpack.c.l.b16 %v239
      %v464 = vunpack.c.l.b16 %v240
      %v465 = vunpack.c.l.b16 %v241
      %v466 = vunpack.c.l.b16 %v242
      %v467 = vunpack.c.l.b16 %v243
      %v468 = vunpack.c.l.b16 %v244
      %v469 = vunpack.c.l.b16 %v245
      %v470 = vunpack.c.l.b16 %v246
      %v471 = vunpack.c.l.b16 %v247
      %v472 = vunpack.c.l.b16 %v248
      %v473 = vunpack.c.l.b16 %v249
      %v474 = vunpack.c.l.b16 %v250
      %v475 = vunpack.c.l.b16 %v251
      %v476 = vpack.c.b16 %v445, %v444
      %v477 = vpack.c.b16 %v447, %v446
      %v478 = vpack.c.b16 %v449, %v448
      %v479 = vpack.c.b16 %v451, %v450
      %v480 = vpack.c.b16 %v453, %v452
      %v481 = vpack.c.b16 %v455, %v454
      %v482 = vpack.c.b16 %v457, %v456
      %v483 = vpack.c.b16 %v459, %v458
      %v484 = vpack.c.b16 %v461, %v460
      %v485 = vpack.c.b16 %v463, %v462
      %v486 = vpack.c.b16 %v465, %v464
      %v487 = vpack.c.b16 %v467, %v466
      %v488 = vpack.c.b16 %v469, %v468
      %v489 = vpack.c.b16 %v471, %v470
      %v490 = vpack.c.b16 %v473, %v472
      %v491 = vpack.c.b16 %v475, %v474
      %508 = vmatpush.bf16.msra.mxu0 %v483
      %509 = vmatpush.bf16.msra.mxu0 %v482
      %510 = vmatpush.bf16.msra.mxu0 %v481
      %511 = vmatpush.bf16.msra.mxu0 %v480
      %512 = vmatpush.bf16.msra.mxu0 %v479
      %513 = vmatpush.bf16.msra.mxu0 %v478
      %514 = vmatpush.bf16.msra.mxu0 %v477
      %515 = vmatpush.bf16.msra.mxu0 %v476
      %516 = vmatmul.bf16.gmra.mxu0 %v348
      %v517 = vpop.f32.mrf.mxu0
      %v518 = vadd.f32 0.0, %v517
      %v519 = vpop.f32.mrf.mxu0
      %v520 = vadd.f32 0.0, %v519
      %521 = vmatmul.bf16.gmra.mxu0 %v350
      %v522 = vpop.f32.mrf.mxu0
      %v523 = vadd.f32 0.0, %v522
      %v524 = vpop.f32.mrf.mxu0
      %v525 = vadd.f32 0.0, %v524
      %526 = vmatmul.bf16.gmra.mxu0 %v352
      %v527 = vpop.f32.mrf.mxu0
      %v528 = vadd.f32 0.0, %v527
      %v529 = vpop.f32.mrf.mxu0
      %v530 = vadd.f32 0.0, %v529
      %531 = vmatmul.bf16.gmra.mxu0 %v354
      %v532 = vpop.f32.mrf.mxu0
      %v533 = vadd.f32 0.0, %v532
      %v534 = vpop.f32.mrf.mxu0
      %v535 = vadd.f32 0.0, %v534
      %536 = vmatmul.bf16.gmra.mxu0 %v356
      %v537 = vpop.f32.mrf.mxu0
      %v538 = vadd.f32 0.0, %v537
      %v539 = vpop.f32.mrf.mxu0
      %v540 = vadd.f32 0.0, %v539
      %541 = vmatmul.bf16.gmra.mxu0 %v358
      %v542 = vpop.f32.mrf.mxu0
      %v543 = vadd.f32 0.0, %v542
      %v544 = vpop.f32.mrf.mxu0
      %v545 = vadd.f32 0.0, %v544
      %546 = vmatmul.bf16.gmra.mxu0 %v360
      %v547 = vpop.f32.mrf.mxu0
      %v548 = vadd.f32 0.0, %v547
      %v549 = vpop.f32.mrf.mxu0
      %v550 = vadd.f32 0.0, %v549
      %551 = vmatmul.bf16.gmra.mxu0 %v362
      %v552 = vpop.f32.mrf.mxu0
      %v553 = vadd.f32 0.0, %v552
      %v554 = vpop.f32.mrf.mxu0
      %v555 = vadd.f32 0.0, %v554
      %556 = vmatmul.bf16.gmra.mxu0 %v364
      %v557 = vpop.f32.mrf.mxu0
      %v558 = vadd.f32 0.0, %v557
      %v559 = vpop.f32.mrf.mxu0
      %v560 = vadd.f32 0.0, %v559
      %561 = vmatmul.bf16.gmra.mxu0 %v366
      %v562 = vpop.f32.mrf.mxu0
      %v563 = vadd.f32 0.0, %v562
      %v564 = vpop.f32.mrf.mxu0
      %v565 = vadd.f32 0.0, %v564
      %566 = vmatmul.bf16.gmra.mxu0 %v368
      %v567 = vpop.f32.mrf.mxu0
      %v568 = vadd.f32 0.0, %v567
      %v569 = vpop.f32.mrf.mxu0
      %v570 = vadd.f32 0.0, %v569
      %571 = vmatmul.bf16.gmra.mxu0 %v370
      %v572 = vpop.f32.mrf.mxu0
      %v573 = vadd.f32 0.0, %v572
      %v574 = vpop.f32.mrf.mxu0
      %v575 = vadd.f32 0.0, %v574
      %576 = vmatmul.bf16.gmra.mxu0 %v372
      %v577 = vpop.f32.mrf.mxu0
      %v578 = vadd.f32 0.0, %v577
      %v579 = vpop.f32.mrf.mxu0
      %v580 = vadd.f32 0.0, %v579
      %581 = vmatmul.bf16.gmra.mxu0 %v374
      %v582 = vpop.f32.mrf.mxu0
      %v583 = vadd.f32 0.0, %v582
      %v584 = vpop.f32.mrf.mxu0
      %v585 = vadd.f32 0.0, %v584
      %586 = vmatmul.bf16.gmra.mxu0 %v376
      %v587 = vpop.f32.mrf.mxu0
      %v588 = vadd.f32 0.0, %v587
      %v589 = vpop.f32.mrf.mxu0
      %v590 = vadd.f32 0.0, %v589
      %591 = vmatmul.bf16.gmra.mxu0 %v378
      %v592 = vpop.f32.mrf.mxu0
      %v593 = vadd.f32 0.0, %v592
      %v594 = vpop.f32.mrf.mxu0
      %v595 = vadd.f32 0.0, %v594
      %596 = vdwg.mxu0
      %597 = vmatpush.bf16.msra.mxu0 %v491
      %598 = vmatpush.bf16.msra.mxu0 %v490
      %599 = vmatpush.bf16.msra.mxu0 %v489
      %600 = vmatpush.bf16.msra.mxu0 %v488
      %601 = vmatpush.bf16.msra.mxu0 %v487
      %602 = vmatpush.bf16.msra.mxu0 %v486
      %603 = vmatpush.bf16.msra.mxu0 %v485
      %604 = vmatpush.bf16.msra.mxu0 %v484
      %605 = vmatmul.bf16.gmra.mxu0 %v349
      %v606 = vpop.f32.mrf.mxu0
      %v607 = vadd.f32 %v518, %v606
      %v608 = vpop.f32.mrf.mxu0
      %v609 = vadd.f32 %v520, %v608
      %610 = vmatmul.bf16.gmra.mxu0 %v351
      %v611 = vpop.f32.mrf.mxu0
      %v612 = vadd.f32 %v523, %v611
      %v613 = vpop.f32.mrf.mxu0
      %v614 = vadd.f32 %v525, %v613
      %615 = vmatmul.bf16.gmra.mxu0 %v353
      %v616 = vpop.f32.mrf.mxu0
      %v617 = vadd.f32 %v528, %v616
      %v618 = vpop.f32.mrf.mxu0
      %v619 = vadd.f32 %v530, %v618
      %620 = vmatmul.bf16.gmra.mxu0 %v355
      %v621 = vpop.f32.mrf.mxu0
      %v622 = vadd.f32 %v533, %v621
      %v623 = vpop.f32.mrf.mxu0
      %v624 = vadd.f32 %v535, %v623
      %625 = vmatmul.bf16.gmra.mxu0 %v357
      %v626 = vpop.f32.mrf.mxu0
      %v627 = vadd.f32 %v538, %v626
      %v628 = vpop.f32.mrf.mxu0
      %v629 = vadd.f32 %v540, %v628
      %630 = vmatmul.bf16.gmra.mxu0 %v359
      %v631 = vpop.f32.mrf.mxu0
      %v632 = vadd.f32 %v543, %v631
      %v633 = vpop.f32.mrf.mxu0
      %v634 = vadd.f32 %v545, %v633
      %635 = vmatmul.bf16.gmra.mxu0 %v361
      %v636 = vpop.f32.mrf.mxu0
      %v637 = vadd.f32 %v548, %v636
      %v638 = vpop.f32.mrf.mxu0
      %v639 = vadd.f32 %v550, %v638
      %640 = vmatmul.bf16.gmra.mxu0 %v363
      %v641 = vpop.f32.mrf.mxu0
      %v642 = vadd.f32 %v553, %v641
      %v643 = vpop.f32.mrf.mxu0
      %v644 = vadd.f32 %v555, %v643
      %645 = vmatmul.bf16.gmra.mxu0 %v365
      %v646 = vpop.f32.mrf.mxu0
      %v647 = vadd.f32 %v558, %v646
      %v648 = vpop.f32.mrf.mxu0
      %v649 = vadd.f32 %v560, %v648
      %650 = vmatmul.bf16.gmra.mxu0 %v367
      %v651 = vpop.f32.mrf.mxu0
      %v652 = vadd.f32 %v563, %v651
      %v653 = vpop.f32.mrf.mxu0
      %v654 = vadd.f32 %v565, %v653
      %655 = vmatmul.bf16.gmra.mxu0 %v369
      %v656 = vpop.f32.mrf.mxu0
      %v657 = vadd.f32 %v568, %v656
      %v658 = vpop.f32.mrf.mxu0
      %v659 = vadd.f32 %v570, %v658
      %660 = vmatmul.bf16.gmra.mxu0 %v371
      %v661 = vpop.f32.mrf.mxu0
      %v662 = vadd.f32 %v573, %v661
      %v663 = vpop.f32.mrf.mxu0
      %v664 = vadd.f32 %v575, %v663
      %665 = vmatmul.bf16.gmra.mxu0 %v373
      %v666 = vpop.f32.mrf.mxu0
      %v667 = vadd.f32 %v578, %v666
      %v668 = vpop.f32.mrf.mxu0
      %v669 = vadd.f32 %v580, %v668
      %670 = vmatmul.bf16.gmra.mxu0 %v375
      %v671 = vpop.f32.mrf.mxu0
      %v672 = vadd.f32 %v583, %v671
      %v673 = vpop.f32.mrf.mxu0
      %v674 = vadd.f32 %v585, %v673
      %675 = vmatmul.bf16.gmra.mxu0 %v377
      %v676 = vpop.f32.mrf.mxu0
      %v677 = vadd.f32 %v588, %v676
      %v678 = vpop.f32.mrf.mxu0
      %v679 = vadd.f32 %v590, %v678
      %680 = vmatmul.bf16.gmra.mxu0 %v379
      %v681 = vpop.f32.mrf.mxu0
      %v682 = vadd.f32 %v593, %v681
      %v683 = vpop.f32.mrf.mxu0
      %v684 = vadd.f32 %v595, %v683
      %685 = vdwg.mxu0
      %v686 = vpack.c.bf16 %v607, %v607
      %v687 = vpack.c.bf16 %v609, %v609
      %v688 = vpack.c.bf16 %v612, %v612
      %v689 = vpack.c.bf16 %v614, %v614
      %v690 = vpack.c.bf16 %v617, %v617
      %v691 = vpack.c.bf16 %v619, %v619
      %v692 = vpack.c.bf16 %v622, %v622
      %v693 = vpack.c.bf16 %v624, %v624
      %v694 = vpack.c.bf16 %v627, %v627
      %v695 = vpack.c.bf16 %v629, %v629
      %v696 = vpack.c.bf16 %v632, %v632
      %v697 = vpack.c.bf16 %v634, %v634
      %v698 = vpack.c.bf16 %v637, %v637
      %v699 = vpack.c.bf16 %v639, %v639
      %v700 = vpack.c.bf16 %v642, %v642
      %v701 = vpack.c.bf16 %v644, %v644
      %v702 = vpack.c.bf16 %v647, %v647
      %v703 = vpack.c.bf16 %v649, %v649
      %v704 = vpack.c.bf16 %v652, %v652
      %v705 = vpack.c.bf16 %v654, %v654
      %v706 = vpack.c.bf16 %v657, %v657
      %v707 = vpack.c.bf16 %v659, %v659
      %v708 = vpack.c.bf16 %v662, %v662
      %v709 = vpack.c.bf16 %v664, %v664
      %v710 = vpack.c.bf16 %v667, %v667
      %v711 = vpack.c.bf16 %v669, %v669
      %v712 = vpack.c.bf16 %v672, %v672
      %v713 = vpack.c.bf16 %v674, %v674
      %v714 = vpack.c.bf16 %v677, %v677
      %v715 = vpack.c.bf16 %v679, %v679
      %v716 = vpack.c.bf16 %v682, %v682
      %v717 = vpack.c.bf16 %v684, %v684
      %718 = vst [vmem:[%s182] sm:$0xf] %v686
      %719 = vst [vmem:[%s182 + $0x4] sm:$0xf] %v687
      %720 = vst [vmem:[%s182 + $0x8] sm:$0xf] %v688
      %721 = vst [vmem:[%s182 + $0xc] sm:$0xf] %v689
      %722 = vst [vmem:[%s182 + $0x10] sm:$0xf] %v690
      %723 = vst [vmem:[%s182 + $0x14] sm:$0xf] %v691
      %724 = vst [vmem:[%s182 + $0x18] sm:$0xf] %v692
      %725 = vst [vmem:[%s182 + $0x1c] sm:$0xf] %v693
      %726 = vst [vmem:[%s182 + $0x20] sm:$0xf] %v694
      %727 = vst [vmem:[%s182 + $0x24] sm:$0xf] %v695
      %728 = vst [vmem:[%s182 + $0x28] sm:$0xf] %v696
      %729 = vst [vmem:[%s182 + $0x2c] sm:$0xf] %v697
      %730 = vst [vmem:[%s182 + $0x30] sm:$0xf] %v698
      %731 = vst [vmem:[%s182 + $0x34] sm:$0xf] %v699
      %732 = vst [vmem:[%s182 + $0x38] sm:$0xf] %v700
      %733 = vst [vmem:[%s182 + $0x3c] sm:$0xf] %v701
      %734 = vst [vmem:[%s182 + $0x40] sm:$0xf] %v702
      %735 = vst [vmem:[%s182 + $0x44] sm:$0xf] %v703
      %736 = vst [vmem:[%s182 + $0x48] sm:$0xf] %v704
      %737 = vst [vmem:[%s182 + $0x4c] sm:$0xf] %v705
      %738 = vst [vmem:[%s182 + $0x50] sm:$0xf] %v706
      %739 = vst [vmem:[%s182 + $0x54] sm:$0xf] %v707
      %740 = vst [vmem:[%s182 + $0x58] sm:$0xf] %v708
      %741 = vst [vmem:[%s182 + $0x5c] sm:$0xf] %v709
      %742 = vst [vmem:[%s182 + $0x60] sm:$0xf] %v710
      %743 = vst [vmem:[%s182 + $0x64] sm:$0xf] %v711
      %744 = vst [vmem:[%s182 + $0x68] sm:$0xf] %v712
      %745 = vst [vmem:[%s182 + $0x6c] sm:$0xf] %v713
      %746 = vst [vmem:[%s182 + $0x70] sm:$0xf] %v714
      %747 = vst [vmem:[%s182 + $0x74] sm:$0xf] %v715
      %748 = vst [vmem:[%s182 + $0x78] sm:$0xf] %v716
      %749 = vst [vmem:[%s182 + $0x7c] sm:$0xf] %v717
      %v750 = vadd.f32 %v607, %v609
      %v751 = vadd.f32 %v750, %v612
      %v752 = vadd.f32 %v751, %v614
      %v753 = vadd.f32 %v752, %v617
      %v754 = vadd.f32 %v753, %v619
      %v755 = vadd.f32 %v754, %v622
      %v756 = vadd.f32 %v755, %v624
      %v757 = vadd.f32 %v756, %v627
      %v758 = vadd.f32 %v757, %v629
      %v759 = vadd.f32 %v758, %v632
      %v760 = vadd.f32 %v759, %v634
      %v761 = vadd.f32 %v760, %v637
      %v762 = vadd.f32 %v761, %v639
      %v763 = vadd.f32 %v762, %v642
      %v764 = vadd.f32 %v763, %v644
      %v765 = vadd.f32 %v764, %v647
      %v766 = vadd.f32 %v765, %v649
      %v767 = vadd.f32 %v766, %v652
      %v768 = vadd.f32 %v767, %v654
      %v769 = vadd.f32 %v768, %v657
      %v770 = vadd.f32 %v769, %v659
      %v771 = vadd.f32 %v770, %v662
      %v772 = vadd.f32 %v771, %v664
      %v773 = vadd.f32 %v772, %v667
      %v774 = vadd.f32 %v773, %v669
      %v775 = vadd.f32 %v774, %v672
      %v776 = vadd.f32 %v775, %v674
      %v777 = vadd.f32 %v776, %v677
      %v778 = vadd.f32 %v777, %v679
      %v779 = vadd.f32 %v778, %v682
      %v780 = vadd.f32 %v779, %v684
      %v781 = vrot.slane %v780, 4
      %v782 = vadd.f32 %v780, %v781
      %v783 = vrot.slane %v782, 2
      %v784 = vadd.f32 %v782, %v783
      %v785 = vrot.slane %v784, 1
      %v786 = vadd.f32 %v784, %v785
      %v787 = vmul.f32 %v607, %v607
      %v788 = vmul.f32 %v609, %v609
      %v789 = vmul.f32 %v612, %v612
      %v790 = vmul.f32 %v614, %v614
      %v791 = vmul.f32 %v617, %v617
      %v792 = vmul.f32 %v619, %v619
      %v793 = vmul.f32 %v622, %v622
      %v794 = vmul.f32 %v624, %v624
      %v795 = vmul.f32 %v627, %v627
      %v796 = vmul.f32 %v629, %v629
      %v797 = vmul.f32 %v632, %v632
      %v798 = vmul.f32 %v634, %v634
      %v799 = vmul.f32 %v637, %v637
      %v800 = vmul.f32 %v639, %v639
      %v801 = vmul.f32 %v642, %v642
      %v802 = vmul.f32 %v644, %v644
      %v803 = vmul.f32 %v647, %v647
      %v804 = vmul.f32 %v649, %v649
      %v805 = vmul.f32 %v652, %v652
      %v806 = vmul.f32 %v654, %v654
      %v807 = vmul.f32 %v657, %v657
      %v808 = vmul.f32 %v659, %v659
      %v809 = vmul.f32 %v662, %v662
      %v810 = vmul.f32 %v664, %v664
      %v811 = vmul.f32 %v667, %v667
      %v812 = vmul.f32 %v669, %v669
      %v813 = vmul.f32 %v672, %v672
      %v814 = vmul.f32 %v674, %v674
      %v815 = vmul.f32 %v677, %v677
      %v816 = vmul.f32 %v679, %v679
      %v817 = vmul.f32 %v682, %v682
      %v818 = vmul.f32 %v684, %v684
      %v819 = vadd.f32 %v787, %v788
      %v820 = vadd.f32 %v819, %v789
      %v821 = vadd.f32 %v820, %v790
      %v822 = vadd.f32 %v821, %v791
      %v823 = vadd.f32 %v822, %v792
      %v824 = vadd.f32 %v823, %v793
      %v825 = vadd.f32 %v824, %v794
      %v826 = vadd.f32 %v825, %v795
      %v827 = vadd.f32 %v826, %v796
      %v828 = vadd.f32 %v827, %v797
      %v829 = vadd.f32 %v828, %v798
      %v830 = vadd.f32 %v829, %v799
      %v831 = vadd.f32 %v830, %v800
      %v832 = vadd.f32 %v831, %v801
      %v833 = vadd.f32 %v832, %v802
      %v834 = vadd.f32 %v833, %v803
      %v835 = vadd.f32 %v834, %v804
      %v836 = vadd.f32 %v835, %v805
      %v837 = vadd.f32 %v836, %v806
      %v838 = vadd.f32 %v837, %v807
      %v839 = vadd.f32 %v838, %v808
      %v840 = vadd.f32 %v839, %v809
      %v841 = vadd.f32 %v840, %v810
      %v842 = vadd.f32 %v841, %v811
      %v843 = vadd.f32 %v842, %v812
      %v844 = vadd.f32 %v843, %v813
      %v845 = vadd.f32 %v844, %v814
      %v846 = vadd.f32 %v845, %v815
      %v847 = vadd.f32 %v846, %v816
      %v848 = vadd.f32 %v847, %v817
      %v849 = vadd.f32 %v848, %v818
      %v850 = vrot.slane %v849, 4
      %v851 = vadd.f32 %v849, %v850
      %v852 = vrot.slane %v851, 2
      %v853 = vadd.f32 %v851, %v852
      %v854 = vrot.slane %v853, 1
      %v855 = vadd.f32 %v853, %v854
      %vm856 = vcmask 1040384
      %v857 = vsel %vm856, %v786, %v855
      %858 = vst [vmem:[%s187] sm:$0x3] %v857
      %s859 = smul.u32 32, %s15
      %p860 = scmp.lt.s32.totalorder %s859, 63
      %s861 = scalar_select %p860, %s859, 63
      %s862 = smul.addr %s861, 4
      %s863 = scalar_lea.vmem %s2, %s862
      %p864 = scmp.lt.s32.totalorder %s15, 1
      %s865 = scalar_select %p864, %s15, 1
      %s866 = smul.addr %s865, 2
      %s867 = scalar_lea.vmem %s3, %s866
      // Predicated region
      $region29: #{resnet_generator_forward.7} parent=27 // pred_check
        %p868 = pneg %p80
      $region30: #{resnet_generator_forward.7} parent=27 // pred_check_branch
        %870 = sbr.rel (%p868) target = $region32
      $region31: #{resnet_generator_forward.7} parent=27 // pred_region
        %s871 = smul.u32 32, %s15
      $region32: #{resnet_generator_forward.7} parent=27 // pred_fallthru
        _
      // Predicated region
      $region33: #{resnet_generator_forward.7} parent=27 // pred_check
        %p872 = pneg %p106
      $region34: #{resnet_generator_forward.7} parent=27 // pred_check_branch
        %874 = sbr.rel (%p872) target = $region36
      $region35: #{resnet_generator_forward.7} parent=27 // pred_region
        _
      $region36: #{resnet_generator_forward.7} parent=27 // pred_fallthru
        _
    $region28: #{resnet_generator_forward.7} parent=5 // pred_fallthru
      _
    %p875 = scmp.le.s32.totalorder 2, %s10
    // Predicated region
    $region37: #{resnet_generator_forward.7} parent=5 // pred_check
      %p876 = pneg %p875
    $region38: #{resnet_generator_forward.7} parent=5 // pred_check_branch
      %878 = sbr.rel (%p876) target = $region40
    $region39: #{resnet_generator_forward.7} parent=5 // pred_region
      %s879 = ssub.s32 %s10, 2
      // Predicated region
      $region41: #{resnet_generator_forward.7} parent=39 // pred_check
        %p880 = pneg %p86
      $region42: #{resnet_generator_forward.7} parent=39 // pred_check_branch
        %882 = sbr.rel (%p880) target = $region44
      $region43: #{resnet_generator_forward.7} parent=39 // pred_region
        %s883 = smul.u32 32, %s16
        %p884 = scmp.lt.s32.totalorder %s883, 63
        %s885 = scalar_select %p884, %s883, 63
        %s886 = smul.addr %s885, 4
        %s887 = scalar_lea.vmem %s2, %s886
      $region44: #{resnet_generator_forward.7} parent=39 // pred_fallthru
        _
      // Predicated region
      $region45: #{resnet_generator_forward.7} parent=39 // pred_check
        %p888 = pneg %p112
      $region46: #{resnet_generator_forward.7} parent=39 // pred_check_branch
        %890 = sbr.rel (%p888) target = $region48
      $region47: #{resnet_generator_forward.7} parent=39 // pred_region
        %p891 = scmp.lt.s32.totalorder %s16, 1
        %s892 = scalar_select %p891, %s16, 1
        %s893 = smul.addr %s892, 2
        %s894 = scalar_lea.vmem %s3, %s893
      $region48: #{resnet_generator_forward.7} parent=39 // pred_fallthru
        _
    $region40: #{resnet_generator_forward.7} parent=5 // pred_fallthru
      _
  $region6: #{resnet_generator_forward.7} parent=0 // loop_footer
    %s14 = sadd.s32 1, %s10
  $region7: #{resnet_generator_forward.7} parent=0 // loop_footer_branch
    %9 = sbr.rel target = $region3
  $region8: #{resnet_generator_forward.7} parent=0 // loop_exit
    _

// kernel: resnet_generator_forward.9
$region0: #{resnet_generator_forward.9}
  #allocation0 [shape = 'u32[]', space=smem, size = 0x4, offset = 0x4, fixed_abs, tag = 'smem constant byte address 0x4 - core index']
  #allocation1 [shape = 'u32[72,128]{1,0:T(1,128)}', space=vmem, size = 0x9000, scoped, tag = 'internal scratch']
  %s0 = inlined_call_operand.vmem [shape: bf16[512,128], index: 0, kind: input, shape index: {}]
  %s1 = inlined_call_operand.vmem [shape: bf16[128,128], index: 1, kind: input, shape index: {}]
  %s2 = inlined_call_operand.vmem [shape: bf16[512,128], index: 2, kind: output, shape index: {0}]
  %s3 = inlined_call_operand.vmem [shape: f32[2,2,128], index: 3, kind: output, shape index: {1}]
  %4 = xla_tuple %s2, %s3
  %s5 = sld [smem:[#allocation0]]
  $region49: #{resnet_generator_forward.9} parent=0
    _
  %s7 = ssub.s32 1, %s5
  %s8 = scalar_select 0, %s7, %s5
  loop: start=0, step=1, limit=4
  $region2: #{resnet_generator_forward.9} parent=0 // loop_pre_header
    _
  $region3: #{resnet_generator_forward.9} parent=0 // loop_header
    %s10 = sphi 0, %s14
    %p11 = scmp.ge.s32.totalorder %s10, 4
    %s20 = sphi 0, %s22
    %s23 = sphi 0, %s20
    %s24 = sphi 0, %s23
    %s40 = sphi 0, %s24
    %s44 = sphi 0, %s44
    %s46 = sphi 0, %s44
    %s47 = sphi 0, %s46
    %s61 = sphi 0, %s47
    %s67 = sphi 0, %s69
    %s70 = sphi 0, %s67
    %s71 = sphi 0, %s70
    %s87 = sphi 0, %s71
    %s93 = sphi 0, %s95
    %s96 = sphi 0, %s93
    %s97 = sphi 0, %s96
    %s113 = sphi 0, %s97
  $region4: #{resnet_generator_forward.9} parent=0 // loop_header_branch
    %13 = sbr.rel (%p11) target = $region8
  $region5: #{resnet_generator_forward.9} parent=0 // loop_body
    %s15 = ssub.s32 %s10, 1
    %s16 = ssub.s32 %s10, 2
    %s17 = sadd.s32 %s10, 1
    %s18 = ssub.s32 %s10, %s17
    %p19 = scmp.eq.s32.totalorder %s18, 0
    %s21 = sadd.s32 %s20, 1
    %s22 = scalar_select %p19, %s20, %s21
    %p25 = pneg %p19
    %p26 = scmp.eq.s32.totalorder %s10, 1
    %p27 = por %p25, %p26
    %p28 = scmp.ne.s32.totalorder %s20, %s23
    %p29 = scmp.eq.s32.totalorder %s10, 0
    %p30 = por %p28, %p29
    %p31 = scmp.ne.s32.totalorder %s20, %s23
    %p32 = scmp.eq.s32.totalorder %s15, 1
    %p33 = por %p31, %p32
    %p34 = scmp.ne.s32.totalorder %s23, %s24
    %p35 = scmp.eq.s32.totalorder %s15, 0
    %p36 = por %p34, %p35
    %p37 = scmp.ne.s32.totalorder %s23, %s24
    %p38 = scmp.eq.s32.totalorder %s16, 1
    %p39 = por %p37, %p38
    %p41 = scmp.ne.s32.totalorder %s24, %s40
    %p42 = scmp.eq.s32.totalorder %s16, 0
    %p43 = por %p41, %p42
    %s45 = sadd.s32 %s44, 1
    %p48 = scmp.eq.s32.totalorder %s10, 1
    %p49 = scmp.ne.s32.totalorder %s44, %s46
    %p50 = scmp.eq.s32.totalorder %s10, 0
    %p51 = por %p49, %p50
    %p52 = scmp.ne.s32.totalorder %s44, %s46
    %p53 = scmp.eq.s32.totalorder %s15, 1
    %p54 = por %p52, %p53
    %p55 = scmp.ne.s32.totalorder %s46, %s47
    %p56 = scmp.eq.s32.totalorder %s15, 0
    %p57 = por %p55, %p56
    %p58 = scmp.ne.s32.totalorder %s46, %s47
    %p59 = scmp.eq.s32.totalorder %s16, 1
    %p60 = por %p58, %p59
    %p62 = scmp.ne.s32.totalorder %s47, %s61
    %p63 = scmp.eq.s32.totalorder %s16, 0
    %p64 = por %p62, %p63
    %s65 = ssub.s32 %s10, %s17
    %p66 = scmp.eq.s32.totalorder %s65, 0
    %s68 = sadd.s32 %s67, 1
    %s69 = scalar_select %p66, %s67, %s68
    %p72 = pneg %p66
    %p73 = scmp.eq.s32.totalorder %s10, 1
    %p74 = por %p72, %p73
    %p75 = scmp.ne.s32.totalorder %s67, %s70
    %p76 = scmp.eq.s32.totalorder %s10, 0
    %p77 = por %p75, %p76
    %p78 = scmp.ne.s32.totalorder %s67, %s70
    %p79 = scmp.eq.s32.totalorder %s15, 1
    %p80 = por %p78, %p79
    %p81 = scmp.ne.s32.totalorder %s70, %s71
    %p82 = scmp.eq.s32.totalorder %s15, 0
    %p83 = por %p81, %p82
    %p84 = scmp.ne.s32.totalorder %s70, %s71
    %p85 = scmp.eq.s32.totalorder %s16, 1
    %p86 = por %p84, %p85
    %p88 = scmp.ne.s32.totalorder %s71, %s87
    %p89 = scmp.eq.s32.totalorder %s16, 0
    %p90 = por %p88, %p89
    %s91 = ssub.s32 %s10, %s17
    %p92 = scmp.eq.s32.totalorder %s91, 0
    %s94 = sadd.s32 %s93, 1
    %s95 = scalar_select %p92, %s93, %s94
    %p98 = pneg %p92
    %p99 = scmp.eq.s32.totalorder %s10, 1
    %p100 = por %p98, %p99
    %p101 = scmp.ne.s32.totalorder %s93, %s96
    %p102 = scmp.eq.s32.totalorder %s10, 0
    %p103 = por %p101, %p102
    %p104 = scmp.ne.s32.totalorder %s93, %s96
    %p105 = scmp.eq.s32.totalorder %s15, 1
    %p106 = por %p104, %p105
    %p107 = scmp.ne.s32.totalorder %s96, %s97
    %p108 = scmp.eq.s32.totalorder %s15, 0
    %p109 = por %p107, %p108
    %p110 = scmp.ne.s32.totalorder %s96, %s97
    %p111 = scmp.eq.s32.totalorder %s16, 1
    %p112 = por %p110, %p111
    %p114 = scmp.ne.s32.totalorder %s97, %s113
    %p115 = scmp.eq.s32.totalorder %s16, 0
    %p116 = por %p114, %p115
    %p117 = scmp.le.s32.totalorder 1, %s10
    %p118 = scmp.lt.s32.totalorder %s10, 3
    %p119 = pnand %p117, %p118
    %p120 = pneg %p119
    // Predicated region
    $region9: #{resnet_generator_forward.9} parent=5 // pred_check
      _
    $region10: #{resnet_generator_forward.9} parent=5 // pred_check_branch
      %122 = sbr.rel (%p119) target = $region12
    $region11: #{resnet_generator_forward.9} parent=5 // pred_region
      %s123 = ssub.s32 %s10, 1
      // Predicated region
      $region13: #{resnet_generator_forward.9} parent=11 // pred_check
        %p124 = pneg %p57
      $region14: #{resnet_generator_forward.9} parent=11 // pred_check_branch
        %126 = sbr.rel (%p124) target = $region16
      $region15: #{resnet_generator_forward.9} parent=11 // pred_region
        _
      $region16: #{resnet_generator_forward.9} parent=11 // pred_fallthru
        _
    $region12: #{resnet_generator_forward.9} parent=5 // pred_fallthru
      _
    %p127 = scmp.lt.s32.totalorder %s10, 2
    // Predicated region
    $region17: #{resnet_generator_forward.9} parent=5 // pred_check
      %p128 = pneg %p127
    $region18: #{resnet_generator_forward.9} parent=5 // pred_check_branch
      %130 = sbr.rel (%p128) target = $region20
    $region19: #{resnet_generator_forward.9} parent=5 // pred_region
      // Predicated region
      $region21: #{resnet_generator_forward.9} parent=19 // pred_check
        %p131 = pneg %p30
      $region22: #{resnet_generator_forward.9} parent=19 // pred_check_branch
        %133 = sbr.rel (%p131) target = $region24
      $region23: #{resnet_generator_forward.9} parent=19 // pred_region
        %s134 = smul.u32 32, %s10
        %p135 = scmp.lt.s32.totalorder %s134, 63
        %s136 = scalar_select %p135, %s134, 63
        %s137 = smul.addr %s136, 4
        %s138 = scalar_lea.vmem %s0, %s137
        %s139 = smul.u32 32, %s10
      $region24: #{resnet_generator_forward.9} parent=19 // pred_fallthru
        _
    $region20: #{resnet_generator_forward.9} parent=5 // pred_fallthru
      _
    %p140 = scmp.le.s32.totalorder 1, %s10
    %p141 = scmp.lt.s32.totalorder %s10, 3
    %p142 = pnand %p140, %p141
    %p143 = pneg %p142
    // Predicated region
    $region25: #{resnet_generator_forward.9} parent=5 // pred_check
      _
    $region26: #{resnet_generator_forward.9} parent=5 // pred_check_branch
      %145 = sbr.rel (%p142) target = $region28
    $region27: #{resnet_generator_forward.9} parent=5 // pred_region
      %s146 = ssub.s32 %s10, 1
      %s147 = smul.u32 32, %s15
      %p148 = scmp.lt.s32.totalorder %s147, 63
      %s149 = scalar_select %p148, %s147, 63
      %s150 = smul.addr %s149, 4
      %s151 = scalar_lea.vmem %s0, %s150
      %p152 = pneg %p36
      %p153 = pneg %p33
      %p154 = pneg %p57
      %p155 = pneg %p54
      %p156 = pneg %p83
      %p157 = pneg %p80
      %s158 = smul.u32 32, %s15
      %p159 = scmp.lt.s32.totalorder %s158, 63
      %s160 = scalar_select %p159, %s158, 63
      %s161 = smul.addr %s160, 4
      %s162 = scalar_lea.vmem %s2, %s161
      %p163 = pneg %p109
      %p164 = pneg %p106
      %p165 = scmp.lt.s32.totalorder %s15, 1
      %s166 = scalar_select %p165, %s15, 1
      %s167 = smul.addr %s166, 2
      %s168 = scalar_lea.vmem %s3, %s167
      %s169 = smul.u32 32, %s15
      %p170 = scmp.lt.s32.totalorder %s169, 63
      %s171 = scalar_select %p170, %s169, 63
      %s172 = smul.addr %s171, 4
      %s173 = scalar_lea.vmem %s0, %s172
      %s174 = smul.u32 32, %s15
      %s175 = smul.u32 32, %s15
      %p176 = scmp.lt.s32.totalorder %s175, 63
      %s177 = scalar_select %p176, %s175, 63
      %s178 = smul.addr %s177, 4
      %s179 = scalar_lea.vmem %s2, %s178
      %s180 = smul.u32 32, %s15
      %p181 = scmp.lt.s32.totalorder %s15, 1
      %s182 = scalar_select %p181, %s15, 1
      %s183 = smul.addr %s182, 2
      %s184 = scalar_lea.vmem %s3, %s183
      %v185 = vld [vmem:[%s173] sm:$0xf]
      %v186 = vld [vmem:[%s173 + $0x4] sm:$0xf]
      %v187 = vld [vmem:[%s173 + $0x8] sm:$0xf]
      %v188 = vld [vmem:[%s173 + $0xc] sm:$0xf]
      %v189 = vld [vmem:[%s173 + $0x10] sm:$0xf]
      %v190 = vld [vmem:[%s173 + $0x14] sm:$0xf]
      %v191 = vld [vmem:[%s173 + $0x18] sm:$0xf]
      %v192 = vld [vmem:[%s173 + $0x1c] sm:$0xf]
      %v193 = vld [vmem:[%s173 + $0x20] sm:$0xf]
      %v194 = vld [vmem:[%s173 + $0x24] sm:$0xf]
      %v195 = vld [vmem:[%s173 + $0x28] sm:$0xf]
      %v196 = vld [vmem:[%s173 + $0x2c] sm:$0xf]
      %v197 = vld [vmem:[%s173 + $0x30] sm:$0xf]
      %v198 = vld [vmem:[%s173 + $0x34] sm:$0xf]
      %v199 = vld [vmem:[%s173 + $0x38] sm:$0xf]
      %v200 = vld [vmem:[%s173 + $0x3c] sm:$0xf]
      %v201 = vld [vmem:[%s173 + $0x40] sm:$0xf]
      %v202 = vld [vmem:[%s173 + $0x44] sm:$0xf]
      %v203 = vld [vmem:[%s173 + $0x48] sm:$0xf]
      %v204 = vld [vmem:[%s173 + $0x4c] sm:$0xf]
      %v205 = vld [vmem:[%s173 + $0x50] sm:$0xf]
      %v206 = vld [vmem:[%s173 + $0x54] sm:$0xf]
      %v207 = vld [vmem:[%s173 + $0x58] sm:$0xf]
      %v208 = vld [vmem:[%s173 + $0x5c] sm:$0xf]
      %v209 = vld [vmem:[%s173 + $0x60] sm:$0xf]
      %v210 = vld [vmem:[%s173 + $0x64] sm:$0xf]
      %v211 = vld [vmem:[%s173 + $0x68] sm:$0xf]
      %v212 = vld [vmem:[%s173 + $0x6c] sm:$0xf]
      %v213 = vld [vmem:[%s173 + $0x70] sm:$0xf]
      %v214 = vld [vmem:[%s173 + $0x74] sm:$0xf]
      %v215 = vld [vmem:[%s173 + $0x78] sm:$0xf]
      %v216 = vld [vmem:[%s173 + $0x7c] sm:$0xf]
      %v217 = vld [vmem:[%s1] sm:$0xf]
      %v218 = vld [vmem:[%s1 + $0x4] sm:$0xf]
      %v219 = vld [vmem:[%s1 + $0x8] sm:$0xf]
      %v220 = vld [vmem:[%s1 + $0xc] sm:$0xf]
      %v221 = vld [vmem:[%s1 + $0x10] sm:$0xf]
      %v222 = vld [vmem:[%s1 + $0x14] sm:$0xf]
      %v223 = vld [vmem:[%s1 + $0x18] sm:$0xf]
      %v224 = vld [vmem:[%s1 + $0x1c] sm:$0xf]
      %v225 = vld [vmem:[%s1 + $0x20] sm:$0xf]
      %v226 = vld [vmem:[%s1 + $0x24] sm:$0xf]
      %v227 = vld [vmem:[%s1 + $0x28] sm:$0xf]
      %v228 = vld [vmem:[%s1 + $0x2c] sm:$0xf]
      %v229 = vld [vmem:[%s1 + $0x30] sm:$0xf]
      %v230 = vld [vmem:[%s1 + $0x34] sm:$0xf]
      %v231 = vld [vmem:[%s1 + $0x38] sm:$0xf]
      %v232 = vld [vmem:[%s1 + $0x3c] sm:$0xf]
      %v265 = vunpack.c.l.b16 %v185
      %v266 = vunpack.c.l.b16 %v186
      %v267 = vunpack.c.l.b16 %v187
      %v268 = vunpack.c.l.b16 %v188
      %v269 = vunpack.c.l.b16 %v189
      %v270 = vunpack.c.l.b16 %v190
      %v271 = vunpack.c.l.b16 %v191
      %v272 = vunpack.c.l.b16 %v192
      %v273 = vunpack.c.l.b16 %v193
      %v274 = vunpack.c.l.b16 %v194
      %v275 = vunpack.c.l.b16 %v195
      %v276 = vunpack.c.l.b16 %v196
      %v277 = vunpack.c.l.b16 %v197
      %v278 = vunpack.c.l.b16 %v198
      %v279 = vunpack.c.l.b16 %v199
      %v280 = vunpack.c.l.b16 %v200
      %v281 = vunpack.c.l.b16 %v201
      %v282 = vunpack.c.l.b16 %v202
      %v283 = vunpack.c.l.b16 %v203
      %v284 = vunpack.c.l.b16 %v204
      %v285 = vunpack.c.l.b16 %v205
      %v286 = vunpack.c.l.b16 %v206
      %v287 = vunpack.c.l.b16 %v207
      %v288 = vunpack.c.l.b16 %v208
      %v289 = vunpack.c.l.b16 %v209
      %v290 = vunpack.c.l.b16 %v210
      %v291 = vunpack.c.l.b16 %v211
      %v292 = vunpack.c.l.b16 %v212
      %v293 = vunpack.c.l.b16 %v213
      %v294 = vunpack.c.l.b16 %v214
      %v295 = vunpack.c.l.b16 %v215
      %v296 = vunpack.c.l.b16 %v216
      %v297 = vpack.c.b16 %v266, %v265
      %v298 = vpack.c.b16 %v268, %v267
      %v299 = vpack.c.b16 %v270, %v269
      %v300 = vpack.c.b16 %v272, %v271
      %v301 = vpack.c.b16 %v274, %v273
      %v302 = vpack.c.b16 %v276, %v275
      %v303 = vpack.c.b16 %v278, %v277
      %v304 = vpack.c.b16 %v280, %v279
      %v305 = vpack.c.b16 %v282, %v281
      %v306 = vpack.c.b16 %v284, %v283
      %v307 = vpack.c.b16 %v286, %v285
      %v308 = vpack.c.b16 %v288, %v287
      %v309 = vpack.c.b16 %v290, %v289
      %v310 = vpack.c.b16 %v292, %v291
      %v311 = vpack.c.b16 %v294, %v293
      %v312 = vpack.c.b16 %v296, %v295
      %v345 = vunpack.c.l.b16 %v217
      %v346 = vunpack.c.l.b16 %v218
      %v347 = vunpack.c.l.b16 %v219
      %v348 = vunpack.c.l.b16 %v220
      %v349 = vunpack.c.l.b16 %v221
      %v350 = vunpack.c.l.b16 %v222
      %v351 = vunpack.c.l.b16 %v223
      %v352 = vunpack.c.l.b16 %v224
      %v353 = vunpack.c.l.b16 %v225
      %v354 = vunpack.c.l.b16 %v226
      %v355 = vunpack.c.l.b16 %v227
      %v356 = vunpack.c.l.b16 %v228
      %v357 = vunpack.c.l.b16 %v229
      %v358 = vunpack.c.l.b16 %v230
      %v359 = vunpack.c.l.b16 %v231
      %v360 = vunpack.c.l.b16 %v232
      %v361 = vpack.c.b16 %v346, %v345
      %v362 = vpack.c.b16 %v348, %v347
      %v363 = vpack.c.b16 %v350, %v349
      %v364 = vpack.c.b16 %v352, %v351
      %v365 = vpack.c.b16 %v354, %v353
      %v366 = vpack.c.b16 %v356, %v355
      %v367 = vpack.c.b16 %v358, %v357
      %v368 = vpack.c.b16 %v360, %v359
      %377 = vmatpush.bf16.msra.mxu0 %v368
      %378 = vmatpush.bf16.msra.mxu0 %v367
      %379 = vmatpush.bf16.msra.mxu0 %v366
      %380 = vmatpush.bf16.msra.mxu0 %v365
      %381 = vmatpush.bf16.msra.mxu0 %v364
      %382 = vmatpush.bf16.msra.mxu0 %v363
      %383 = vmatpush.bf16.msra.mxu0 %v362
      %384 = vmatpush.bf16.msra.mxu0 %v361
      %385 = vmatmul.bf16.gmra.mxu0 %v297
      %v386 = vpop.f32.mrf.mxu0
      %v387 = vadd.f32 0.0, %v386
      %v388 = vpop.f32.mrf.mxu0
      %v389 = vadd.f32 0.0, %v388
      %390 = vmatmul.bf16.gmra.mxu0 %v298
      %v391 = vpop.f32.mrf.mxu0
      %v392 = vadd.f32 0.0, %v391
      %v393 = vpop.f32.mrf.mxu0
      %v394 = vadd.f32 0.0, %v393
      %395 = vmatmul.bf16.gmra.mxu0 %v299
      %v396 = vpop.f32.mrf.mxu0
      %v397 = vadd.f32 0.0, %v396
      %v398 = vpop.f32.mrf.mxu0
      %v399 = vadd.f32 0.0, %v398
      %400 = vmatmul.bf16.gmra.mxu0 %v300
      %v401 = vpop.f32.mrf.mxu0
      %v402 = vadd.f32 0.0, %v401
      %v403 = vpop.f32.mrf.mxu0
      %v404 = vadd.f32 0.0, %v403
      %405 = vmatmul.bf16.gmra.mxu0 %v301
      %v406 = vpop.f32.mrf.mxu0
      %v407 = vadd.f32 0.0, %v406
      %v408 = vpop.f32.mrf.mxu0
      %v409 = vadd.f32 0.0, %v408
      %410 = vmatmul.bf16.gmra.mxu0 %v302
      %v411 = vpop.f32.mrf.mxu0
      %v412 = vadd.f32 0.0, %v411
      %v413 = vpop.f32.mrf.mxu0
      %v414 = vadd.f32 0.0, %v413
      %415 = vmatmul.bf16.gmra.mxu0 %v303
      %v416 = vpop.f32.mrf.mxu0
      %v417 = vadd.f32 0.0, %v416
      %v418 = vpop.f32.mrf.mxu0
      %v419 = vadd.f32 0.0, %v418
      %420 = vmatmul.bf16.gmra.mxu0 %v304
      %v421 = vpop.f32.mrf.mxu0
      %v422 = vadd.f32 0.0, %v421
      %v423 = vpop.f32.mrf.mxu0
      %v424 = vadd.f32 0.0, %v423
      %425 = vmatmul.bf16.gmra.mxu0 %v305
      %v426 = vpop.f32.mrf.mxu0
      %v427 = vadd.f32 0.0, %v426
      %v428 = vpop.f32.mrf.mxu0
      %v429 = vadd.f32 0.0, %v428
      %430 = vmatmul.bf16.gmra.mxu0 %v306
      %v431 = vpop.f32.mrf.mxu0
      %v432 = vadd.f32 0.0, %v431
      %v433 = vpop.f32.mrf.mxu0
      %v434 = vadd.f32 0.0, %v433
      %435 = vmatmul.bf16.gmra.mxu0 %v307
      %v436 = vpop.f32.mrf.mxu0
      %v437 = vadd.f32 0.0, %v436
      %v438 = vpop.f32.mrf.mxu0
      %v439 = vadd.f32 0.0, %v438
      %440 = vmatmul.bf16.gmra.mxu0 %v308
      %v441 = vpop.f32.mrf.mxu0
      %v442 = vadd.f32 0.0, %v441
      %v443 = vpop.f32.mrf.mxu0
      %v444 = vadd.f32 0.0, %v443
      %445 = vmatmul.bf16.gmra.mxu0 %v309
      %v446 = vpop.f32.mrf.mxu0
      %v447 = vadd.f32 0.0, %v446
      %v448 = vpop.f32.mrf.mxu0
      %v449 = vadd.f32 0.0, %v448
      %450 = vmatmul.bf16.gmra.mxu0 %v310
      %v451 = vpop.f32.mrf.mxu0
      %v452 = vadd.f32 0.0, %v451
      %v453 = vpop.f32.mrf.mxu0
      %v454 = vadd.f32 0.0, %v453
      %455 = vmatmul.bf16.gmra.mxu0 %v311
      %v456 = vpop.f32.mrf.mxu0
      %v457 = vadd.f32 0.0, %v456
      %v458 = vpop.f32.mrf.mxu0
      %v459 = vadd.f32 0.0, %v458
      %460 = vmatmul.bf16.gmra.mxu0 %v312
      %v461 = vpop.f32.mrf.mxu0
      %v462 = vadd.f32 0.0, %v461
      %v463 = vpop.f32.mrf.mxu0
      %v464 = vadd.f32 0.0, %v463
      %465 = vdwg.mxu0
      %v466 = vpack.c.bf16 %v387, %v387
      %v467 = vpack.c.bf16 %v389, %v389
      %v468 = vpack.c.bf16 %v392, %v392
      %v469 = vpack.c.bf16 %v394, %v394
      %v470 = vpack.c.bf16 %v397, %v397
      %v471 = vpack.c.bf16 %v399, %v399
      %v472 = vpack.c.bf16 %v402, %v402
      %v473 = vpack.c.bf16 %v404, %v404
      %v474 = vpack.c.bf16 %v407, %v407
      %v475 = vpack.c.bf16 %v409, %v409
      %v476 = vpack.c.bf16 %v412, %v412
      %v477 = vpack.c.bf16 %v414, %v414
      %v478 = vpack.c.bf16 %v417, %v417
      %v479 = vpack.c.bf16 %v419, %v419
      %v480 = vpack.c.bf16 %v422, %v422
      %v481 = vpack.c.bf16 %v424, %v424
      %v482 = vpack.c.bf16 %v427, %v427
      %v483 = vpack.c.bf16 %v429, %v429
      %v484 = vpack.c.bf16 %v432, %v432
      %v485 = vpack.c.bf16 %v434, %v434
      %v486 = vpack.c.bf16 %v437, %v437
      %v487 = vpack.c.bf16 %v439, %v439
      %v488 = vpack.c.bf16 %v442, %v442
      %v489 = vpack.c.bf16 %v444, %v444
      %v490 = vpack.c.bf16 %v447, %v447
      %v491 = vpack.c.bf16 %v449, %v449
      %v492 = vpack.c.bf16 %v452, %v452
      %v493 = vpack.c.bf16 %v454, %v454
      %v494 = vpack.c.bf16 %v457, %v457
      %v495 = vpack.c.bf16 %v459, %v459
      %v496 = vpack.c.bf16 %v462, %v462
      %v497 = vpack.c.bf16 %v464, %v464
      %498 = vst [vmem:[%s179] sm:$0xf] %v466
      %499 = vst [vmem:[%s179 + $0x4] sm:$0xf] %v467
      %500 = vst [vmem:[%s179 + $0x8] sm:$0xf] %v468
      %501 = vst [vmem:[%s179 + $0xc] sm:$0xf] %v469
      %502 = vst [vmem:[%s179 + $0x10] sm:$0xf] %v470
      %503 = vst [vmem:[%s179 + $0x14] sm:$0xf] %v471
      %504 = vst [vmem:[%s179 + $0x18] sm:$0xf] %v472
      %505 = vst [vmem:[%s179 + $0x1c] sm:$0xf] %v473
      %506 = vst [vmem:[%s179 + $0x20] sm:$0xf] %v474
      %507 = vst [vmem:[%s179 + $0x24] sm:$0xf] %v475
      %508 = vst [vmem:[%s179 + $0x28] sm:$0xf] %v476
      %509 = vst [vmem:[%s179 + $0x2c] sm:$0xf] %v477
      %510 = vst [vmem:[%s179 + $0x30] sm:$0xf] %v478
      %511 = vst [vmem:[%s179 + $0x34] sm:$0xf] %v479
      %512 = vst [vmem:[%s179 + $0x38] sm:$0xf] %v480
      %513 = vst [vmem:[%s179 + $0x3c] sm:$0xf] %v481
      %514 = vst [vmem:[%s179 + $0x40] sm:$0xf] %v482
      %515 = vst [vmem:[%s179 + $0x44] sm:$0xf] %v483
      %516 = vst [vmem:[%s179 + $0x48] sm:$0xf] %v484
      %517 = vst [vmem:[%s179 + $0x4c] sm:$0xf] %v485
      %518 = vst [vmem:[%s179 + $0x50] sm:$0xf] %v486
      %519 = vst [vmem:[%s179 + $0x54] sm:$0xf] %v487
      %520 = vst [vmem:[%s179 + $0x58] sm:$0xf] %v488
      %521 = vst [vmem:[%s179 + $0x5c] sm:$0xf] %v489
      %522 = vst [vmem:[%s179 + $0x60] sm:$0xf] %v490
      %523 = vst [vmem:[%s179 + $0x64] sm:$0xf] %v491
      %524 = vst [vmem:[%s179 + $0x68] sm:$0xf] %v492
      %525 = vst [vmem:[%s179 + $0x6c] sm:$0xf] %v493
      %526 = vst [vmem:[%s179 + $0x70] sm:$0xf] %v494
      %527 = vst [vmem:[%s179 + $0x74] sm:$0xf] %v495
      %528 = vst [vmem:[%s179 + $0x78] sm:$0xf] %v496
      %529 = vst [vmem:[%s179 + $0x7c] sm:$0xf] %v497
      %v530 = vadd.f32 %v387, %v389
      %v531 = vadd.f32 %v530, %v392
      %v532 = vadd.f32 %v531, %v394
      %v533 = vadd.f32 %v532, %v397
      %v534 = vadd.f32 %v533, %v399
      %v535 = vadd.f32 %v534, %v402
      %v536 = vadd.f32 %v535, %v404
      %v537 = vadd.f32 %v536, %v407
      %v538 = vadd.f32 %v537, %v409
      %v539 = vadd.f32 %v538, %v412
      %v540 = vadd.f32 %v539, %v414
      %v541 = vadd.f32 %v540, %v417
      %v542 = vadd.f32 %v541, %v419
      %v543 = vadd.f32 %v542, %v422
      %v544 = vadd.f32 %v543, %v424
      %v545 = vadd.f32 %v544, %v427
      %v546 = vadd.f32 %v545, %v429
      %v547 = vadd.f32 %v546, %v432
      %v548 = vadd.f32 %v547, %v434
      %v549 = vadd.f32 %v548, %v437
      %v550 = vadd.f32 %v549, %v439
      %v551 = vadd.f32 %v550, %v442
      %v552 = vadd.f32 %v551, %v444
      %v553 = vadd.f32 %v552, %v447
      %v554 = vadd.f32 %v553, %v449
      %v555 = vadd.f32 %v554, %v452
      %v556 = vadd.f32 %v555, %v454
      %v557 = vadd.f32 %v556, %v457
      %v558 = vadd.f32 %v557, %v459
      %v559 = vadd.f32 %v558, %v462
      %v560 = vadd.f32 %v559, %v464
      %v561 = vrot.slane %v560, 4
      %v562 = vadd.f32 %v560, %v561
      %v563 = vrot.slane %v562, 2
      %v564 = vadd.f32 %v562, %v563
      %v565 = vrot.slane %v564, 1
      %v566 = vadd.f32 %v564, %v565
      %v567 = vmul.f32 %v387, %v387
      %v568 = vmul.f32 %v389, %v389
      %v569 = vmul.f32 %v392, %v392
      %v570 = vmul.f32 %v394, %v394
      %v571 = vmul.f32 %v397, %v397
      %v572 = vmul.f32 %v399, %v399
      %v573 = vmul.f32 %v402, %v402
      %v574 = vmul.f32 %v404, %v404
      %v575 = vmul.f32 %v407, %v407
      %v576 = vmul.f32 %v409, %v409
      %v577 = vmul.f32 %v412, %v412
      %v578 = vmul.f32 %v414, %v414
      %v579 = vmul.f32 %v417, %v417
      %v580 = vmul.f32 %v419, %v419
      %v581 = vmul.f32 %v422, %v422
      %v582 = vmul.f32 %v424, %v424
      %v583 = vmul.f32 %v427, %v427
      %v584 = vmul.f32 %v429, %v429
      %v585 = vmul.f32 %v432, %v432
      %v586 = vmul.f32 %v434, %v434
      %v587 = vmul.f32 %v437, %v437
      %v588 = vmul.f32 %v439, %v439
      %v589 = vmul.f32 %v442, %v442
      %v590 = vmul.f32 %v444, %v444
      %v591 = vmul.f32 %v447, %v447
      %v592 = vmul.f32 %v449, %v449
      %v593 = vmul.f32 %v452, %v452
      %v594 = vmul.f32 %v454, %v454
      %v595 = vmul.f32 %v457, %v457
      %v596 = vmul.f32 %v459, %v459
      %v597 = vmul.f32 %v462, %v462
      %v598 = vmul.f32 %v464, %v464
      %v599 = vadd.f32 %v567, %v568
      %v600 = vadd.f32 %v599, %v569
      %v601 = vadd.f32 %v600, %v570
      %v602 = vadd.f32 %v601, %v571
      %v603 = vadd.f32 %v602, %v572
      %v604 = vadd.f32 %v603, %v573
      %v605 = vadd.f32 %v604, %v574
      %v606 = vadd.f32 %v605, %v575
      %v607 = vadd.f32 %v606, %v576
      %v608 = vadd.f32 %v607, %v577
      %v609 = vadd.f32 %v608, %v578
      %v610 = vadd.f32 %v609, %v579
      %v611 = vadd.f32 %v610, %v580
      %v612 = vadd.f32 %v611, %v581
      %v613 = vadd.f32 %v612, %v582
      %v614 = vadd.f32 %v613, %v583
      %v615 = vadd.f32 %v614, %v584
      %v616 = vadd.f32 %v615, %v585
      %v617 = vadd.f32 %v616, %v586
      %v618 = vadd.f32 %v617, %v587
      %v619 = vadd.f32 %v618, %v588
      %v620 = vadd.f32 %v619, %v589
      %v621 = vadd.f32 %v620, %v590
      %v622 = vadd.f32 %v621, %v591
      %v623 = vadd.f32 %v622, %v592
      %v624 = vadd.f32 %v623, %v593
      %v625 = vadd.f32 %v624, %v594
      %v626 = vadd.f32 %v625, %v595
      %v627 = vadd.f32 %v626, %v596
      %v628 = vadd.f32 %v627, %v597
      %v629 = vadd.f32 %v628, %v598
      %v630 = vrot.slane %v629, 4
      %v631 = vadd.f32 %v629, %v630
      %v632 = vrot.slane %v631, 2
      %v633 = vadd.f32 %v631, %v632
      %v634 = vrot.slane %v633, 1
      %v635 = vadd.f32 %v633, %v634
      %vm636 = vcmask 1040384
      %v637 = vsel %vm636, %v566, %v635
      %638 = vst [vmem:[%s184] sm:$0x3] %v637
      %s639 = smul.u32 32, %s15
      %p640 = scmp.lt.s32.totalorder %s639, 63
      %s641 = scalar_select %p640, %s639, 63
      %s642 = smul.addr %s641, 4
      %s643 = scalar_lea.vmem %s2, %s642
      %p644 = scmp.lt.s32.totalorder %s15, 1
      %s645 = scalar_select %p644, %s15, 1
      %s646 = smul.addr %s645, 2
      %s647 = scalar_lea.vmem %s3, %s646
      // Predicated region
      $region29: #{resnet_generator_forward.9} parent=27 // pred_check
        %p648 = pneg %p80
      $region30: #{resnet_generator_forward.9} parent=27 // pred_check_branch
        %650 = sbr.rel (%p648) target = $region32
      $region31: #{resnet_generator_forward.9} parent=27 // pred_region
        %s651 = smul.u32 32, %s15
      $region32: #{resnet_generator_forward.9} parent=27 // pred_fallthru
        _
      // Predicated region
      $region33: #{resnet_generator_forward.9} parent=27 // pred_check
        %p652 = pneg %p106
      $region34: #{resnet_generator_forward.9} parent=27 // pred_check_branch
        %654 = sbr.rel (%p652) target = $region36
      $region35: #{resnet_generator_forward.9} parent=27 // pred_region
        _
      $region36: #{resnet_generator_forward.9} parent=27 // pred_fallthru
        _
    $region28: #{resnet_generator_forward.9} parent=5 // pred_fallthru
      _
    %p655 = scmp.le.s32.totalorder 2, %s10
    // Predicated region
    $region37: #{resnet_generator_forward.9} parent=5 // pred_check
      %p656 = pneg %p655
    $region38: #{resnet_generator_forward.9} parent=5 // pred_check_branch
      %658 = sbr.rel (%p656) target = $region40
    $region39: #{resnet_generator_forward.9} parent=5 // pred_region
      %s659 = ssub.s32 %s10, 2
      // Predicated region
      $region41: #{resnet_generator_forward.9} parent=39 // pred_check
        %p660 = pneg %p86
      $region42: #{resnet_generator_forward.9} parent=39 // pred_check_branch
        %662 = sbr.rel (%p660) target = $region44
      $region43: #{resnet_generator_forward.9} parent=39 // pred_region
        %s663 = smul.u32 32, %s16
        %p664 = scmp.lt.s32.totalorder %s663, 63
        %s665 = scalar_select %p664, %s663, 63
        %s666 = smul.addr %s665, 4
        %s667 = scalar_lea.vmem %s2, %s666
      $region44: #{resnet_generator_forward.9} parent=39 // pred_fallthru
        _
      // Predicated region
      $region45: #{resnet_generator_forward.9} parent=39 // pred_check
        %p668 = pneg %p112
      $region46: #{resnet_generator_forward.9} parent=39 // pred_check_branch
        %670 = sbr.rel (%p668) target = $region48
      $region47: #{resnet_generator_forward.9} parent=39 // pred_region
        %p671 = scmp.lt.s32.totalorder %s16, 1
        %s672 = scalar_select %p671, %s16, 1
        %s673 = smul.addr %s672, 2
        %s674 = scalar_lea.vmem %s3, %s673
      $region48: #{resnet_generator_forward.9} parent=39 // pred_fallthru
        _
    $region40: #{resnet_generator_forward.9} parent=5 // pred_fallthru
      _
  $region6: #{resnet_generator_forward.9} parent=0 // loop_footer
    %s14 = sadd.s32 1, %s10
  $region7: #{resnet_generator_forward.9} parent=0 // loop_footer_branch
    %9 = sbr.rel target = $region3
  $region8: #{resnet_generator_forward.9} parent=0 // loop_exit
    _

// kernel: resnet_generator_forward.12
$region0: #{resnet_generator_forward.12}
  #allocation0 [shape = 'u32[]', space=smem, size = 0x4, offset = 0x4, fixed_abs, tag = 'smem constant byte address 0x4 - core index']
  #allocation1 [shape = 'u32[72,128]{1,0:T(1,128)}', space=vmem, size = 0x9000, scoped, tag = 'internal scratch']
  %s0 = inlined_call_operand.vmem [shape: bf16[512,128], index: 0, kind: input, shape index: {}]
  %s1 = inlined_call_operand.vmem [shape: f32[1,128], index: 1, kind: input, shape index: {}]
  %s2 = inlined_call_operand.vmem [shape: f32[1,128], index: 2, kind: input, shape index: {}]
  %s3 = inlined_call_operand.vmem [shape: bf16[512,128], index: 3, kind: input, shape index: {}]
  %s4 = inlined_call_operand.vmem [shape: bf16[512,128], index: 4, kind: output, shape index: {}]
  %s5 = sld [smem:[#allocation0]]
  $region49: #{resnet_generator_forward.12} parent=0
    _
  %s7 = ssub.s32 1, %s5
  %s8 = scalar_select 0, %s7, %s5
  loop: start=0, step=1, limit=4
  $region2: #{resnet_generator_forward.12} parent=0 // loop_pre_header
    _
  $region3: #{resnet_generator_forward.12} parent=0 // loop_header
    %s10 = sphi 0, %s14
    %p11 = scmp.ge.s32.totalorder %s10, 4
    %s20 = sphi 0, %s22
    %s23 = sphi 0, %s20
    %s24 = sphi 0, %s23
    %s40 = sphi 0, %s24
    %s44 = sphi 0, %s44
    %s46 = sphi 0, %s44
    %s47 = sphi 0, %s46
    %s61 = sphi 0, %s47
    %s65 = sphi 0, %s65
    %s67 = sphi 0, %s65
    %s68 = sphi 0, %s67
    %s82 = sphi 0, %s68
    %s88 = sphi 0, %s90
    %s91 = sphi 0, %s88
    %s92 = sphi 0, %s91
    %s108 = sphi 0, %s92
    %s114 = sphi 0, %s116
    %s117 = sphi 0, %s114
    %s118 = sphi 0, %s117
    %s134 = sphi 0, %s118
  $region4: #{resnet_generator_forward.12} parent=0 // loop_header_branch
    %13 = sbr.rel (%p11) target = $region8
  $region5: #{resnet_generator_forward.12} parent=0 // loop_body
    %s15 = ssub.s32 %s10, 1
    %s16 = ssub.s32 %s10, 2
    %s17 = sadd.s32 %s10, 1
    %s18 = ssub.s32 %s10, %s17
    %p19 = scmp.eq.s32.totalorder %s18, 0
    %s21 = sadd.s32 %s20, 1
    %s22 = scalar_select %p19, %s20, %s21
    %p25 = pneg %p19
    %p26 = scmp.eq.s32.totalorder %s10, 1
    %p27 = por %p25, %p26
    %p28 = scmp.ne.s32.totalorder %s20, %s23
    %p29 = scmp.eq.s32.totalorder %s10, 0
    %p30 = por %p28, %p29
    %p31 = scmp.ne.s32.totalorder %s20, %s23
    %p32 = scmp.eq.s32.totalorder %s15, 1
    %p33 = por %p31, %p32
    %p34 = scmp.ne.s32.totalorder %s23, %s24
    %p35 = scmp.eq.s32.totalorder %s15, 0
    %p36 = por %p34, %p35
    %p37 = scmp.ne.s32.totalorder %s23, %s24
    %p38 = scmp.eq.s32.totalorder %s16, 1
    %p39 = por %p37, %p38
    %p41 = scmp.ne.s32.totalorder %s24, %s40
    %p42 = scmp.eq.s32.totalorder %s16, 0
    %p43 = por %p41, %p42
    %s45 = sadd.s32 %s44, 1
    %p48 = scmp.eq.s32.totalorder %s10, 1
    %p49 = scmp.ne.s32.totalorder %s44, %s46
    %p50 = scmp.eq.s32.totalorder %s10, 0
    %p51 = por %p49, %p50
    %p52 = scmp.ne.s32.totalorder %s44, %s46
    %p53 = scmp.eq.s32.totalorder %s15, 1
    %p54 = por %p52, %p53
    %p55 = scmp.ne.s32.totalorder %s46, %s47
    %p56 = scmp.eq.s32.totalorder %s15, 0
    %p57 = por %p55, %p56
    %p58 = scmp.ne.s32.totalorder %s46, %s47
    %p59 = scmp.eq.s32.totalorder %s16, 1
    %p60 = por %p58, %p59
    %p62 = scmp.ne.s32.totalorder %s47, %s61
    %p63 = scmp.eq.s32.totalorder %s16, 0
    %p64 = por %p62, %p63
    %s66 = sadd.s32 %s65, 1
    %p69 = scmp.eq.s32.totalorder %s10, 1
    %p70 = scmp.ne.s32.totalorder %s65, %s67
    %p71 = scmp.eq.s32.totalorder %s10, 0
    %p72 = por %p70, %p71
    %p73 = scmp.ne.s32.totalorder %s65, %s67
    %p74 = scmp.eq.s32.totalorder %s15, 1
    %p75 = por %p73, %p74
    %p76 = scmp.ne.s32.totalorder %s67, %s68
    %p77 = scmp.eq.s32.totalorder %s15, 0
    %p78 = por %p76, %p77
    %p79 = scmp.ne.s32.totalorder %s67, %s68
    %p80 = scmp.eq.s32.totalorder %s16, 1
    %p81 = por %p79, %p80
    %p83 = scmp.ne.s32.totalorder %s68, %s82
    %p84 = scmp.eq.s32.totalorder %s16, 0
    %p85 = por %p83, %p84
    %s86 = ssub.s32 %s10, %s17
    %p87 = scmp.eq.s32.totalorder %s86, 0
    %s89 = sadd.s32 %s88, 1
    %s90 = scalar_select %p87, %s88, %s89
    %p93 = pneg %p87
    %p94 = scmp.eq.s32.totalorder %s10, 1
    %p95 = por %p93, %p94
    %p96 = scmp.ne.s32.totalorder %s88, %s91
    %p97 = scmp.eq.s32.totalorder %s10, 0
    %p98 = por %p96, %p97
    %p99 = scmp.ne.s32.totalorder %s88, %s91
    %p100 = scmp.eq.s32.totalorder %s15, 1
    %p101 = por %p99, %p100
    %p102 = scmp.ne.s32.totalorder %s91, %s92
    %p103 = scmp.eq.s32.totalorder %s15, 0
    %p104 = por %p102, %p103
    %p105 = scmp.ne.s32.totalorder %s91, %s92
    %p106 = scmp.eq.s32.totalorder %s16, 1
    %p107 = por %p105, %p106
    %p109 = scmp.ne.s32.totalorder %s92, %s108
    %p110 = scmp.eq.s32.totalorder %s16, 0
    %p111 = por %p109, %p110
    %s112 = ssub.s32 %s10, %s17
    %p113 = scmp.eq.s32.totalorder %s112, 0
    %s115 = sadd.s32 %s114, 1
    %s116 = scalar_select %p113, %s114, %s115
    %p119 = pneg %p113
    %p120 = scmp.eq.s32.totalorder %s10, 1
    %p121 = por %p119, %p120
    %p122 = scmp.ne.s32.totalorder %s114, %s117
    %p123 = scmp.eq.s32.totalorder %s10, 0
    %p124 = por %p122, %p123
    %p125 = scmp.ne.s32.totalorder %s114, %s117
    %p126 = scmp.eq.s32.totalorder %s15, 1
    %p127 = por %p125, %p126
    %p128 = scmp.ne.s32.totalorder %s117, %s118
    %p129 = scmp.eq.s32.totalorder %s15, 0
    %p130 = por %p128, %p129
    %p131 = scmp.ne.s32.totalorder %s117, %s118
    %p132 = scmp.eq.s32.totalorder %s16, 1
    %p133 = por %p131, %p132
    %p135 = scmp.ne.s32.totalorder %s118, %s134
    %p136 = scmp.eq.s32.totalorder %s16, 0
    %p137 = por %p135, %p136
    %p138 = scmp.le.s32.totalorder 1, %s10
    %p139 = scmp.lt.s32.totalorder %s10, 3
    %p140 = pnand %p138, %p139
    %p141 = pneg %p140
    // Predicated region
    $region9: #{resnet_generator_forward.12} parent=5 // pred_check
      _
    $region10: #{resnet_generator_forward.12} parent=5 // pred_check_branch
      %143 = sbr.rel (%p140) target = $region12
    $region11: #{resnet_generator_forward.12} parent=5 // pred_region
      %s144 = ssub.s32 %s10, 1
      // Predicated region
      $region13: #{resnet_generator_forward.12} parent=11 // pred_check
        %p145 = pneg %p57
      $region14: #{resnet_generator_forward.12} parent=11 // pred_check_branch
        %147 = sbr.rel (%p145) target = $region16
      $region15: #{resnet_generator_forward.12} parent=11 // pred_region
        _
      $region16: #{resnet_generator_forward.12} parent=11 // pred_fallthru
        _
      // Predicated region
      $region17: #{resnet_generator_forward.12} parent=11 // pred_check
        %p148 = pneg %p78
      $region18: #{resnet_generator_forward.12} parent=11 // pred_check_branch
        %150 = sbr.rel (%p148) target = $region20
      $region19: #{resnet_generator_forward.12} parent=11 // pred_region
        _
      $region20: #{resnet_generator_forward.12} parent=11 // pred_fallthru
        _
    $region12: #{resnet_generator_forward.12} parent=5 // pred_fallthru
      _
    %p151 = scmp.lt.s32.totalorder %s10, 2
    // Predicated region
    $region21: #{resnet_generator_forward.12} parent=5 // pred_check
      %p152 = pneg %p151
    $region22: #{resnet_generator_forward.12} parent=5 // pred_check_branch
      %154 = sbr.rel (%p152) target = $region24
    $region23: #{resnet_generator_forward.12} parent=5 // pred_region
      // Predicated region
      $region25: #{resnet_generator_forward.12} parent=23 // pred_check
        %p155 = pneg %p30
      $region26: #{resnet_generator_forward.12} parent=23 // pred_check_branch
        %157 = sbr.rel (%p155) target = $region28
      $region27: #{resnet_generator_forward.12} parent=23 // pred_region
        %s158 = smul.u32 32, %s10
        %p159 = scmp.lt.s32.totalorder %s158, 63
        %s160 = scalar_select %p159, %s158, 63
        %s161 = smul.addr %s160, 4
        %s162 = scalar_lea.vmem %s0, %s161
        %s163 = smul.u32 32, %s10
      $region28: #{resnet_generator_forward.12} parent=23 // pred_fallthru
        _
      // Predicated region
      $region29: #{resnet_generator_forward.12} parent=23 // pred_check
        %p164 = pneg %p98
      $region30: #{resnet_generator_forward.12} parent=23 // pred_check_branch
        %166 = sbr.rel (%p164) target = $region32
      $region31: #{resnet_generator_forward.12} parent=23 // pred_region
        %s167 = smul.u32 32, %s10
        %p168 = scmp.lt.s32.totalorder %s167, 63
        %s169 = scalar_select %p168, %s167, 63
        %s170 = smul.addr %s169, 4
        %s171 = scalar_lea.vmem %s3, %s170
        %s172 = smul.u32 32, %s10
      $region32: #{resnet_generator_forward.12} parent=23 // pred_fallthru
        _
    $region24: #{resnet_generator_forward.12} parent=5 // pred_fallthru
      _
    %p173 = scmp.le.s32.totalorder 1, %s10
    %p174 = scmp.lt.s32.totalorder %s10, 3
    %p175 = pnand %p173, %p174
    %p176 = pneg %p175
    // Predicated region
    $region33: #{resnet_generator_forward.12} parent=5 // pred_check
      _
    $region34: #{resnet_generator_forward.12} parent=5 // pred_check_branch
      %178 = sbr.rel (%p175) target = $region36
    $region35: #{resnet_generator_forward.12} parent=5 // pred_region
      %s179 = ssub.s32 %s10, 1
      %s180 = smul.u32 32, %s15
      %p181 = scmp.lt.s32.totalorder %s180, 63
      %s182 = scalar_select %p181, %s180, 63
      %s183 = smul.addr %s182, 4
      %s184 = scalar_lea.vmem %s0, %s183
      %p185 = pneg %p36
      %p186 = pneg %p33
      %p187 = pneg %p57
      %p188 = pneg %p54
      %p189 = pneg %p78
      %p190 = pneg %p75
      %s191 = smul.u32 32, %s15
      %p192 = scmp.lt.s32.totalorder %s191, 63
      %s193 = scalar_select %p192, %s191, 63
      %s194 = smul.addr %s193, 4
      %s195 = scalar_lea.vmem %s3, %s194
      %p196 = pneg %p104
      %p197 = pneg %p101
      %p198 = pneg %p130
      %p199 = pneg %p127
      %s200 = smul.u32 32, %s15
      %p201 = scmp.lt.s32.totalorder %s200, 63
      %s202 = scalar_select %p201, %s200, 63
      %s203 = smul.addr %s202, 4
      %s204 = scalar_lea.vmem %s4, %s203
      %s205 = smul.u32 32, %s15
      %p206 = scmp.lt.s32.totalorder %s205, 63
      %s207 = scalar_select %p206, %s205, 63
      %s208 = smul.addr %s207, 4
      %s209 = scalar_lea.vmem %s0, %s208
      %s210 = smul.u32 32, %s15
      %s211 = smul.u32 32, %s15
      %p212 = scmp.lt.s32.totalorder %s211, 63
      %s213 = scalar_select %p212, %s211, 63
      %s214 = smul.addr %s213, 4
      %s215 = scalar_lea.vmem %s3, %s214
      %s216 = smul.u32 32, %s15
      %s217 = smul.u32 32, %s15
      %p218 = scmp.lt.s32.totalorder %s217, 63
      %s219 = scalar_select %p218, %s217, 63
      %s220 = smul.addr %s219, 4
      %s221 = scalar_lea.vmem %s4, %s220
      %s222 = smul.u32 32, %s15
      %v223 = vld [vmem:[%s209] sm:$0xf]
      %v224 = vld [vmem:[%s209 + $0x4] sm:$0xf]
      %v225 = vld [vmem:[%s209 + $0x8] sm:$0xf]
      %v226 = vld [vmem:[%s209 + $0xc] sm:$0xf]
      %v227 = vld [vmem:[%s209 + $0x10] sm:$0xf]
      %v228 = vld [vmem:[%s209 + $0x14] sm:$0xf]
      %v229 = vld [vmem:[%s209 + $0x18] sm:$0xf]
      %v230 = vld [vmem:[%s209 + $0x1c] sm:$0xf]
      %v231 = vld [vmem:[%s209 + $0x20] sm:$0xf]
      %v232 = vld [vmem:[%s209 + $0x24] sm:$0xf]
      %v233 = vld [vmem:[%s209 + $0x28] sm:$0xf]
      %v234 = vld [vmem:[%s209 + $0x2c] sm:$0xf]
      %v235 = vld [vmem:[%s209 + $0x30] sm:$0xf]
      %v236 = vld [vmem:[%s209 + $0x34] sm:$0xf]
      %v237 = vld [vmem:[%s209 + $0x38] sm:$0xf]
      %v238 = vld [vmem:[%s209 + $0x3c] sm:$0xf]
      %v239 = vld [vmem:[%s209 + $0x40] sm:$0xf]
      %v240 = vld [vmem:[%s209 + $0x44] sm:$0xf]
      %v241 = vld [vmem:[%s209 + $0x48] sm:$0xf]
      %v242 = vld [vmem:[%s209 + $0x4c] sm:$0xf]
      %v243 = vld [vmem:[%s209 + $0x50] sm:$0xf]
      %v244 = vld [vmem:[%s209 + $0x54] sm:$0xf]
      %v245 = vld [vmem:[%s209 + $0x58] sm:$0xf]
      %v246 = vld [vmem:[%s209 + $0x5c] sm:$0xf]
      %v247 = vld [vmem:[%s209 + $0x60] sm:$0xf]
      %v248 = vld [vmem:[%s209 + $0x64] sm:$0xf]
      %v249 = vld [vmem:[%s209 + $0x68] sm:$0xf]
      %v250 = vld [vmem:[%s209 + $0x6c] sm:$0xf]
      %v251 = vld [vmem:[%s209 + $0x70] sm:$0xf]
      %v252 = vld [vmem:[%s209 + $0x74] sm:$0xf]
      %v253 = vld [vmem:[%s209 + $0x78] sm:$0xf]
      %v254 = vld [vmem:[%s209 + $0x7c] sm:$0xf]
      %v255 = vunpack.c.l.bf16 %v223
      %v256 = vunpack.c.l.bf16 %v224
      %v257 = vunpack.c.l.bf16 %v225
      %v258 = vunpack.c.l.bf16 %v226
      %v259 = vunpack.c.l.bf16 %v227
      %v260 = vunpack.c.l.bf16 %v228
      %v261 = vunpack.c.l.bf16 %v229
      %v262 = vunpack.c.l.bf16 %v230
      %v263 = vunpack.c.l.bf16 %v231
      %v264 = vunpack.c.l.bf16 %v232
      %v265 = vunpack.c.l.bf16 %v233
      %v266 = vunpack.c.l.bf16 %v234
      %v267 = vunpack.c.l.bf16 %v235
      %v268 = vunpack.c.l.bf16 %v236
      %v269 = vunpack.c.l.bf16 %v237
      %v270 = vunpack.c.l.bf16 %v238
      %v271 = vunpack.c.l.bf16 %v239
      %v272 = vunpack.c.l.bf16 %v240
      %v273 = vunpack.c.l.bf16 %v241
      %v274 = vunpack.c.l.bf16 %v242
      %v275 = vunpack.c.l.bf16 %v243
      %v276 = vunpack.c.l.bf16 %v244
      %v277 = vunpack.c.l.bf16 %v245
      %v278 = vunpack.c.l.bf16 %v246
      %v279 = vunpack.c.l.bf16 %v247
      %v280 = vunpack.c.l.bf16 %v248
      %v281 = vunpack.c.l.bf16 %v249
      %v282 = vunpack.c.l.bf16 %v250
      %v283 = vunpack.c.l.bf16 %v251
      %v284 = vunpack.c.l.bf16 %v252
      %v285 = vunpack.c.l.bf16 %v253
      %v286 = vunpack.c.l.bf16 %v254
      %v287 = vld [vmem:[%s215] sm:$0xf]
      %v288 = vld [vmem:[%s215 + $0x4] sm:$0xf]
      %v289 = vld [vmem:[%s215 + $0x8] sm:$0xf]
      %v290 = vld [vmem:[%s215 + $0xc] sm:$0xf]
      %v291 = vld [vmem:[%s215 + $0x10] sm:$0xf]
      %v292 = vld [vmem:[%s215 + $0x14] sm:$0xf]
      %v293 = vld [vmem:[%s215 + $0x18] sm:$0xf]
      %v294 = vld [vmem:[%s215 + $0x1c] sm:$0xf]
      %v295 = vld [vmem:[%s215 + $0x20] sm:$0xf]
      %v296 = vld [vmem:[%s215 + $0x24] sm:$0xf]
      %v297 = vld [vmem:[%s215 + $0x28] sm:$0xf]
      %v298 = vld [vmem:[%s215 + $0x2c] sm:$0xf]
      %v299 = vld [vmem:[%s215 + $0x30] sm:$0xf]
      %v300 = vld [vmem:[%s215 + $0x34] sm:$0xf]
      %v301 = vld [vmem:[%s215 + $0x38] sm:$0xf]
      %v302 = vld [vmem:[%s215 + $0x3c] sm:$0xf]
      %v303 = vld [vmem:[%s215 + $0x40] sm:$0xf]
      %v304 = vld [vmem:[%s215 + $0x44] sm:$0xf]
      %v305 = vld [vmem:[%s215 + $0x48] sm:$0xf]
      %v306 = vld [vmem:[%s215 + $0x4c] sm:$0xf]
      %v307 = vld [vmem:[%s215 + $0x50] sm:$0xf]
      %v308 = vld [vmem:[%s215 + $0x54] sm:$0xf]
      %v309 = vld [vmem:[%s215 + $0x58] sm:$0xf]
      %v310 = vld [vmem:[%s215 + $0x5c] sm:$0xf]
      %v311 = vld [vmem:[%s215 + $0x60] sm:$0xf]
      %v312 = vld [vmem:[%s215 + $0x64] sm:$0xf]
      %v313 = vld [vmem:[%s215 + $0x68] sm:$0xf]
      %v314 = vld [vmem:[%s215 + $0x6c] sm:$0xf]
      %v315 = vld [vmem:[%s215 + $0x70] sm:$0xf]
      %v316 = vld [vmem:[%s215 + $0x74] sm:$0xf]
      %v317 = vld [vmem:[%s215 + $0x78] sm:$0xf]
      %v318 = vld [vmem:[%s215 + $0x7c] sm:$0xf]
      %v319 = vunpack.c.l.bf16 %v287
      %v320 = vunpack.c.l.bf16 %v288
      %v321 = vunpack.c.l.bf16 %v289
      %v322 = vunpack.c.l.bf16 %v290
      %v323 = vunpack.c.l.bf16 %v291
      %v324 = vunpack.c.l.bf16 %v292
      %v325 = vunpack.c.l.bf16 %v293
      %v326 = vunpack.c.l.bf16 %v294
      %v327 = vunpack.c.l.bf16 %v295
      %v328 = vunpack.c.l.bf16 %v296
      %v329 = vunpack.c.l.bf16 %v297
      %v330 = vunpack.c.l.bf16 %v298
      %v331 = vunpack.c.l.bf16 %v299
      %v332 = vunpack.c.l.bf16 %v300
      %v333 = vunpack.c.l.bf16 %v301
      %v334 = vunpack.c.l.bf16 %v302
      %v335 = vunpack.c.l.bf16 %v303
      %v336 = vunpack.c.l.bf16 %v304
      %v337 = vunpack.c.l.bf16 %v305
      %v338 = vunpack.c.l.bf16 %v306
      %v339 = vunpack.c.l.bf16 %v307
      %v340 = vunpack.c.l.bf16 %v308
      %v341 = vunpack.c.l.bf16 %v309
      %v342 = vunpack.c.l.bf16 %v310
      %v343 = vunpack.c.l.bf16 %v311
      %v344 = vunpack.c.l.bf16 %v312
      %v345 = vunpack.c.l.bf16 %v313
      %v346 = vunpack.c.l.bf16 %v314
      %v347 = vunpack.c.l.bf16 %v315
      %v348 = vunpack.c.l.bf16 %v316
      %v349 = vunpack.c.l.bf16 %v317
      %v350 = vunpack.c.l.bf16 %v318
      %v351 = vld [vmem:[%s1] sm:$0x1]
      %v353 = vperm.slane %v351, 0
      %v355 = vmul.f32 %v255, %v353
      %v356 = vmul.f32 %v256, %v353
      %v357 = vmul.f32 %v257, %v353
      %v358 = vmul.f32 %v258, %v353
      %v359 = vmul.f32 %v259, %v353
      %v360 = vmul.f32 %v260, %v353
      %v361 = vmul.f32 %v261, %v353
      %v362 = vmul.f32 %v262, %v353
      %v363 = vmul.f32 %v263, %v353
      %v364 = vmul.f32 %v264, %v353
      %v365 = vmul.f32 %v265, %v353
      %v366 = vmul.f32 %v266, %v353
      %v367 = vmul.f32 %v267, %v353
      %v368 = vmul.f32 %v268, %v353
      %v369 = vmul.f32 %v269, %v353
      %v370 = vmul.f32 %v270, %v353
      %v371 = vmul.f32 %v271, %v353
      %v372 = vmul.f32 %v272, %v353
      %v373 = vmul.f32 %v273, %v353
      %v374 = vmul.f32 %v274, %v353
      %v375 = vmul.f32 %v275, %v353
      %v376 = vmul.f32 %v276, %v353
      %v377 = vmul.f32 %v277, %v353
      %v378 = vmul.f32 %v278, %v353
      %v379 = vmul.f32 %v279, %v353
      %v380 = vmul.f32 %v280, %v353
      %v381 = vmul.f32 %v281, %v353
      %v382 = vmul.f32 %v282, %v353
      %v383 = vmul.f32 %v283, %v353
      %v384 = vmul.f32 %v284, %v353
      %v385 = vmul.f32 %v285, %v353
      %v386 = vmul.f32 %v286, %v353
      %v387 = vld [vmem:[%s2] sm:$0x1]
      %v389 = vperm.slane %v387, 0
      %v391 = vadd.f32 %v355, %v389
      %v392 = vadd.f32 %v356, %v389
      %v393 = vadd.f32 %v357, %v389
      %v394 = vadd.f32 %v358, %v389
      %v395 = vadd.f32 %v359, %v389
      %v396 = vadd.f32 %v360, %v389
      %v397 = vadd.f32 %v361, %v389
      %v398 = vadd.f32 %v362, %v389
      %v399 = vadd.f32 %v363, %v389
      %v400 = vadd.f32 %v364, %v389
      %v401 = vadd.f32 %v365, %v389
      %v402 = vadd.f32 %v366, %v389
      %v403 = vadd.f32 %v367, %v389
      %v404 = vadd.f32 %v368, %v389
      %v405 = vadd.f32 %v369, %v389
      %v406 = vadd.f32 %v370, %v389
      %v407 = vadd.f32 %v371, %v389
      %v408 = vadd.f32 %v372, %v389
      %v409 = vadd.f32 %v373, %v389
      %v410 = vadd.f32 %v374, %v389
      %v411 = vadd.f32 %v375, %v389
      %v412 = vadd.f32 %v376, %v389
      %v413 = vadd.f32 %v377, %v389
      %v414 = vadd.f32 %v378, %v389
      %v415 = vadd.f32 %v379, %v389
      %v416 = vadd.f32 %v380, %v389
      %v417 = vadd.f32 %v381, %v389
      %v418 = vadd.f32 %v382, %v389
      %v419 = vadd.f32 %v383, %v389
      %v420 = vadd.f32 %v384, %v389
      %v421 = vadd.f32 %v385, %v389
      %v422 = vadd.f32 %v386, %v389
      %v423 = vadd.f32 %v391, %v319
      %v424 = vadd.f32 %v392, %v320
      %v425 = vadd.f32 %v393, %v321
      %v426 = vadd.f32 %v394, %v322
      %v427 = vadd.f32 %v395, %v323
      %v428 = vadd.f32 %v396, %v324
      %v429 = vadd.f32 %v397, %v325
      %v430 = vadd.f32 %v398, %v326
      %v431 = vadd.f32 %v399, %v327
      %v432 = vadd.f32 %v400, %v328
      %v433 = vadd.f32 %v401, %v329
      %v434 = vadd.f32 %v402, %v330
      %v435 = vadd.f32 %v403, %v331
      %v436 = vadd.f32 %v404, %v332
      %v437 = vadd.f32 %v405, %v333
      %v438 = vadd.f32 %v406, %v334
      %v439 = vadd.f32 %v407, %v335
      %v440 = vadd.f32 %v408, %v336
      %v441 = vadd.f32 %v409, %v337
      %v442 = vadd.f32 %v410, %v338
      %v443 = vadd.f32 %v411, %v339
      %v444 = vadd.f32 %v412, %v340
      %v445 = vadd.f32 %v413, %v341
      %v446 = vadd.f32 %v414, %v342
      %v447 = vadd.f32 %v415, %v343
      %v448 = vadd.f32 %v416, %v344
      %v449 = vadd.f32 %v417, %v345
      %v450 = vadd.f32 %v418, %v346
      %v451 = vadd.f32 %v419, %v347
      %v452 = vadd.f32 %v420, %v348
      %v453 = vadd.f32 %v421, %v349
      %v454 = vadd.f32 %v422, %v350
      %v455 = vmax.f32 %v423, 0.0
      %v456 = vmax.f32 %v424, 0.0
      %v457 = vmax.f32 %v425, 0.0
      %v458 = vmax.f32 %v426, 0.0
      %v459 = vmax.f32 %v427, 0.0
      %v460 = vmax.f32 %v428, 0.0
      %v461 = vmax.f32 %v429, 0.0
      %v462 = vmax.f32 %v430, 0.0
      %v463 = vmax.f32 %v431, 0.0
      %v464 = vmax.f32 %v432, 0.0
      %v465 = vmax.f32 %v433, 0.0
      %v466 = vmax.f32 %v434, 0.0
      %v467 = vmax.f32 %v435, 0.0
      %v468 = vmax.f32 %v436, 0.0
      %v469 = vmax.f32 %v437, 0.0
      %v470 = vmax.f32 %v438, 0.0
      %v471 = vmax.f32 %v439, 0.0
      %v472 = vmax.f32 %v440, 0.0
      %v473 = vmax.f32 %v441, 0.0
      %v474 = vmax.f32 %v442, 0.0
      %v475 = vmax.f32 %v443, 0.0
      %v476 = vmax.f32 %v444, 0.0
      %v477 = vmax.f32 %v445, 0.0
      %v478 = vmax.f32 %v446, 0.0
      %v479 = vmax.f32 %v447, 0.0
      %v480 = vmax.f32 %v448, 0.0
      %v481 = vmax.f32 %v449, 0.0
      %v482 = vmax.f32 %v450, 0.0
      %v483 = vmax.f32 %v451, 0.0
      %v484 = vmax.f32 %v452, 0.0
      %v485 = vmax.f32 %v453, 0.0
      %v486 = vmax.f32 %v454, 0.0
      %v487 = vpack.c.bf16 %v455, %v455
      %v488 = vpack.c.bf16 %v456, %v456
      %v489 = vpack.c.bf16 %v457, %v457
      %v490 = vpack.c.bf16 %v458, %v458
      %v491 = vpack.c.bf16 %v459, %v459
      %v492 = vpack.c.bf16 %v460, %v460
      %v493 = vpack.c.bf16 %v461, %v461
      %v494 = vpack.c.bf16 %v462, %v462
      %v495 = vpack.c.bf16 %v463, %v463
      %v496 = vpack.c.bf16 %v464, %v464
      %v497 = vpack.c.bf16 %v465, %v465
      %v498 = vpack.c.bf16 %v466, %v466
      %v499 = vpack.c.bf16 %v467, %v467
      %v500 = vpack.c.bf16 %v468, %v468
      %v501 = vpack.c.bf16 %v469, %v469
      %v502 = vpack.c.bf16 %v470, %v470
      %v503 = vpack.c.bf16 %v471, %v471
      %v504 = vpack.c.bf16 %v472, %v472
      %v505 = vpack.c.bf16 %v473, %v473
      %v506 = vpack.c.bf16 %v474, %v474
      %v507 = vpack.c.bf16 %v475, %v475
      %v508 = vpack.c.bf16 %v476, %v476
      %v509 = vpack.c.bf16 %v477, %v477
      %v510 = vpack.c.bf16 %v478, %v478
      %v511 = vpack.c.bf16 %v479, %v479
      %v512 = vpack.c.bf16 %v480, %v480
      %v513 = vpack.c.bf16 %v481, %v481
      %v514 = vpack.c.bf16 %v482, %v482
      %v515 = vpack.c.bf16 %v483, %v483
      %v516 = vpack.c.bf16 %v484, %v484
      %v517 = vpack.c.bf16 %v485, %v485
      %v518 = vpack.c.bf16 %v486, %v486
      %519 = vst [vmem:[%s221] sm:$0xf] %v487
      %520 = vst [vmem:[%s221 + $0x4] sm:$0xf] %v488
      %521 = vst [vmem:[%s221 + $0x8] sm:$0xf] %v489
      %522 = vst [vmem:[%s221 + $0xc] sm:$0xf] %v490
      %523 = vst [vmem:[%s221 + $0x10] sm:$0xf] %v491
      %524 = vst [vmem:[%s221 + $0x14] sm:$0xf] %v492
      %525 = vst [vmem:[%s221 + $0x18] sm:$0xf] %v493
      %526 = vst [vmem:[%s221 + $0x1c] sm:$0xf] %v494
      %527 = vst [vmem:[%s221 + $0x20] sm:$0xf] %v495
      %528 = vst [vmem:[%s221 + $0x24] sm:$0xf] %v496
      %529 = vst [vmem:[%s221 + $0x28] sm:$0xf] %v497
      %530 = vst [vmem:[%s221 + $0x2c] sm:$0xf] %v498
      %531 = vst [vmem:[%s221 + $0x30] sm:$0xf] %v499
      %532 = vst [vmem:[%s221 + $0x34] sm:$0xf] %v500
      %533 = vst [vmem:[%s221 + $0x38] sm:$0xf] %v501
      %534 = vst [vmem:[%s221 + $0x3c] sm:$0xf] %v502
      %535 = vst [vmem:[%s221 + $0x40] sm:$0xf] %v503
      %536 = vst [vmem:[%s221 + $0x44] sm:$0xf] %v504
      %537 = vst [vmem:[%s221 + $0x48] sm:$0xf] %v505
      %538 = vst [vmem:[%s221 + $0x4c] sm:$0xf] %v506
      %539 = vst [vmem:[%s221 + $0x50] sm:$0xf] %v507
      %540 = vst [vmem:[%s221 + $0x54] sm:$0xf] %v508
      %541 = vst [vmem:[%s221 + $0x58] sm:$0xf] %v509
      %542 = vst [vmem:[%s221 + $0x5c] sm:$0xf] %v510
      %543 = vst [vmem:[%s221 + $0x60] sm:$0xf] %v511
      %544 = vst [vmem:[%s221 + $0x64] sm:$0xf] %v512
      %545 = vst [vmem:[%s221 + $0x68] sm:$0xf] %v513
      %546 = vst [vmem:[%s221 + $0x6c] sm:$0xf] %v514
      %547 = vst [vmem:[%s221 + $0x70] sm:$0xf] %v515
      %548 = vst [vmem:[%s221 + $0x74] sm:$0xf] %v516
      %549 = vst [vmem:[%s221 + $0x78] sm:$0xf] %v517
      %550 = vst [vmem:[%s221 + $0x7c] sm:$0xf] %v518
      %s551 = smul.u32 32, %s15
      %p552 = scmp.lt.s32.totalorder %s551, 63
      %s553 = scalar_select %p552, %s551, 63
      %s554 = smul.addr %s553, 4
      %s555 = scalar_lea.vmem %s4, %s554
      // Predicated region
      $region37: #{resnet_generator_forward.12} parent=35 // pred_check
        %p556 = pneg %p127
      $region38: #{resnet_generator_forward.12} parent=35 // pred_check_branch
        %558 = sbr.rel (%p556) target = $region40
      $region39: #{resnet_generator_forward.12} parent=35 // pred_region
        %s559 = smul.u32 32, %s15
      $region40: #{resnet_generator_forward.12} parent=35 // pred_fallthru
        _
    $region36: #{resnet_generator_forward.12} parent=5 // pred_fallthru
      _
    %p560 = scmp.le.s32.totalorder 2, %s10
    // Predicated region
    $region41: #{resnet_generator_forward.12} parent=5 // pred_check
      %p561 = pneg %p560
    $region42: #{resnet_generator_forward.12} parent=5 // pred_check_branch
      %563 = sbr.rel (%p561) target = $region44
    $region43: #{resnet_generator_forward.12} parent=5 // pred_region
      %s564 = ssub.s32 %s10, 2
      // Predicated region
      $region45: #{resnet_generator_forward.12} parent=43 // pred_check
        %p565 = pneg %p133
      $region46: #{resnet_generator_forward.12} parent=43 // pred_check_branch
        %567 = sbr.rel (%p565) target = $region48
      $region47: #{resnet_generator_forward.12} parent=43 // pred_region
        %s568 = smul.u32 32, %s16
        %p569 = scmp.lt.s32.totalorder %s568, 63
        %s570 = scalar_select %p569, %s568, 63
        %s571 = smul.addr %s570, 4
        %s572 = scalar_lea.vmem %s4, %s571
      $region48: #{resnet_generator_forward.12} parent=43 // pred_fallthru
        _
    $region44: #{resnet_generator_forward.12} parent=5 // pred_fallthru
      _
  $region6: #{resnet_generator_forward.12} parent=0 // loop_footer
    %s14 = sadd.s32 1, %s10
  $region7: #{resnet_generator_forward.12} parent=0 // loop_footer_branch
    %9 = sbr.rel target = $region3
  $region8: #{resnet_generator_forward.12} parent=0 // loop_exit
    _

// kernel: resnet_generator_forward.13
$region0: #{resnet_generator_forward.13}
  #allocation0 [shape = 'u32[]', space=smem, size = 0x4, offset = 0x4, fixed_abs, tag = 'smem constant byte address 0x4 - core index']
  #allocation1 [shape = 'u32[72,128]{1,0:T(1,128)}', space=vmem, size = 0x9000, scoped, tag = 'internal scratch']
  %s0 = inlined_call_operand.vmem [shape: bf16[512,512], index: 0, kind: input, shape index: {}]
  %s1 = inlined_call_operand.vmem [shape: bf16[512,128], index: 1, kind: input, shape index: {}]
  %s2 = inlined_call_operand.vmem [shape: f32[1,128], index: 2, kind: input, shape index: {}]
  %s3 = inlined_call_operand.vmem [shape: f32[512,128], index: 3, kind: output, shape index: {}]
  %s4 = sld [smem:[#allocation0]]
  $region45: #{resnet_generator_forward.13} parent=0
    _
  %s6 = ssub.s32 1, %s4
  %s7 = scalar_select 0, %s6, %s4
  loop: start=0, step=1, limit=4
  $region2: #{resnet_generator_forward.13} parent=0 // loop_pre_header
    _
  $region3: #{resnet_generator_forward.13} parent=0 // loop_header
    %s9 = sphi 0, %s13
    %p10 = scmp.ge.s32.totalorder %s9, 4
    %s19 = sphi 0, %s21
    %s22 = sphi 0, %s19
    %s23 = sphi 0, %s22
    %s39 = sphi 0, %s23
    %s43 = sphi 0, %s43
    %s45 = sphi 0, %s43
    %s46 = sphi 0, %s45
    %s60 = sphi 0, %s46
    %s64 = sphi 0, %s64
    %s66 = sphi 0, %s64
    %s67 = sphi 0, %s66
    %s81 = sphi 0, %s67
    %s87 = sphi 0, %s89
    %s90 = sphi 0, %s87
    %s91 = sphi 0, %s90
    %s107 = sphi 0, %s91
  $region4: #{resnet_generator_forward.13} parent=0 // loop_header_branch
    %12 = sbr.rel (%p10) target = $region8
  $region5: #{resnet_generator_forward.13} parent=0 // loop_body
    %s14 = ssub.s32 %s9, 1
    %s15 = ssub.s32 %s9, 2
    %s16 = sadd.s32 %s9, 1
    %s17 = ssub.s32 %s9, %s16
    %p18 = scmp.eq.s32.totalorder %s17, 0
    %s20 = sadd.s32 %s19, 1
    %s21 = scalar_select %p18, %s19, %s20
    %p24 = pneg %p18
    %p25 = scmp.eq.s32.totalorder %s9, 1
    %p26 = por %p24, %p25
    %p27 = scmp.ne.s32.totalorder %s19, %s22
    %p28 = scmp.eq.s32.totalorder %s9, 0
    %p29 = por %p27, %p28
    %p30 = scmp.ne.s32.totalorder %s19, %s22
    %p31 = scmp.eq.s32.totalorder %s14, 1
    %p32 = por %p30, %p31
    %p33 = scmp.ne.s32.totalorder %s22, %s23
    %p34 = scmp.eq.s32.totalorder %s14, 0
    %p35 = por %p33, %p34
    %p36 = scmp.ne.s32.totalorder %s22, %s23
    %p37 = scmp.eq.s32.totalorder %s15, 1
    %p38 = por %p36, %p37
    %p40 = scmp.ne.s32.totalorder %s23, %s39
    %p41 = scmp.eq.s32.totalorder %s15, 0
    %p42 = por %p40, %p41
    %s44 = sadd.s32 %s43, 1
    %p47 = scmp.eq.s32.totalorder %s9, 1
    %p48 = scmp.ne.s32.totalorder %s43, %s45
    %p49 = scmp.eq.s32.totalorder %s9, 0
    %p50 = por %p48, %p49
    %p51 = scmp.ne.s32.totalorder %s43, %s45
    %p52 = scmp.eq.s32.totalorder %s14, 1
    %p53 = por %p51, %p52
    %p54 = scmp.ne.s32.totalorder %s45, %s46
    %p55 = scmp.eq.s32.totalorder %s14, 0
    %p56 = por %p54, %p55
    %p57 = scmp.ne.s32.totalorder %s45, %s46
    %p58 = scmp.eq.s32.totalorder %s15, 1
    %p59 = por %p57, %p58
    %p61 = scmp.ne.s32.totalorder %s46, %s60
    %p62 = scmp.eq.s32.totalorder %s15, 0
    %p63 = por %p61, %p62
    %s65 = sadd.s32 %s64, 1
    %p68 = scmp.eq.s32.totalorder %s9, 1
    %p69 = scmp.ne.s32.totalorder %s64, %s66
    %p70 = scmp.eq.s32.totalorder %s9, 0
    %p71 = por %p69, %p70
    %p72 = scmp.ne.s32.totalorder %s64, %s66
    %p73 = scmp.eq.s32.totalorder %s14, 1
    %p74 = por %p72, %p73
    %p75 = scmp.ne.s32.totalorder %s66, %s67
    %p76 = scmp.eq.s32.totalorder %s14, 0
    %p77 = por %p75, %p76
    %p78 = scmp.ne.s32.totalorder %s66, %s67
    %p79 = scmp.eq.s32.totalorder %s15, 1
    %p80 = por %p78, %p79
    %p82 = scmp.ne.s32.totalorder %s67, %s81
    %p83 = scmp.eq.s32.totalorder %s15, 0
    %p84 = por %p82, %p83
    %s85 = ssub.s32 %s9, %s16
    %p86 = scmp.eq.s32.totalorder %s85, 0
    %s88 = sadd.s32 %s87, 1
    %s89 = scalar_select %p86, %s87, %s88
    %p92 = pneg %p86
    %p93 = scmp.eq.s32.totalorder %s9, 1
    %p94 = por %p92, %p93
    %p95 = scmp.ne.s32.totalorder %s87, %s90
    %p96 = scmp.eq.s32.totalorder %s9, 0
    %p97 = por %p95, %p96
    %p98 = scmp.ne.s32.totalorder %s87, %s90
    %p99 = scmp.eq.s32.totalorder %s14, 1
    %p100 = por %p98, %p99
    %p101 = scmp.ne.s32.totalorder %s90, %s91
    %p102 = scmp.eq.s32.totalorder %s14, 0
    %p103 = por %p101, %p102
    %p104 = scmp.ne.s32.totalorder %s90, %s91
    %p105 = scmp.eq.s32.totalorder %s15, 1
    %p106 = por %p104, %p105
    %p108 = scmp.ne.s32.totalorder %s91, %s107
    %p109 = scmp.eq.s32.totalorder %s15, 0
    %p110 = por %p108, %p109
    %p111 = scmp.le.s32.totalorder 1, %s9
    %p112 = scmp.lt.s32.totalorder %s9, 3
    %p113 = pnand %p111, %p112
    %p114 = pneg %p113
    // Predicated region
    $region9: #{resnet_generator_forward.13} parent=5 // pred_check
      _
    $region10: #{resnet_generator_forward.13} parent=5 // pred_check_branch
      %116 = sbr.rel (%p113) target = $region12
    $region11: #{resnet_generator_forward.13} parent=5 // pred_region
      %s117 = ssub.s32 %s9, 1
      // Predicated region
      $region13: #{resnet_generator_forward.13} parent=11 // pred_check
        %p118 = pneg %p56
      $region14: #{resnet_generator_forward.13} parent=11 // pred_check_branch
        %120 = sbr.rel (%p118) target = $region16
      $region15: #{resnet_generator_forward.13} parent=11 // pred_region
        _
      $region16: #{resnet_generator_forward.13} parent=11 // pred_fallthru
        _
      // Predicated region
      $region17: #{resnet_generator_forward.13} parent=11 // pred_check
        %p121 = pneg %p77
      $region18: #{resnet_generator_forward.13} parent=11 // pred_check_branch
        %123 = sbr.rel (%p121) target = $region20
      $region19: #{resnet_generator_forward.13} parent=11 // pred_region
        _
      $region20: #{resnet_generator_forward.13} parent=11 // pred_fallthru
        _
    $region12: #{resnet_generator_forward.13} parent=5 // pred_fallthru
      _
    %p124 = scmp.lt.s32.totalorder %s9, 2
    // Predicated region
    $region21: #{resnet_generator_forward.13} parent=5 // pred_check
      %p125 = pneg %p124
    $region22: #{resnet_generator_forward.13} parent=5 // pred_check_branch
      %127 = sbr.rel (%p125) target = $region24
    $region23: #{resnet_generator_forward.13} parent=5 // pred_region
      // Predicated region
      $region25: #{resnet_generator_forward.13} parent=23 // pred_check
        %p128 = pneg %p29
      $region26: #{resnet_generator_forward.13} parent=23 // pred_check_branch
        %130 = sbr.rel (%p128) target = $region28
      $region27: #{resnet_generator_forward.13} parent=23 // pred_region
        %s131 = smul.u32 32, %s9
        %p132 = scmp.lt.s32.totalorder %s131, 63
        %s133 = scalar_select %p132, %s131, 63
        %s134 = smul.addr %s133, 4
        %s135 = smul.addr %s134, 4
        %s136 = scalar_lea.vmem %s0, %s135
        %s137 = smul.u32 32, %s9
      $region28: #{resnet_generator_forward.13} parent=23 // pred_fallthru
        _
    $region24: #{resnet_generator_forward.13} parent=5 // pred_fallthru
      _
    %p138 = scmp.le.s32.totalorder 1, %s9
    %p139 = scmp.lt.s32.totalorder %s9, 3
    %p140 = pnand %p138, %p139
    %p141 = pneg %p140
    // Predicated region
    $region29: #{resnet_generator_forward.13} parent=5 // pred_check
      _
    $region30: #{resnet_generator_forward.13} parent=5 // pred_check_branch
      %143 = sbr.rel (%p140) target = $region32
    $region31: #{resnet_generator_forward.13} parent=5 // pred_region
      %s144 = ssub.s32 %s9, 1
      %s145 = smul.u32 32, %s14
      %p146 = scmp.lt.s32.totalorder %s145, 63
      %s147 = scalar_select %p146, %s145, 63
      %s148 = smul.addr %s147, 4
      %s149 = smul.addr %s148, 4
      %s150 = scalar_lea.vmem %s0, %s149
      %p151 = pneg %p35
      %p152 = pneg %p32
      %p153 = pneg %p56
      %p154 = pneg %p53
      %p155 = pneg %p77
      %p156 = pneg %p74
      %p157 = pneg %p103
      %p158 = pneg %p100
      %s159 = smul.u32 32, %s14
      %p160 = scmp.lt.s32.totalorder %s159, 63
      %s161 = scalar_select %p160, %s159, 63
      %s162 = smul.addr %s161, 8
      %s163 = scalar_lea.vmem %s3, %s162
      %s164 = smul.u32 32, %s14
      %p165 = scmp.lt.s32.totalorder %s164, 63
      %s166 = scalar_select %p165, %s164, 63
      %s167 = smul.addr %s166, 4
      %s168 = smul.addr %s167, 4
      %s169 = scalar_lea.vmem %s0, %s168
      %s170 = smul.u32 32, %s14
      %s171 = smul.u32 32, %s14
      %p172 = scmp.lt.s32.totalorder %s171, 63
      %s173 = scalar_select %p172, %s171, 63
      %s174 = smul.addr %s173, 8
      %s175 = scalar_lea.vmem %s3, %s174
      %s176 = smul.u32 32, %s14
      %v177 = vld [vmem:[%s169] sm:$0xff]
      %v178 = vld [vmem:[%s169 + $0x8] sm:$0xff]
      %v179 = vld [vmem:[%s169 + $0x10] sm:$0xff]
      %v180 = vld [vmem:[%s169 + $0x18] sm:$0xff]
      %v181 = vld [vmem:[%s169 + $0x20] sm:$0xff]
      %v182 = vld [vmem:[%s169 + $0x28] sm:$0xff]
      %v183 = vld [vmem:[%s169 + $0x30] sm:$0xff]
      %v184 = vld [vmem:[%s169 + $0x38] sm:$0xff]
      %v185 = vld [vmem:[%s169 + $0x40] sm:$0xff]
      %v186 = vld [vmem:[%s169 + $0x48] sm:$0xff]
      %v187 = vld [vmem:[%s169 + $0x50] sm:$0xff]
      %v188 = vld [vmem:[%s169 + $0x58] sm:$0xff]
      %v189 = vld [vmem:[%s169 + $0x60] sm:$0xff]
      %v190 = vld [vmem:[%s169 + $0x68] sm:$0xff]
      %v191 = vld [vmem:[%s169 + $0x70] sm:$0xff]
      %v192 = vld [vmem:[%s169 + $0x78] sm:$0xff]
      %v193 = vld [vmem:[%s169 + $0x80] sm:$0xff]
      %v194 = vld [vmem:[%s169 + $0x88] sm:$0xff]
      %v195 = vld [vmem:[%s169 + $0x90] sm:$0xff]
      %v196 = vld [vmem:[%s169 + $0x98] sm:$0xff]
      %v197 = vld [vmem:[%s169 + $0xa0] sm:$0xff]
      %v198 = vld [vmem:[%s169 + $0xa8] sm:$0xff]
      %v199 = vld [vmem:[%s169 + $0xb0] sm:$0xff]
      %v200 = vld [vmem:[%s169 + $0xb8] sm:$0xff]
      %v201 = vld [vmem:[%s169 + $0xc0] sm:$0xff]
      %v202 = vld [vmem:[%s169 + $0xc8] sm:$0xff]
      %v203 = vld [vmem:[%s169 + $0xd0] sm:$0xff]
      %v204 = vld [vmem:[%s169 + $0xd8] sm:$0xff]
      %v205 = vld [vmem:[%s169 + $0xe0] sm:$0xff]
      %v206 = vld [vmem:[%s169 + $0xe8] sm:$0xff]
      %v207 = vld [vmem:[%s169 + $0xf0] sm:$0xff]
      %v208 = vld [vmem:[%s169 + $0xf8] sm:$0xff]
      %v209 = vld [vmem:[%s169 + $0x100] sm:$0xff]
      %v210 = vld [vmem:[%s169 + $0x108] sm:$0xff]
      %v211 = vld [vmem:[%s169 + $0x110] sm:$0xff]
      %v212 = vld [vmem:[%s169 + $0x118] sm:$0xff]
      %v213 = vld [vmem:[%s169 + $0x120] sm:$0xff]
      %v214 = vld [vmem:[%s169 + $0x128] sm:$0xff]
      %v215 = vld [vmem:[%s169 + $0x130] sm:$0xff]
      %v216 = vld [vmem:[%s169 + $0x138] sm:$0xff]
      %v217 = vld [vmem:[%s169 + $0x140] sm:$0xff]
      %v218 = vld [vmem:[%s169 + $0x148] sm:$0xff]
      %v219 = vld [vmem:[%s169 + $0x150] sm:$0xff]
      %v220 = vld [vmem:[%s169 + $0x158] sm:$0xff]
      %v221 = vld [vmem:[%s169 + $0x160] sm:$0xff]
      %v222 = vld [vmem:[%s169 + $0x168] sm:$0xff]
      %v223 = vld [vmem:[%s169 + $0x170] sm:$0xff]
      %v224 = vld [vmem:[%s169 + $0x178] sm:$0xff]
      %v225 = vld [vmem:[%s169 + $0x180] sm:$0xff]
      %v226 = vld [vmem:[%s169 + $0x188] sm:$0xff]
      %v227 = vld [vmem:[%s169 + $0x190] sm:$0xff]
      %v228 = vld [vmem:[%s169 + $0x198] sm:$0xff]
      %v229 = vld [vmem:[%s169 + $0x1a0] sm:$0xff]
      %v230 = vld [vmem:[%s169 + $0x1a8] sm:$0xff]
      %v231 = vld [vmem:[%s169 + $0x1b0] sm:$0xff]
      %v232 = vld [vmem:[%s169 + $0x1b8] sm:$0xff]
      %v233 = vld [vmem:[%s169 + $0x1c0] sm:$0xff]
      %v234 = vld [vmem:[%s169 + $0x1c8] sm:$0xff]
      %v235 = vld [vmem:[%s169 + $0x1d0] sm:$0xff]
      %v236 = vld [vmem:[%s169 + $0x1d8] sm:$0xff]
      %v237 = vld [vmem:[%s169 + $0x1e0] sm:$0xff]
      %v238 = vld [vmem:[%s169 + $0x1e8] sm:$0xff]
      %v239 = vld [vmem:[%s169 + $0x1f0] sm:$0xff]
      %v240 = vld [vmem:[%s169 + $0x1f8] sm:$0xff]
      %v241 = vld [vmem:[%s1] sm:$0xf]
      %v242 = vld [vmem:[%s1 + $0x4] sm:$0xf]
      %v243 = vld [vmem:[%s1 + $0x8] sm:$0xf]
      %v244 = vld [vmem:[%s1 + $0xc] sm:$0xf]
      %v245 = vld [vmem:[%s1 + $0x10] sm:$0xf]
      %v246 = vld [vmem:[%s1 + $0x14] sm:$0xf]
      %v247 = vld [vmem:[%s1 + $0x18] sm:$0xf]
      %v248 = vld [vmem:[%s1 + $0x1c] sm:$0xf]
      %v249 = vld [vmem:[%s1 + $0x20] sm:$0xf]
      %v250 = vld [vmem:[%s1 + $0x24] sm:$0xf]
      %v251 = vld [vmem:[%s1 + $0x28] sm:$0xf]
      %v252 = vld [vmem:[%s1 + $0x2c] sm:$0xf]
      %v253 = vld [vmem:[%s1 + $0x30] sm:$0xf]
      %v254 = vld [vmem:[%s1 + $0x34] sm:$0xf]
      %v255 = vld [vmem:[%s1 + $0x38] sm:$0xf]
      %v256 = vld [vmem:[%s1 + $0x3c] sm:$0xf]
      %v257 = vld [vmem:[%s1 + $0x40] sm:$0xf]
      %v258 = vld [vmem:[%s1 + $0x44] sm:$0xf]
      %v259 = vld [vmem:[%s1 + $0x48] sm:$0xf]
      %v260 = vld [vmem:[%s1 + $0x4c] sm:$0xf]
      %v261 = vld [vmem:[%s1 + $0x50] sm:$0xf]
      %v262 = vld [vmem:[%s1 + $0x54] sm:$0xf]
      %v263 = vld [vmem:[%s1 + $0x58] sm:$0xf]
      %v264 = vld [vmem:[%s1 + $0x5c] sm:$0xf]
      %v265 = vld [vmem:[%s1 + $0x60] sm:$0xf]
      %v266 = vld [vmem:[%s1 + $0x64] sm:$0xf]
      %v267 = vld [vmem:[%s1 + $0x68] sm:$0xf]
      %v268 = vld [vmem:[%s1 + $0x6c] sm:$0xf]
      %v269 = vld [vmem:[%s1 + $0x70] sm:$0xf]
      %v270 = vld [vmem:[%s1 + $0x74] sm:$0xf]
      %v271 = vld [vmem:[%s1 + $0x78] sm:$0xf]
      %v272 = vld [vmem:[%s1 + $0x7c] sm:$0xf]
      %v273 = vld [vmem:[%s1 + $0x80] sm:$0xf]
      %v274 = vld [vmem:[%s1 + $0x84] sm:$0xf]
      %v275 = vld [vmem:[%s1 + $0x88] sm:$0xf]
      %v276 = vld [vmem:[%s1 + $0x8c] sm:$0xf]
      %v277 = vld [vmem:[%s1 + $0x90] sm:$0xf]
      %v278 = vld [vmem:[%s1 + $0x94] sm:$0xf]
      %v279 = vld [vmem:[%s1 + $0x98] sm:$0xf]
      %v280 = vld [vmem:[%s1 + $0x9c] sm:$0xf]
      %v281 = vld [vmem:[%s1 + $0xa0] sm:$0xf]
      %v282 = vld [vmem:[%s1 + $0xa4] sm:$0xf]
      %v283 = vld [vmem:[%s1 + $0xa8] sm:$0xf]
      %v284 = vld [vmem:[%s1 + $0xac] sm:$0xf]
      %v285 = vld [vmem:[%s1 + $0xb0] sm:$0xf]
      %v286 = vld [vmem:[%s1 + $0xb4] sm:$0xf]
      %v287 = vld [vmem:[%s1 + $0xb8] sm:$0xf]
      %v288 = vld [vmem:[%s1 + $0xbc] sm:$0xf]
      %v289 = vld [vmem:[%s1 + $0xc0] sm:$0xf]
      %v290 = vld [vmem:[%s1 + $0xc4] sm:$0xf]
      %v291 = vld [vmem:[%s1 + $0xc8] sm:$0xf]
      %v292 = vld [vmem:[%s1 + $0xcc] sm:$0xf]
      %v293 = vld [vmem:[%s1 + $0xd0] sm:$0xf]
      %v294 = vld [vmem:[%s1 + $0xd4] sm:$0xf]
      %v295 = vld [vmem:[%s1 + $0xd8] sm:$0xf]
      %v296 = vld [vmem:[%s1 + $0xdc] sm:$0xf]
      %v297 = vld [vmem:[%s1 + $0xe0] sm:$0xf]
      %v298 = vld [vmem:[%s1 + $0xe4] sm:$0xf]
      %v299 = vld [vmem:[%s1 + $0xe8] sm:$0xf]
      %v300 = vld [vmem:[%s1 + $0xec] sm:$0xf]
      %v301 = vld [vmem:[%s1 + $0xf0] sm:$0xf]
      %v302 = vld [vmem:[%s1 + $0xf4] sm:$0xf]
      %v303 = vld [vmem:[%s1 + $0xf8] sm:$0xf]
      %v304 = vld [vmem:[%s1 + $0xfc] sm:$0xf]
      %v305 = vld [vmem:[%s2] sm:$0x1]
      %v307 = vperm.slane %v305, 0
      %v373 = vunpack.c.l.b16 %v177
      %v374 = vunpack.c.h.b16 %v177
      %v375 = vunpack.c.l.b16 %v178
      %v376 = vunpack.c.h.b16 %v178
      %v377 = vunpack.c.l.b16 %v179
      %v378 = vunpack.c.h.b16 %v179
      %v379 = vunpack.c.l.b16 %v180
      %v380 = vunpack.c.h.b16 %v180
      %v381 = vunpack.c.l.b16 %v181
      %v382 = vunpack.c.h.b16 %v181
      %v383 = vunpack.c.l.b16 %v182
      %v384 = vunpack.c.h.b16 %v182
      %v385 = vunpack.c.l.b16 %v183
      %v386 = vunpack.c.h.b16 %v183
      %v387 = vunpack.c.l.b16 %v184
      %v388 = vunpack.c.h.b16 %v184
      %v389 = vunpack.c.l.b16 %v185
      %v390 = vunpack.c.h.b16 %v185
      %v391 = vunpack.c.l.b16 %v186
      %v392 = vunpack.c.h.b16 %v186
      %v393 = vunpack.c.l.b16 %v187
      %v394 = vunpack.c.h.b16 %v187
      %v395 = vunpack.c.l.b16 %v188
      %v396 = vunpack.c.h.b16 %v188
      %v397 = vunpack.c.l.b16 %v189
      %v398 = vunpack.c.h.b16 %v189
      %v399 = vunpack.c.l.b16 %v190
      %v400 = vunpack.c.h.b16 %v190
      %v401 = vunpack.c.l.b16 %v191
      %v402 = vunpack.c.h.b16 %v191
      %v403 = vunpack.c.l.b16 %v192
      %v404 = vunpack.c.h.b16 %v192
      %v405 = vunpack.c.l.b16 %v193
      %v406 = vunpack.c.h.b16 %v193
      %v407 = vunpack.c.l.b16 %v194
      %v408 = vunpack.c.h.b16 %v194
      %v409 = vunpack.c.l.b16 %v195
      %v410 = vunpack.c.h.b16 %v195
      %v411 = vunpack.c.l.b16 %v196
      %v412 = vunpack.c.h.b16 %v196
      %v413 = vunpack.c.l.b16 %v197
      %v414 = vunpack.c.h.b16 %v197
      %v415 = vunpack.c.l.b16 %v198
      %v416 = vunpack.c.h.b16 %v198
      %v417 = vunpack.c.l.b16 %v199
      %v418 = vunpack.c.h.b16 %v199
      %v419 = vunpack.c.l.b16 %v200
      %v420 = vunpack.c.h.b16 %v200
      %v421 = vunpack.c.l.b16 %v201
      %v422 = vunpack.c.h.b16 %v201
      %v423 = vunpack.c.l.b16 %v202
      %v424 = vunpack.c.h.b16 %v202
      %v425 = vunpack.c.l.b16 %v203
      %v426 = vunpack.c.h.b16 %v203
      %v427 = vunpack.c.l.b16 %v204
      %v428 = vunpack.c.h.b16 %v204
      %v429 = vunpack.c.l.b16 %v205
      %v430 = vunpack.c.h.b16 %v205
      %v431 = vunpack.c.l.b16 %v206
      %v432 = vunpack.c.h.b16 %v206
      %v433 = vunpack.c.l.b16 %v207
      %v434 = vunpack.c.h.b16 %v207
      %v435 = vunpack.c.l.b16 %v208
      %v436 = vunpack.c.h.b16 %v208
      %v437 = vunpack.c.l.b16 %v209
      %v438 = vunpack.c.h.b16 %v209
      %v439 = vunpack.c.l.b16 %v210
      %v440 = vunpack.c.h.b16 %v210
      %v441 = vunpack.c.l.b16 %v211
      %v442 = vunpack.c.h.b16 %v211
      %v443 = vunpack.c.l.b16 %v212
      %v444 = vunpack.c.h.b16 %v212
      %v445 = vunpack.c.l.b16 %v213
      %v446 = vunpack.c.h.b16 %v213
      %v447 = vunpack.c.l.b16 %v214
      %v448 = vunpack.c.h.b16 %v214
      %v449 = vunpack.c.l.b16 %v215
      %v450 = vunpack.c.h.b16 %v215
      %v451 = vunpack.c.l.b16 %v216
      %v452 = vunpack.c.h.b16 %v216
      %v453 = vunpack.c.l.b16 %v217
      %v454 = vunpack.c.h.b16 %v217
      %v455 = vunpack.c.l.b16 %v218
      %v456 = vunpack.c.h.b16 %v218
      %v457 = vunpack.c.l.b16 %v219
      %v458 = vunpack.c.h.b16 %v219
      %v459 = vunpack.c.l.b16 %v220
      %v460 = vunpack.c.h.b16 %v220
      %v461 = vunpack.c.l.b16 %v221
      %v462 = vunpack.c.h.b16 %v221
      %v463 = vunpack.c.l.b16 %v222
      %v464 = vunpack.c.h.b16 %v222
      %v465 = vunpack.c.l.b16 %v223
      %v466 = vunpack.c.h.b16 %v223
      %v467 = vunpack.c.l.b16 %v224
      %v468 = vunpack.c.h.b16 %v224
      %v469 = vunpack.c.l.b16 %v225
      %v470 = vunpack.c.h.b16 %v225
      %v471 = vunpack.c.l.b16 %v226
      %v472 = vunpack.c.h.b16 %v226
      %v473 = vunpack.c.l.b16 %v227
      %v474 = vunpack.c.h.b16 %v227
      %v475 = vunpack.c.l.b16 %v228
      %v476 = vunpack.c.h.b16 %v228
      %v477 = vunpack.c.l.b16 %v229
      %v478 = vunpack.c.h.b16 %v229
      %v479 = vunpack.c.l.b16 %v230
      %v480 = vunpack.c.h.b16 %v230
      %v481 = vunpack.c.l.b16 %v231
      %v482 = vunpack.c.h.b16 %v231
      %v483 = vunpack.c.l.b16 %v232
      %v484 = vunpack.c.h.b16 %v232
      %v485 = vunpack.c.l.b16 %v233
      %v486 = vunpack.c.h.b16 %v233
      %v487 = vunpack.c.l.b16 %v234
      %v488 = vunpack.c.h.b16 %v234
      %v489 = vunpack.c.l.b16 %v235
      %v490 = vunpack.c.h.b16 %v235
      %v491 = vunpack.c.l.b16 %v236
      %v492 = vunpack.c.h.b16 %v236
      %v493 = vunpack.c.l.b16 %v237
      %v494 = vunpack.c.h.b16 %v237
      %v495 = vunpack.c.l.b16 %v238
      %v496 = vunpack.c.h.b16 %v238
      %v497 = vunpack.c.l.b16 %v239
      %v498 = vunpack.c.h.b16 %v239
      %v499 = vunpack.c.l.b16 %v240
      %v500 = vunpack.c.h.b16 %v240
      %v501 = vpack.c.b16 %v377, %v373
      %v502 = vpack.c.b16 %v378, %v374
      %v503 = vpack.c.b16 %v379, %v375
      %v504 = vpack.c.b16 %v380, %v376
      %v505 = vpack.c.b16 %v385, %v381
      %v506 = vpack.c.b16 %v386, %v382
      %v507 = vpack.c.b16 %v387, %v383
      %v508 = vpack.c.b16 %v388, %v384
      %v509 = vpack.c.b16 %v393, %v389
      %v510 = vpack.c.b16 %v394, %v390
      %v511 = vpack.c.b16 %v395, %v391
      %v512 = vpack.c.b16 %v396, %v392
      %v513 = vpack.c.b16 %v401, %v397
      %v514 = vpack.c.b16 %v402, %v398
      %v515 = vpack.c.b16 %v403, %v399
      %v516 = vpack.c.b16 %v404, %v400
      %v517 = vpack.c.b16 %v409, %v405
      %v518 = vpack.c.b16 %v410, %v406
      %v519 = vpack.c.b16 %v411, %v407
      %v520 = vpack.c.b16 %v412, %v408
      %v521 = vpack.c.b16 %v417, %v413
      %v522 = vpack.c.b16 %v418, %v414
      %v523 = vpack.c.b16 %v419, %v415
      %v524 = vpack.c.b16 %v420, %v416
      %v525 = vpack.c.b16 %v425, %v421
      %v526 = vpack.c.b16 %v426, %v422
      %v527 = vpack.c.b16 %v427, %v423
      %v528 = vpack.c.b16 %v428, %v424
      %v529 = vpack.c.b16 %v433, %v429
      %v530 = vpack.c.b16 %v434, %v430
      %v531 = vpack.c.b16 %v435, %v431
      %v532 = vpack.c.b16 %v436, %v432
      %v533 = vpack.c.b16 %v441, %v437
      %v534 = vpack.c.b16 %v442, %v438
      %v535 = vpack.c.b16 %v443, %v439
      %v536 = vpack.c.b16 %v444, %v440
      %v537 = vpack.c.b16 %v449, %v445
      %v538 = vpack.c.b16 %v450, %v446
      %v539 = vpack.c.b16 %v451, %v447
      %v540 = vpack.c.b16 %v452, %v448
      %v541 = vpack.c.b16 %v457, %v453
      %v542 = vpack.c.b16 %v458, %v454
      %v543 = vpack.c.b16 %v459, %v455
      %v544 = vpack.c.b16 %v460, %v456
      %v545 = vpack.c.b16 %v465, %v461
      %v546 = vpack.c.b16 %v466, %v462
      %v547 = vpack.c.b16 %v467, %v463
      %v548 = vpack.c.b16 %v468, %v464
      %v549 = vpack.c.b16 %v473, %v469
      %v550 = vpack.c.b16 %v474, %v470
      %v551 = vpack.c.b16 %v475, %v471
      %v552 = vpack.c.b16 %v476, %v472
      %v553 = vpack.c.b16 %v481, %v477
      %v554 = vpack.c.b16 %v482, %v478
      %v555 = vpack.c.b16 %v483, %v479
      %v556 = vpack.c.b16 %v484, %v480
      %v557 = vpack.c.b16 %v489, %v485
      %v558 = vpack.c.b16 %v490, %v486
      %v559 = vpack.c.b16 %v491, %v487
      %v560 = vpack.c.b16 %v492, %v488
      %v561 = vpack.c.b16 %v497, %v493
      %v562 = vpack.c.b16 %v498, %v494
      %v563 = vpack.c.b16 %v499, %v495
      %v564 = vpack.c.b16 %v500, %v496
      %v693 = vunpack.c.l.b16 %v241
      %v694 = vunpack.c.l.b16 %v242
      %v695 = vunpack.c.l.b16 %v243
      %v696 = vunpack.c.l.b16 %v244
      %v697 = vunpack.c.l.b16 %v245
      %v698 = vunpack.c.l.b16 %v246
      %v699 = vunpack.c.l.b16 %v247
      %v700 = vunpack.c.l.b16 %v248
      %v701 = vunpack.c.l.b16 %v249
      %v702 = vunpack.c.l.b16 %v250
      %v703 = vunpack.c.l.b16 %v251
      %v704 = vunpack.c.l.b16 %v252
      %v705 = vunpack.c.l.b16 %v253
      %v706 = vunpack.c.l.b16 %v254
      %v707 = vunpack.c.l.b16 %v255
      %v708 = vunpack.c.l.b16 %v256
      %v709 = vunpack.c.l.b16 %v257
      %v710 = vunpack.c.l.b16 %v258
      %v711 = vunpack.c.l.b16 %v259
      %v712 = vunpack.c.l.b16 %v260
      %v713 = vunpack.c.l.b16 %v261
      %v714 = vunpack.c.l.b16 %v262
      %v715 = vunpack.c.l.b16 %v263
      %v716 = vunpack.c.l.b16 %v264
      %v717 = vunpack.c.l.b16 %v265
      %v718 = vunpack.c.l.b16 %v266
      %v719 = vunpack.c.l.b16 %v267
      %v720 = vunpack.c.l.b16 %v268
      %v721 = vunpack.c.l.b16 %v269
      %v722 = vunpack.c.l.b16 %v270
      %v723 = vunpack.c.l.b16 %v271
      %v724 = vunpack.c.l.b16 %v272
      %v725 = vunpack.c.l.b16 %v273
      %v726 = vunpack.c.l.b16 %v274
      %v727 = vunpack.c.l.b16 %v275
      %v728 = vunpack.c.l.b16 %v276
      %v729 = vunpack.c.l.b16 %v277
      %v730 = vunpack.c.l.b16 %v278
      %v731 = vunpack.c.l.b16 %v279
      %v732 = vunpack.c.l.b16 %v280
      %v733 = vunpack.c.l.b16 %v281
      %v734 = vunpack.c.l.b16 %v282
      %v735 = vunpack.c.l.b16 %v283
      %v736 = vunpack.c.l.b16 %v284
      %v737 = vunpack.c.l.b16 %v285
      %v738 = vunpack.c.l.b16 %v286
      %v739 = vunpack.c.l.b16 %v287
      %v740 = vunpack.c.l.b16 %v288
      %v741 = vunpack.c.l.b16 %v289
      %v742 = vunpack.c.l.b16 %v290
      %v743 = vunpack.c.l.b16 %v291
      %v744 = vunpack.c.l.b16 %v292
      %v745 = vunpack.c.l.b16 %v293
      %v746 = vunpack.c.l.b16 %v294
      %v747 = vunpack.c.l.b16 %v295
      %v748 = vunpack.c.l.b16 %v296
      %v749 = vunpack.c.l.b16 %v297
      %v750 = vunpack.c.l.b16 %v298
      %v751 = vunpack.c.l.b16 %v299
      %v752 = vunpack.c.l.b16 %v300
      %v753 = vunpack.c.l.b16 %v301
      %v754 = vunpack.c.l.b16 %v302
      %v755 = vunpack.c.l.b16 %v303
      %v756 = vunpack.c.l.b16 %v304
      %v757 = vpack.c.b16 %v694, %v693
      %v758 = vpack.c.b16 %v696, %v695
      %v759 = vpack.c.b16 %v698, %v697
      %v760 = vpack.c.b16 %v700, %v699
      %v761 = vpack.c.b16 %v702, %v701
      %v762 = vpack.c.b16 %v704, %v703
      %v763 = vpack.c.b16 %v706, %v705
      %v764 = vpack.c.b16 %v708, %v707
      %v765 = vpack.c.b16 %v710, %v709
      %v766 = vpack.c.b16 %v712, %v711
      %v767 = vpack.c.b16 %v714, %v713
      %v768 = vpack.c.b16 %v716, %v715
      %v769 = vpack.c.b16 %v718, %v717
      %v770 = vpack.c.b16 %v720, %v719
      %v771 = vpack.c.b16 %v722, %v721
      %v772 = vpack.c.b16 %v724, %v723
      %v773 = vpack.c.b16 %v726, %v725
      %v774 = vpack.c.b16 %v728, %v727
      %v775 = vpack.c.b16 %v730, %v729
      %v776 = vpack.c.b16 %v732, %v731
      %v777 = vpack.c.b16 %v734, %v733
      %v778 = vpack.c.b16 %v736, %v735
      %v779 = vpack.c.b16 %v738, %v737
      %v780 = vpack.c.b16 %v740, %v739
      %v781 = vpack.c.b16 %v742, %v741
      %v782 = vpack.c.b16 %v744, %v743
      %v783 = vpack.c.b16 %v746, %v745
      %v784 = vpack.c.b16 %v748, %v747
      %v785 = vpack.c.b16 %v750, %v749
      %v786 = vpack.c.b16 %v752, %v751
      %v787 = vpack.c.b16 %v754, %v753
      %v788 = vpack.c.b16 %v756, %v755
      %821 = vmatpush.bf16.msra.mxu0 %v764
      %822 = vmatpush.bf16.msra.mxu0 %v763
      %823 = vmatpush.bf16.msra.mxu0 %v762
      %824 = vmatpush.bf16.msra.mxu0 %v761
      %825 = vmatpush.bf16.msra.mxu0 %v760
      %826 = vmatpush.bf16.msra.mxu0 %v759
      %827 = vmatpush.bf16.msra.mxu0 %v758
      %828 = vmatpush.bf16.msra.mxu0 %v757
      %829 = vmatmul.bf16.gmra.mxu0 %v501
      %v830 = vpop.f32.mrf.mxu0
      %v831 = vadd.f32 %v307, %v830
      %v832 = vpop.f32.mrf.mxu0
      %v833 = vadd.f32 %v307, %v832
      %834 = vmatmul.bf16.gmra.mxu0 %v505
      %v835 = vpop.f32.mrf.mxu0
      %v836 = vadd.f32 %v307, %v835
      %v837 = vpop.f32.mrf.mxu0
      %v838 = vadd.f32 %v307, %v837
      %839 = vmatmul.bf16.gmra.mxu0 %v509
      %v840 = vpop.f32.mrf.mxu0
      %v841 = vadd.f32 %v307, %v840
      %v842 = vpop.f32.mrf.mxu0
      %v843 = vadd.f32 %v307, %v842
      %844 = vmatmul.bf16.gmra.mxu0 %v513
      %v845 = vpop.f32.mrf.mxu0
      %v846 = vadd.f32 %v307, %v845
      %v847 = vpop.f32.mrf.mxu0
      %v848 = vadd.f32 %v307, %v847
      %849 = vmatmul.bf16.gmra.mxu0 %v517
      %v850 = vpop.f32.mrf.mxu0
      %v851 = vadd.f32 %v307, %v850
      %v852 = vpop.f32.mrf.mxu0
      %v853 = vadd.f32 %v307, %v852
      %854 = vmatmul.bf16.gmra.mxu0 %v521
      %v855 = vpop.f32.mrf.mxu0
      %v856 = vadd.f32 %v307, %v855
      %v857 = vpop.f32.mrf.mxu0
      %v858 = vadd.f32 %v307, %v857
      %859 = vmatmul.bf16.gmra.mxu0 %v525
      %v860 = vpop.f32.mrf.mxu0
      %v861 = vadd.f32 %v307, %v860
      %v862 = vpop.f32.mrf.mxu0
      %v863 = vadd.f32 %v307, %v862
      %864 = vmatmul.bf16.gmra.mxu0 %v529
      %v865 = vpop.f32.mrf.mxu0
      %v866 = vadd.f32 %v307, %v865
      %v867 = vpop.f32.mrf.mxu0
      %v868 = vadd.f32 %v307, %v867
      %869 = vmatmul.bf16.gmra.mxu0 %v533
      %v870 = vpop.f32.mrf.mxu0
      %v871 = vadd.f32 %v307, %v870
      %v872 = vpop.f32.mrf.mxu0
      %v873 = vadd.f32 %v307, %v872
      %874 = vmatmul.bf16.gmra.mxu0 %v537
      %v875 = vpop.f32.mrf.mxu0
      %v876 = vadd.f32 %v307, %v875
      %v877 = vpop.f32.mrf.mxu0
      %v878 = vadd.f32 %v307, %v877
      %879 = vmatmul.bf16.gmra.mxu0 %v541
      %v880 = vpop.f32.mrf.mxu0
      %v881 = vadd.f32 %v307, %v880
      %v882 = vpop.f32.mrf.mxu0
      %v883 = vadd.f32 %v307, %v882
      %884 = vmatmul.bf16.gmra.mxu0 %v545
      %v885 = vpop.f32.mrf.mxu0
      %v886 = vadd.f32 %v307, %v885
      %v887 = vpop.f32.mrf.mxu0
      %v888 = vadd.f32 %v307, %v887
      %889 = vmatmul.bf16.gmra.mxu0 %v549
      %v890 = vpop.f32.mrf.mxu0
      %v891 = vadd.f32 %v307, %v890
      %v892 = vpop.f32.mrf.mxu0
      %v893 = vadd.f32 %v307, %v892
      %894 = vmatmul.bf16.gmra.mxu0 %v553
      %v895 = vpop.f32.mrf.mxu0
      %v896 = vadd.f32 %v307, %v895
      %v897 = vpop.f32.mrf.mxu0
      %v898 = vadd.f32 %v307, %v897
      %899 = vmatmul.bf16.gmra.mxu0 %v557
      %v900 = vpop.f32.mrf.mxu0
      %v901 = vadd.f32 %v307, %v900
      %v902 = vpop.f32.mrf.mxu0
      %v903 = vadd.f32 %v307, %v902
      %904 = vmatmul.bf16.gmra.mxu0 %v561
      %v905 = vpop.f32.mrf.mxu0
      %v906 = vadd.f32 %v307, %v905
      %v907 = vpop.f32.mrf.mxu0
      %v908 = vadd.f32 %v307, %v907
      %909 = vdwg.mxu0
      %910 = vmatpush.bf16.msra.mxu0 %v772
      %911 = vmatpush.bf16.msra.mxu0 %v771
      %912 = vmatpush.bf16.msra.mxu0 %v770
      %913 = vmatpush.bf16.msra.mxu0 %v769
      %914 = vmatpush.bf16.msra.mxu0 %v768
      %915 = vmatpush.bf16.msra.mxu0 %v767
      %916 = vmatpush.bf16.msra.mxu0 %v766
      %917 = vmatpush.bf16.msra.mxu0 %v765
      %918 = vmatmul.bf16.gmra.mxu0 %v502
      %v919 = vpop.f32.mrf.mxu0
      %v920 = vadd.f32 %v831, %v919
      %v921 = vpop.f32.mrf.mxu0
      %v922 = vadd.f32 %v833, %v921
      %923 = vmatmul.bf16.gmra.mxu0 %v506
      %v924 = vpop.f32.mrf.mxu0
      %v925 = vadd.f32 %v836, %v924
      %v926 = vpop.f32.mrf.mxu0
      %v927 = vadd.f32 %v838, %v926
      %928 = vmatmul.bf16.gmra.mxu0 %v510
      %v929 = vpop.f32.mrf.mxu0
      %v930 = vadd.f32 %v841, %v929
      %v931 = vpop.f32.mrf.mxu0
      %v932 = vadd.f32 %v843, %v931
      %933 = vmatmul.bf16.gmra.mxu0 %v514
      %v934 = vpop.f32.mrf.mxu0
      %v935 = vadd.f32 %v846, %v934
      %v936 = vpop.f32.mrf.mxu0
      %v937 = vadd.f32 %v848, %v936
      %938 = vmatmul.bf16.gmra.mxu0 %v518
      %v939 = vpop.f32.mrf.mxu0
      %v940 = vadd.f32 %v851, %v939
      %v941 = vpop.f32.mrf.mxu0
      %v942 = vadd.f32 %v853, %v941
      %943 = vmatmul.bf16.gmra.mxu0 %v522
      %v944 = vpop.f32.mrf.mxu0
      %v945 = vadd.f32 %v856, %v944
      %v946 = vpop.f32.mrf.mxu0
      %v947 = vadd.f32 %v858, %v946
      %948 = vmatmul.bf16.gmra.mxu0 %v526
      %v949 = vpop.f32.mrf.mxu0
      %v950 = vadd.f32 %v861, %v949
      %v951 = vpop.f32.mrf.mxu0
      %v952 = vadd.f32 %v863, %v951
      %953 = vmatmul.bf16.gmra.mxu0 %v530
      %v954 = vpop.f32.mrf.mxu0
      %v955 = vadd.f32 %v866, %v954
      %v956 = vpop.f32.mrf.mxu0
      %v957 = vadd.f32 %v868, %v956
      %958 = vmatmul.bf16.gmra.mxu0 %v534
      %v959 = vpop.f32.mrf.mxu0
      %v960 = vadd.f32 %v871, %v959
      %v961 = vpop.f32.mrf.mxu0
      %v962 = vadd.f32 %v873, %v961
      %963 = vmatmul.bf16.gmra.mxu0 %v538
      %v964 = vpop.f32.mrf.mxu0
      %v965 = vadd.f32 %v876, %v964
      %v966 = vpop.f32.mrf.mxu0
      %v967 = vadd.f32 %v878, %v966
      %968 = vmatmul.bf16.gmra.mxu0 %v542
      %v969 = vpop.f32.mrf.mxu0
      %v970 = vadd.f32 %v881, %v969
      %v971 = vpop.f32.mrf.mxu0
      %v972 = vadd.f32 %v883, %v971
      %973 = vmatmul.bf16.gmra.mxu0 %v546
      %v974 = vpop.f32.mrf.mxu0
      %v975 = vadd.f32 %v886, %v974
      %v976 = vpop.f32.mrf.mxu0
      %v977 = vadd.f32 %v888, %v976
      %978 = vmatmul.bf16.gmra.mxu0 %v550
      %v979 = vpop.f32.mrf.mxu0
      %v980 = vadd.f32 %v891, %v979
      %v981 = vpop.f32.mrf.mxu0
      %v982 = vadd.f32 %v893, %v981
      %983 = vmatmul.bf16.gmra.mxu0 %v554
      %v984 = vpop.f32.mrf.mxu0
      %v985 = vadd.f32 %v896, %v984
      %v986 = vpop.f32.mrf.mxu0
      %v987 = vadd.f32 %v898, %v986
      %988 = vmatmul.bf16.gmra.mxu0 %v558
      %v989 = vpop.f32.mrf.mxu0
      %v990 = vadd.f32 %v901, %v989
      %v991 = vpop.f32.mrf.mxu0
      %v992 = vadd.f32 %v903, %v991
      %993 = vmatmul.bf16.gmra.mxu0 %v562
      %v994 = vpop.f32.mrf.mxu0
      %v995 = vadd.f32 %v906, %v994
      %v996 = vpop.f32.mrf.mxu0
      %v997 = vadd.f32 %v908, %v996
      %998 = vdwg.mxu0
      %999 = vmatpush.bf16.msra.mxu0 %v780
      %1000 = vmatpush.bf16.msra.mxu0 %v779
      %1001 = vmatpush.bf16.msra.mxu0 %v778
      %1002 = vmatpush.bf16.msra.mxu0 %v777
      %1003 = vmatpush.bf16.msra.mxu0 %v776
      %1004 = vmatpush.bf16.msra.mxu0 %v775
      %1005 = vmatpush.bf16.msra.mxu0 %v774
      %1006 = vmatpush.bf16.msra.mxu0 %v773
      %1007 = vmatmul.bf16.gmra.mxu0 %v503
      %v1008 = vpop.f32.mrf.mxu0
      %v1009 = vadd.f32 %v920, %v1008
      %v1010 = vpop.f32.mrf.mxu0
      %v1011 = vadd.f32 %v922, %v1010
      %1012 = vmatmul.bf16.gmra.mxu0 %v507
      %v1013 = vpop.f32.mrf.mxu0
      %v1014 = vadd.f32 %v925, %v1013
      %v1015 = vpop.f32.mrf.mxu0
      %v1016 = vadd.f32 %v927, %v1015
      %1017 = vmatmul.bf16.gmra.mxu0 %v511
      %v1018 = vpop.f32.mrf.mxu0
      %v1019 = vadd.f32 %v930, %v1018
      %v1020 = vpop.f32.mrf.mxu0
      %v1021 = vadd.f32 %v932, %v1020
      %1022 = vmatmul.bf16.gmra.mxu0 %v515
      %v1023 = vpop.f32.mrf.mxu0
      %v1024 = vadd.f32 %v935, %v1023
      %v1025 = vpop.f32.mrf.mxu0
      %v1026 = vadd.f32 %v937, %v1025
      %1027 = vmatmul.bf16.gmra.mxu0 %v519
      %v1028 = vpop.f32.mrf.mxu0
      %v1029 = vadd.f32 %v940, %v1028
      %v1030 = vpop.f32.mrf.mxu0
      %v1031 = vadd.f32 %v942, %v1030
      %1032 = vmatmul.bf16.gmra.mxu0 %v523
      %v1033 = vpop.f32.mrf.mxu0
      %v1034 = vadd.f32 %v945, %v1033
      %v1035 = vpop.f32.mrf.mxu0
      %v1036 = vadd.f32 %v947, %v1035
      %1037 = vmatmul.bf16.gmra.mxu0 %v527
      %v1038 = vpop.f32.mrf.mxu0
      %v1039 = vadd.f32 %v950, %v1038
      %v1040 = vpop.f32.mrf.mxu0
      %v1041 = vadd.f32 %v952, %v1040
      %1042 = vmatmul.bf16.gmra.mxu0 %v531
      %v1043 = vpop.f32.mrf.mxu0
      %v1044 = vadd.f32 %v955, %v1043
      %v1045 = vpop.f32.mrf.mxu0
      %v1046 = vadd.f32 %v957, %v1045
      %1047 = vmatmul.bf16.gmra.mxu0 %v535
      %v1048 = vpop.f32.mrf.mxu0
      %v1049 = vadd.f32 %v960, %v1048
      %v1050 = vpop.f32.mrf.mxu0
      %v1051 = vadd.f32 %v962, %v1050
      %1052 = vmatmul.bf16.gmra.mxu0 %v539
      %v1053 = vpop.f32.mrf.mxu0
      %v1054 = vadd.f32 %v965, %v1053
      %v1055 = vpop.f32.mrf.mxu0
      %v1056 = vadd.f32 %v967, %v1055
      %1057 = vmatmul.bf16.gmra.mxu0 %v543
      %v1058 = vpop.f32.mrf.mxu0
      %v1059 = vadd.f32 %v970, %v1058
      %v1060 = vpop.f32.mrf.mxu0
      %v1061 = vadd.f32 %v972, %v1060
      %1062 = vmatmul.bf16.gmra.mxu0 %v547
      %v1063 = vpop.f32.mrf.mxu0
      %v1064 = vadd.f32 %v975, %v1063
      %v1065 = vpop.f32.mrf.mxu0
      %v1066 = vadd.f32 %v977, %v1065
      %1067 = vmatmul.bf16.gmra.mxu0 %v551
      %v1068 = vpop.f32.mrf.mxu0
      %v1069 = vadd.f32 %v980, %v1068
      %v1070 = vpop.f32.mrf.mxu0
      %v1071 = vadd.f32 %v982, %v1070
      %1072 = vmatmul.bf16.gmra.mxu0 %v555
      %v1073 = vpop.f32.mrf.mxu0
      %v1074 = vadd.f32 %v985, %v1073
      %v1075 = vpop.f32.mrf.mxu0
      %v1076 = vadd.f32 %v987, %v1075
      %1077 = vmatmul.bf16.gmra.mxu0 %v559
      %v1078 = vpop.f32.mrf.mxu0
      %v1079 = vadd.f32 %v990, %v1078
      %v1080 = vpop.f32.mrf.mxu0
      %v1081 = vadd.f32 %v992, %v1080
      %1082 = vmatmul.bf16.gmra.mxu0 %v563
      %v1083 = vpop.f32.mrf.mxu0
      %v1084 = vadd.f32 %v995, %v1083
      %v1085 = vpop.f32.mrf.mxu0
      %v1086 = vadd.f32 %v997, %v1085
      %1087 = vdwg.mxu0
      %1088 = vmatpush.bf16.msra.mxu0 %v788
      %1089 = vmatpush.bf16.msra.mxu0 %v787
      %1090 = vmatpush.bf16.msra.mxu0 %v786
      %1091 = vmatpush.bf16.msra.mxu0 %v785
      %1092 = vmatpush.bf16.msra.mxu0 %v784
      %1093 = vmatpush.bf16.msra.mxu0 %v783
      %1094 = vmatpush.bf16.msra.mxu0 %v782
      %1095 = vmatpush.bf16.msra.mxu0 %v781
      %1096 = vmatmul.bf16.gmra.mxu0 %v504
      %v1097 = vpop.f32.mrf.mxu0
      %v1098 = vadd.f32 %v1009, %v1097
      %v1099 = vpop.f32.mrf.mxu0
      %v1100 = vadd.f32 %v1011, %v1099
      %1101 = vmatmul.bf16.gmra.mxu0 %v508
      %v1102 = vpop.f32.mrf.mxu0
      %v1103 = vadd.f32 %v1014, %v1102
      %v1104 = vpop.f32.mrf.mxu0
      %v1105 = vadd.f32 %v1016, %v1104
      %1106 = vmatmul.bf16.gmra.mxu0 %v512
      %v1107 = vpop.f32.mrf.mxu0
      %v1108 = vadd.f32 %v1019, %v1107
      %v1109 = vpop.f32.mrf.mxu0
      %v1110 = vadd.f32 %v1021, %v1109
      %1111 = vmatmul.bf16.gmra.mxu0 %v516
      %v1112 = vpop.f32.mrf.mxu0
      %v1113 = vadd.f32 %v1024, %v1112
      %v1114 = vpop.f32.mrf.mxu0
      %v1115 = vadd.f32 %v1026, %v1114
      %1116 = vmatmul.bf16.gmra.mxu0 %v520
      %v1117 = vpop.f32.mrf.mxu0
      %v1118 = vadd.f32 %v1029, %v1117
      %v1119 = vpop.f32.mrf.mxu0
      %v1120 = vadd.f32 %v1031, %v1119
      %1121 = vmatmul.bf16.gmra.mxu0 %v524
      %v1122 = vpop.f32.mrf.mxu0
      %v1123 = vadd.f32 %v1034, %v1122
      %v1124 = vpop.f32.mrf.mxu0
      %v1125 = vadd.f32 %v1036, %v1124
      %1126 = vmatmul.bf16.gmra.mxu0 %v528
      %v1127 = vpop.f32.mrf.mxu0
      %v1128 = vadd.f32 %v1039, %v1127
      %v1129 = vpop.f32.mrf.mxu0
      %v1130 = vadd.f32 %v1041, %v1129
      %1131 = vmatmul.bf16.gmra.mxu0 %v532
      %v1132 = vpop.f32.mrf.mxu0
      %v1133 = vadd.f32 %v1044, %v1132
      %v1134 = vpop.f32.mrf.mxu0
      %v1135 = vadd.f32 %v1046, %v1134
      %1136 = vmatmul.bf16.gmra.mxu0 %v536
      %v1137 = vpop.f32.mrf.mxu0
      %v1138 = vadd.f32 %v1049, %v1137
      %v1139 = vpop.f32.mrf.mxu0
      %v1140 = vadd.f32 %v1051, %v1139
      %1141 = vmatmul.bf16.gmra.mxu0 %v540
      %v1142 = vpop.f32.mrf.mxu0
      %v1143 = vadd.f32 %v1054, %v1142
      %v1144 = vpop.f32.mrf.mxu0
      %v1145 = vadd.f32 %v1056, %v1144
      %1146 = vmatmul.bf16.gmra.mxu0 %v544
      %v1147 = vpop.f32.mrf.mxu0
      %v1148 = vadd.f32 %v1059, %v1147
      %v1149 = vpop.f32.mrf.mxu0
      %v1150 = vadd.f32 %v1061, %v1149
      %1151 = vmatmul.bf16.gmra.mxu0 %v548
      %v1152 = vpop.f32.mrf.mxu0
      %v1153 = vadd.f32 %v1064, %v1152
      %v1154 = vpop.f32.mrf.mxu0
      %v1155 = vadd.f32 %v1066, %v1154
      %1156 = vmatmul.bf16.gmra.mxu0 %v552
      %v1157 = vpop.f32.mrf.mxu0
      %v1158 = vadd.f32 %v1069, %v1157
      %v1159 = vpop.f32.mrf.mxu0
      %v1160 = vadd.f32 %v1071, %v1159
      %1161 = vmatmul.bf16.gmra.mxu0 %v556
      %v1162 = vpop.f32.mrf.mxu0
      %v1163 = vadd.f32 %v1074, %v1162
      %v1164 = vpop.f32.mrf.mxu0
      %v1165 = vadd.f32 %v1076, %v1164
      %1166 = vmatmul.bf16.gmra.mxu0 %v560
      %v1167 = vpop.f32.mrf.mxu0
      %v1168 = vadd.f32 %v1079, %v1167
      %v1169 = vpop.f32.mrf.mxu0
      %v1170 = vadd.f32 %v1081, %v1169
      %1171 = vmatmul.bf16.gmra.mxu0 %v564
      %v1172 = vpop.f32.mrf.mxu0
      %v1173 = vadd.f32 %v1084, %v1172
      %v1174 = vpop.f32.mrf.mxu0
      %v1175 = vadd.f32 %v1086, %v1174
      %1176 = vdwg.mxu0
      %1177 = vst [vmem:[%s175] sm:$0xff] %v1098
      %1178 = vst [vmem:[%s175 + $0x8] sm:$0xff] %v1100
      %1179 = vst [vmem:[%s175 + $0x10] sm:$0xff] %v1103
      %1180 = vst [vmem:[%s175 + $0x18] sm:$0xff] %v1105
      %1181 = vst [vmem:[%s175 + $0x20] sm:$0xff] %v1108
      %1182 = vst [vmem:[%s175 + $0x28] sm:$0xff] %v1110
      %1183 = vst [vmem:[%s175 + $0x30] sm:$0xff] %v1113
      %1184 = vst [vmem:[%s175 + $0x38] sm:$0xff] %v1115
      %1185 = vst [vmem:[%s175 + $0x40] sm:$0xff] %v1118
      %1186 = vst [vmem:[%s175 + $0x48] sm:$0xff] %v1120
      %1187 = vst [vmem:[%s175 + $0x50] sm:$0xff] %v1123
      %1188 = vst [vmem:[%s175 + $0x58] sm:$0xff] %v1125
      %1189 = vst [vmem:[%s175 + $0x60] sm:$0xff] %v1128
      %1190 = vst [vmem:[%s175 + $0x68] sm:$0xff] %v1130
      %1191 = vst [vmem:[%s175 + $0x70] sm:$0xff] %v1133
      %1192 = vst [vmem:[%s175 + $0x78] sm:$0xff] %v1135
      %1193 = vst [vmem:[%s175 + $0x80] sm:$0xff] %v1138
      %1194 = vst [vmem:[%s175 + $0x88] sm:$0xff] %v1140
      %1195 = vst [vmem:[%s175 + $0x90] sm:$0xff] %v1143
      %1196 = vst [vmem:[%s175 + $0x98] sm:$0xff] %v1145
      %1197 = vst [vmem:[%s175 + $0xa0] sm:$0xff] %v1148
      %1198 = vst [vmem:[%s175 + $0xa8] sm:$0xff] %v1150
      %1199 = vst [vmem:[%s175 + $0xb0] sm:$0xff] %v1153
      %1200 = vst [vmem:[%s175 + $0xb8] sm:$0xff] %v1155
      %1201 = vst [vmem:[%s175 + $0xc0] sm:$0xff] %v1158
      %1202 = vst [vmem:[%s175 + $0xc8] sm:$0xff] %v1160
      %1203 = vst [vmem:[%s175 + $0xd0] sm:$0xff] %v1163
      %1204 = vst [vmem:[%s175 + $0xd8] sm:$0xff] %v1165
      %1205 = vst [vmem:[%s175 + $0xe0] sm:$0xff] %v1168
      %1206 = vst [vmem:[%s175 + $0xe8] sm:$0xff] %v1170
      %1207 = vst [vmem:[%s175 + $0xf0] sm:$0xff] %v1173
      %1208 = vst [vmem:[%s175 + $0xf8] sm:$0xff] %v1175
      %s1209 = smul.u32 32, %s14
      %p1210 = scmp.lt.s32.totalorder %s1209, 63
      %s1211 = scalar_select %p1210, %s1209, 63
      %s1212 = smul.addr %s1211, 8
      %s1213 = scalar_lea.vmem %s3, %s1212
      // Predicated region
      $region33: #{resnet_generator_forward.13} parent=31 // pred_check
        %p1214 = pneg %p100
      $region34: #{resnet_generator_forward.13} parent=31 // pred_check_branch
        %1216 = sbr.rel (%p1214) target = $region36
      $region35: #{resnet_generator_forward.13} parent=31 // pred_region
        %s1217 = smul.u32 32, %s14
      $region36: #{resnet_generator_forward.13} parent=31 // pred_fallthru
        _
    $region32: #{resnet_generator_forward.13} parent=5 // pred_fallthru
      _
    %p1218 = scmp.le.s32.totalorder 2, %s9
    // Predicated region
    $region37: #{resnet_generator_forward.13} parent=5 // pred_check
      %p1219 = pneg %p1218
    $region38: #{resnet_generator_forward.13} parent=5 // pred_check_branch
      %1221 = sbr.rel (%p1219) target = $region40
    $region39: #{resnet_generator_forward.13} parent=5 // pred_region
      %s1222 = ssub.s32 %s9, 2
      // Predicated region
      $region41: #{resnet_generator_forward.13} parent=39 // pred_check
        %p1223 = pneg %p106
      $region42: #{resnet_generator_forward.13} parent=39 // pred_check_branch
        %1225 = sbr.rel (%p1223) target = $region44
      $region43: #{resnet_generator_forward.13} parent=39 // pred_region
        %s1226 = smul.u32 32, %s15
        %p1227 = scmp.lt.s32.totalorder %s1226, 63
        %s1228 = scalar_select %p1227, %s1226, 63
        %s1229 = smul.addr %s1228, 8
        %s1230 = scalar_lea.vmem %s3, %s1229
      $region44: #{resnet_generator_forward.13} parent=39 // pred_fallthru
        _
    $region40: #{resnet_generator_forward.13} parent=5 // pred_fallthru
      _
  $region6: #{resnet_generator_forward.13} parent=0 // loop_footer
    %s13 = sadd.s32 1, %s9
  $region7: #{resnet_generator_forward.13} parent=0 // loop_footer_branch
    %8 = sbr.rel target = $region3
  $region8: #{resnet_generator_forward.13} parent=0 // loop_exit
    _

</llo_original>
